<compile_context>
chip_gen: v7x
topology: tpu7x:2x2x1
jax: 0.10.0
libtpu: 0.0.40
codegen_flags: <defaults>
</compile_context>

<pallas_src>
import math
from functools import partial

import jax
import jax.numpy as jnp
from jax.experimental import pallas as pl
from jax.experimental.pallas import tpu as pltpu


# ----------------------------- in-kernel helpers -----------------------------

def _layer_norm(z, gamma, beta, eps=1e-5):
    # PyTorch LayerNorm: biased variance, eps=1e-5. Stats in f32.
    mu = jnp.mean(z, axis=-1, keepdims=True)
    zc = z - mu
    var = jnp.mean(zc * zc, axis=-1, keepdims=True)
    return zc * jax.lax.rsqrt(var + eps) * gamma + beta


def _mha_block(x_res, xq_bf, xkv_bf, wq, bq, wkv, bkv, wo, bo, gamma, beta,
               num_heads, head_dim):
    """LayerNorm(x_res + MHA(xq, xkv, xkv)).

    x_res: (S, E) f32 residual; xq_bf: (S, E) bf16; xkv_bf: (L, E) bf16.
    Returns (S, E) f32. Scale 1/sqrt(head_dim) is pre-folded into wq/bq.
    """
    E = num_heads * head_dim
    # Fused projections: bf16 MXU inputs, f32 accumulation.
    q = jnp.dot(xq_bf, wq, preferred_element_type=jnp.float32) + bq        # (S, E)
    kv = jnp.dot(xkv_bf, wkv, preferred_element_type=jnp.float32) + bkv    # (L, 2E)
    # Cast to bf16 once; per-head slices below reuse these (no casts in loop).
    q_bf = q.astype(jnp.bfloat16)
    kv_bf = kv.astype(jnp.bfloat16)

    heads = []
    for h in range(num_heads):
        lo, hi = h * head_dim, (h + 1) * head_dim
        qh = q_bf[:, lo:hi]                       # (S, dh)
        kh = kv_bf[:, lo:hi]                      # (L, dh)
        vh = kv_bf[:, E + lo:E + hi]              # (L, dh)
        s = jax.lax.dot_general(                  # (S, L), no in-kernel .T
            qh, kh, (((1,), (1,)), ((), ())),
            preferred_element_type=jnp.float32)
        s = s - jnp.max(s, axis=-1, keepdims=True)
        e = jnp.exp(s)
        inv = pl.reciprocal(jnp.sum(e, axis=-1, keepdims=True), approx=True)
        p = e * inv
        heads.append(jnp.dot(p.astype(jnp.bfloat16), vh,
                             preferred_element_type=jnp.float32))          # (S, dh)
    attn = jnp.concatenate(heads, axis=-1)                                 # (S, E)

    # Output projection + residual + LayerNorm epilogue (f32).
    y = jnp.dot(attn.astype(jnp.bfloat16), wo,
                preferred_element_type=jnp.float32) + bo
    return _layer_norm(x_res + y, gamma, beta)


# ----------------------------- fused decoder-layer kernel -----------------------------

def _make_layer_kernel(num_heads, head_dim):
    def kernel(x_ref, mem_ref,
               wq_s, bq_s, wkv_s, bkv_s, wo_s, bo_s, g1_ref, n1_ref,
               wq_c, bq_c, wkv_c, bkv_c, wo_c, bo_c, g2_ref, n2_ref,
               w1_ref, c1_ref, w2_ref, c2_ref, g3_ref, n3_ref,
               o_ref):
        x_bf = x_ref[0]                       # (S, E) bf16 (also residual src)
        mem_bf = mem_ref[0]                   # (L, E) bf16
        x_f32 = x_bf.astype(jnp.float32)

        # ---- self-attention block: LN1(x + SelfAttn(x)) ----
        x1 = _mha_block(x_f32, x_bf, x_bf,
                        wq_s[...], bq_s[...], wkv_s[...], bkv_s[...],
                        wo_s[...], bo_s[...], g1_ref[...], n1_ref[...],
                        num_heads, head_dim)
        x1_bf = x1.astype(jnp.bfloat16)

        # ---- cross-attention block: LN2(x1 + CrossAttn(x1, memory)) ----
        x2 = _mha_block(x1, x1_bf, mem_bf,
                        wq_c[...], bq_c[...], wkv_c[...], bkv_c[...],
                        wo_c[...], bo_c[...], g2_ref[...], n2_ref[...],
                        num_heads, head_dim)
        x2_bf = x2.astype(jnp.bfloat16)

        # ---- FFN block: LN3(x2 + W2 relu(W1 x2 + b1) + b2) ----
        h = jnp.dot(x2_bf, w1_ref[...],
                    preferred_element_type=jnp.float32) + c1_ref[...]
        h = jnp.maximum(h, 0.0)
        y = jnp.dot(h.astype(jnp.bfloat16), w2_ref[...],
                    preferred_element_type=jnp.float32) + c2_ref[...]
        out = _layer_norm(x2 + y, g3_ref[...], n3_ref[...])

        o_ref[0] = out.astype(o_ref.dtype)    # bf16 activation back to HBM

    return kernel


def decoder_layer(x, memory, p, num_heads):
    """One fused nn.TransformerDecoderLayer forward (post-norm, ReLU, eval)."""
    B, S, E = x.shape
    L = memory.shape[1]
    head_dim = E // num_heads
    FF = p["w1"].shape[1]
    kernel = _make_layer_kernel(num_heads, head_dim)

    def const(shape):
        # Whole-weight VMEM block, same block every grid step (no re-DMA).
        return pl.BlockSpec(shape, lambda b: (0, 0))

    sa, ca = p["self_attn"], p["cross_attn"]

    return pl.pallas_call(
        kernel,
        out_shape=jax.ShapeDtypeStruct((B, S, E), jnp.bfloat16),
        grid=(B,),
        in_specs=[
            pl.BlockSpec((1, S, E), lambda b: (b, 0, 0)),    # x (residual/query)
            pl.BlockSpec((1, L, E), lambda b: (b, 0, 0)),    # memory
            # self-attn
            const((E, E)), const((1, E)), const((E, 2 * E)), const((1, 2 * E)),
            const((E, E)), const((1, E)), const((1, E)), const((1, E)),
            # cross-attn
            const((E, E)), const((1, E)), const((E, 2 * E)), const((1, 2 * E)),
            const((E, E)), const((1, E)), const((1, E)), const((1, E)),
            # FFN + norm3
            const((E, FF)), const((1, FF)), const((FF, E)), const((1, E)),
            const((1, E)), const((1, E)),
        ],
        out_specs=pl.BlockSpec((1, S, E), lambda b: (b, 0, 0)),
        compiler_params=pltpu.CompilerParams(
            dimension_semantics=("parallel",)),
    )(x, memory,
      sa["wq"], sa["bq"], sa["wkv"], sa["bkv"], sa["wo"], sa["bo"],
      p["norm1_g"], p["norm1_b"],
      ca["wq"], ca["bq"], ca["wkv"], ca["bkv"], ca["wo"], ca["bo"],
      p["norm2_g"], p["norm2_b"],
      p["w1"], p["b1"], p["w2"], p["b2"], p["norm3_g"], p["norm3_b"])


def transformer_decoder(x, memory, params, num_heads):
    for p in params:
        x = decoder_layer(x, memory, p, num_heads)
    return x


# ----------------------------- param init -----------------------------

def _init_attn_params(key, E, num_heads):
    head_dim = E // num_heads
    scale = 1.0 / math.sqrt(head_dim)
    ks = jax.random.split(key, 3)

    def w(k, shp, s=1.0):
        return (s * 0.02 * jax.random.normal(k, shp, dtype=jnp.float32)
                ).astype(jnp.bfloat16)

    return dict(
        # 1/sqrt(head_dim) folded into wq (and bq) at init.
        wq=w(ks[0], (E, E), s=scale), bq=jnp.zeros((1, E), jnp.float32),
        wkv=w(ks[1], (E, 2 * E)),     bkv=jnp.zeros((1, 2 * E), jnp.float32),
        wo=w(ks[2], (E, E)),          bo=jnp.zeros((1, E), jnp.float32),
    )


def init_params(key, embed_dim, depth, mlp_ratio, num_heads):
    E = embed_dim
    FF = int(embed_dim * mlp_ratio)
    params = []
    for lk in jax.random.split(key, depth):
        ks = jax.random.split(lk, 4)

        def w(k, shp):
            return (0.02 * jax.random.normal(k, shp, dtype=jnp.float32)
                    ).astype(jnp.bfloat16)

        params.append(dict(
            self_attn=_init_attn_params(ks[0], E, num_heads),
            cross_attn=_init_attn_params(ks[1], E, num_heads),
            w1=w(ks[2], (E, FF)), b1=jnp.zeros((1, FF), jnp.float32),
            w2=w(ks[3], (FF, E)), b2=jnp.zeros((1, E), jnp.float32),
            norm1_g=jnp.ones((1, E), jnp.float32), norm1_b=jnp.zeros((1, E), jnp.float32),
            norm2_g=jnp.ones((1, E), jnp.float32), norm2_b=jnp.zeros((1, E), jnp.float32),
            norm3_g=jnp.ones((1, E), jnp.float32), norm3_b=jnp.zeros((1, E), jnp.float32),
        ))
    return params


# ----------------------------- main -----------------------------

if __name__ == "__main__":
    # Small shapes consistent with the module (embed_dim scaled down).
    B, S, L = 2, 8, 8
    EMBED_DIM, DEPTH, NUM_HEADS, MLP_RATIO = 32, 2, 4, 4.0

    key = jax.random.PRNGKey(0)
    kx, km, kp = jax.random.split(key, 3)
    # Activations are carried in bf16 (in-kernel math stays f32).
    x = jax.random.normal(kx, (B, S, EMBED_DIM), dtype=jnp.float32).astype(jnp.bfloat16)
    memory = jax.random.normal(km, (B, L, EMBED_DIM), dtype=jnp.float32).astype(jnp.bfloat16)
    params = init_params(kp, EMBED_DIM, DEPTH, MLP_RATIO, NUM_HEADS)

    fwd = jax.jit(partial(transformer_decoder, num_heads=NUM_HEADS))
    out = jax.block_until_ready(fwd(x, memory, params))

    assert out.shape == (B, S, EMBED_DIM)
    assert bool(jnp.all(jnp.isfinite(out.astype(jnp.float32))))
    print("KERNEL_OK")
</pallas_src>

<mosaic_0001>
module attributes {stable_mosaic.version = 11 : i64} {
  func.func @kernel(%arg0: i32, %arg1: memref<1x8x32xbf16, #tpu.memory_space<vmem>>, %arg2: memref<1x8x32xbf16, #tpu.memory_space<vmem>>, %arg3: memref<32x32xbf16, #tpu.memory_space<vmem>>, %arg4: memref<1x32xf32, #tpu.memory_space<vmem>>, %arg5: memref<32x64xbf16, #tpu.memory_space<vmem>>, %arg6: memref<1x64xf32, #tpu.memory_space<vmem>>, %arg7: memref<32x32xbf16, #tpu.memory_space<vmem>>, %arg8: memref<1x32xf32, #tpu.memory_space<vmem>>, %arg9: memref<1x32xf32, #tpu.memory_space<vmem>>, %arg10: memref<1x32xf32, #tpu.memory_space<vmem>>, %arg11: memref<32x32xbf16, #tpu.memory_space<vmem>>, %arg12: memref<1x32xf32, #tpu.memory_space<vmem>>, %arg13: memref<32x64xbf16, #tpu.memory_space<vmem>>, %arg14: memref<1x64xf32, #tpu.memory_space<vmem>>, %arg15: memref<32x32xbf16, #tpu.memory_space<vmem>>, %arg16: memref<1x32xf32, #tpu.memory_space<vmem>>, %arg17: memref<1x32xf32, #tpu.memory_space<vmem>>, %arg18: memref<1x32xf32, #tpu.memory_space<vmem>>, %arg19: memref<32x128xbf16, #tpu.memory_space<vmem>>, %arg20: memref<1x128xf32, #tpu.memory_space<vmem>>, %arg21: memref<128x32xbf16, #tpu.memory_space<vmem>>, %arg22: memref<1x32xf32, #tpu.memory_space<vmem>>, %arg23: memref<1x32xf32, #tpu.memory_space<vmem>>, %arg24: memref<1x32xf32, #tpu.memory_space<vmem>>, %arg25: memref<1x8x32xbf16, #tpu.memory_space<vmem>>) attributes {dimension_semantics = [#tpu.dimension_semantics<parallel>], iteration_bounds = array<i64: 2>, scalar_prefetch = 0 : i64, scratch_operands = 0 : i64, tpu.core_type = #tpu.core_type<tc>, window_params = [{transform_indices = @transform_0, window_bounds = array<i64: 1, 8, 32>}, {transform_indices = @transform_1, window_bounds = array<i64: 1, 8, 32>}, {pipeline_mode = #tpu.pipeline_mode<synchronous>, transform_indices = @transform_2, window_bounds = array<i64: 32, 32>}, {pipeline_mode = #tpu.pipeline_mode<synchronous>, transform_indices = @transform_3, window_bounds = array<i64: 1, 32>}, {pipeline_mode = #tpu.pipeline_mode<synchronous>, transform_indices = @transform_4, window_bounds = array<i64: 32, 64>}, {pipeline_mode = #tpu.pipeline_mode<synchronous>, transform_indices = @transform_5, window_bounds = array<i64: 1, 64>}, {pipeline_mode = #tpu.pipeline_mode<synchronous>, transform_indices = @transform_6, window_bounds = array<i64: 32, 32>}, {pipeline_mode = #tpu.pipeline_mode<synchronous>, transform_indices = @transform_7, window_bounds = array<i64: 1, 32>}, {pipeline_mode = #tpu.pipeline_mode<synchronous>, transform_indices = @transform_8, window_bounds = array<i64: 1, 32>}, {pipeline_mode = #tpu.pipeline_mode<synchronous>, transform_indices = @transform_9, window_bounds = array<i64: 1, 32>}, {pipeline_mode = #tpu.pipeline_mode<synchronous>, transform_indices = @transform_10, window_bounds = array<i64: 32, 32>}, {pipeline_mode = #tpu.pipeline_mode<synchronous>, transform_indices = @transform_11, window_bounds = array<i64: 1, 32>}, {pipeline_mode = #tpu.pipeline_mode<synchronous>, transform_indices = @transform_12, window_bounds = array<i64: 32, 64>}, {pipeline_mode = #tpu.pipeline_mode<synchronous>, transform_indices = @transform_13, window_bounds = array<i64: 1, 64>}, {pipeline_mode = #tpu.pipeline_mode<synchronous>, transform_indices = @transform_14, window_bounds = array<i64: 32, 32>}, {pipeline_mode = #tpu.pipeline_mode<synchronous>, transform_indices = @transform_15, window_bounds = array<i64: 1, 32>}, {pipeline_mode = #tpu.pipeline_mode<synchronous>, transform_indices = @transform_16, window_bounds = array<i64: 1, 32>}, {pipeline_mode = #tpu.pipeline_mode<synchronous>, transform_indices = @transform_17, window_bounds = array<i64: 1, 32>}, {pipeline_mode = #tpu.pipeline_mode<synchronous>, transform_indices = @transform_18, window_bounds = array<i64: 32, 128>}, {pipeline_mode = #tpu.pipeline_mode<synchronous>, transform_indices = @transform_19, window_bounds = array<i64: 1, 128>}, {pipeline_mode = #tpu.pipeline_mode<synchronous>, transform_indices = @transform_20, window_bounds = array<i64: 128, 32>}, {pipeline_mode = #tpu.pipeline_mode<synchronous>, transform_indices = @transform_21, window_bounds = array<i64: 1, 32>}, {pipeline_mode = #tpu.pipeline_mode<synchronous>, transform_indices = @transform_22, window_bounds = array<i64: 1, 32>}, {pipeline_mode = #tpu.pipeline_mode<synchronous>, transform_indices = @transform_23, window_bounds = array<i64: 1, 32>}, {transform_indices = @transform_24, window_bounds = array<i64: 1, 8, 32>}]} {
    %c0 = arith.constant 0 : index
    %c0_0 = arith.constant 0 : index
    %c0_1 = arith.constant 0 : index
    %0 = vector.load %arg1[%c0, %c0_0, %c0_1] : memref<1x8x32xbf16, #tpu.memory_space<vmem>>, vector<1x8x32xbf16>
    %1 = vector.shape_cast %0 : vector<1x8x32xbf16> to vector<8x32xbf16>
    %c0_2 = arith.constant 0 : index
    %c0_3 = arith.constant 0 : index
    %c0_4 = arith.constant 0 : index
    %2 = vector.load %arg2[%c0_2, %c0_3, %c0_4] : memref<1x8x32xbf16, #tpu.memory_space<vmem>>, vector<1x8x32xbf16>
    %3 = vector.shape_cast %2 : vector<1x8x32xbf16> to vector<8x32xbf16>
    %4 = arith.extf %1 : vector<8x32xbf16> to vector<8x32xf32>
    %c0_5 = arith.constant 0 : index
    %c0_6 = arith.constant 0 : index
    %5 = vector.load %arg3[%c0_5, %c0_6] : memref<32x32xbf16, #tpu.memory_space<vmem>>, vector<32x32xbf16>
    %c0_7 = arith.constant 0 : index
    %c0_8 = arith.constant 0 : index
    %6 = vector.load %arg4[%c0_7, %c0_8] : memref<1x32xf32, #tpu.memory_space<vmem>>, vector<1x32xf32>
    %c0_9 = arith.constant 0 : index
    %c0_10 = arith.constant 0 : index
    %7 = vector.load %arg5[%c0_9, %c0_10] : memref<32x64xbf16, #tpu.memory_space<vmem>>, vector<32x64xbf16>
    %c0_11 = arith.constant 0 : index
    %c0_12 = arith.constant 0 : index
    %8 = vector.load %arg6[%c0_11, %c0_12] : memref<1x64xf32, #tpu.memory_space<vmem>>, vector<1x64xf32>
    %c0_13 = arith.constant 0 : index
    %c0_14 = arith.constant 0 : index
    %9 = vector.load %arg7[%c0_13, %c0_14] : memref<32x32xbf16, #tpu.memory_space<vmem>>, vector<32x32xbf16>
    %c0_15 = arith.constant 0 : index
    %c0_16 = arith.constant 0 : index
    %10 = vector.load %arg8[%c0_15, %c0_16] : memref<1x32xf32, #tpu.memory_space<vmem>>, vector<1x32xf32>
    %c0_17 = arith.constant 0 : index
    %c0_18 = arith.constant 0 : index
    %11 = vector.load %arg9[%c0_17, %c0_18] : memref<1x32xf32, #tpu.memory_space<vmem>>, vector<1x32xf32>
    %c0_19 = arith.constant 0 : index
    %c0_20 = arith.constant 0 : index
    %12 = vector.load %arg10[%c0_19, %c0_20] : memref<1x32xf32, #tpu.memory_space<vmem>>, vector<1x32xf32>
    %cst = arith.constant dense<0.000000e+00> : vector<8x32xf32>
    %13 = tpu.matmul %1, %5, %cst {dimension_numbers = #tpu.dot_dimension_numbers<[1], [0], [0], [1], [0, 0, 1, 1], [], []>} : vector<8x32xbf16>, vector<32x32xbf16>, vector<8x32xf32> -> vector<8x32xf32>
    %14 = vector.broadcast %6 : vector<1x32xf32> to vector<8x32xf32>
    %15 = arith.addf %13, %14 : vector<8x32xf32>
    %cst_21 = arith.constant dense<0.000000e+00> : vector<8x64xf32>
    %16 = tpu.matmul %1, %7, %cst_21 {dimension_numbers = #tpu.dot_dimension_numbers<[1], [0], [0], [1], [0, 0, 1, 1], [], []>} : vector<8x32xbf16>, vector<32x64xbf16>, vector<8x64xf32> -> vector<8x64xf32>
    %17 = vector.broadcast %8 : vector<1x64xf32> to vector<8x64xf32>
    %18 = arith.addf %16, %17 : vector<8x64xf32>
    %19 = arith.truncf %15 : vector<8x32xf32> to vector<8x32xbf16>
    %20 = arith.truncf %18 : vector<8x64xf32> to vector<8x64xbf16>
    %21 = vector.extract_strided_slice %19 {offsets = [0, 0], sizes = [8, 8], strides = [1, 1]} : vector<8x32xbf16> to vector<8x8xbf16>
    %22 = vector.extract_strided_slice %20 {offsets = [0, 0], sizes = [8, 8], strides = [1, 1]} : vector<8x64xbf16> to vector<8x8xbf16>
    %23 = vector.extract_strided_slice %20 {offsets = [0, 32], sizes = [8, 8], strides = [1, 1]} : vector<8x64xbf16> to vector<8x8xbf16>
    %cst_22 = arith.constant dense<0.000000e+00> : vector<8x8xf32>
    %24 = tpu.matmul %21, %22, %cst_22 {dimension_numbers = #tpu.dot_dimension_numbers<[1], [1], [0], [0], [0, 0, 1, 0], [], []>} : vector<8x8xbf16>, vector<8x8xbf16>, vector<8x8xf32> -> vector<8x8xf32>
    %cst_23 = arith.constant dense<0xFF800000> : vector<8xf32>
    %25 = vector.multi_reduction <maximumf>, %24, %cst_23 [1] : vector<8x8xf32> to vector<8xf32>
    %26 = vector.shape_cast %25 : vector<8xf32> to vector<8x1xf32>
    %27 = vector.broadcast %26 : vector<8x1xf32> to vector<8x8xf32>
    %28 = arith.subf %24, %27 : vector<8x8xf32>
    %29 = math.exp %28 : vector<8x8xf32>
    %cst_24 = arith.constant dense<0.000000e+00> : vector<8xf32>
    %30 = vector.multi_reduction <add>, %29, %cst_24 [1] : vector<8x8xf32> to vector<8xf32>
    %31 = vector.shape_cast %30 : vector<8xf32> to vector<8x1xf32>
    %32 = tpu.reciprocal %31 {approx = true} : vector<8x1xf32> -> vector<8x1xf32>
    %33 = vector.broadcast %32 : vector<8x1xf32> to vector<8x8xf32>
    %34 = arith.mulf %29, %33 : vector<8x8xf32>
    %35 = arith.truncf %34 : vector<8x8xf32> to vector<8x8xbf16>
    %cst_25 = arith.constant dense<0.000000e+00> : vector<8x8xf32>
    %36 = tpu.matmul %35, %23, %cst_25 {dimension_numbers = #tpu.dot_dimension_numbers<[1], [0], [0], [1], [0, 0, 1, 1], [], []>} : vector<8x8xbf16>, vector<8x8xbf16>, vector<8x8xf32> -> vector<8x8xf32>
    %37 = vector.extract_strided_slice %19 {offsets = [0, 8], sizes = [8, 8], strides = [1, 1]} : vector<8x32xbf16> to vector<8x8xbf16>
    %38 = vector.extract_strided_slice %20 {offsets = [0, 8], sizes = [8, 8], strides = [1, 1]} : vector<8x64xbf16> to vector<8x8xbf16>
    %39 = vector.extract_strided_slice %20 {offsets = [0, 40], sizes = [8, 8], strides = [1, 1]} : vector<8x64xbf16> to vector<8x8xbf16>
    %cst_26 = arith.constant dense<0.000000e+00> : vector<8x8xf32>
    %40 = tpu.matmul %37, %38, %cst_26 {dimension_numbers = #tpu.dot_dimension_numbers<[1], [1], [0], [0], [0, 0, 1, 0], [], []>} : vector<8x8xbf16>, vector<8x8xbf16>, vector<8x8xf32> -> vector<8x8xf32>
    %cst_27 = arith.constant dense<0xFF800000> : vector<8xf32>
    %41 = vector.multi_reduction <maximumf>, %40, %cst_27 [1] : vector<8x8xf32> to vector<8xf32>
    %42 = vector.shape_cast %41 : vector<8xf32> to vector<8x1xf32>
    %43 = vector.broadcast %42 : vector<8x1xf32> to vector<8x8xf32>
    %44 = arith.subf %40, %43 : vector<8x8xf32>
    %45 = math.exp %44 : vector<8x8xf32>
    %cst_28 = arith.constant dense<0.000000e+00> : vector<8xf32>
    %46 = vector.multi_reduction <add>, %45, %cst_28 [1] : vector<8x8xf32> to vector<8xf32>
    %47 = vector.shape_cast %46 : vector<8xf32> to vector<8x1xf32>
    %48 = tpu.reciprocal %47 {approx = true} : vector<8x1xf32> -> vector<8x1xf32>
    %49 = vector.broadcast %48 : vector<8x1xf32> to vector<8x8xf32>
    %50 = arith.mulf %45, %49 : vector<8x8xf32>
    %51 = arith.truncf %50 : vector<8x8xf32> to vector<8x8xbf16>
    %cst_29 = arith.constant dense<0.000000e+00> : vector<8x8xf32>
    %52 = tpu.matmul %51, %39, %cst_29 {dimension_numbers = #tpu.dot_dimension_numbers<[1], [0], [0], [1], [0, 0, 1, 1], [], []>} : vector<8x8xbf16>, vector<8x8xbf16>, vector<8x8xf32> -> vector<8x8xf32>
    %53 = vector.extract_strided_slice %19 {offsets = [0, 16], sizes = [8, 8], strides = [1, 1]} : vector<8x32xbf16> to vector<8x8xbf16>
    %54 = vector.extract_strided_slice %20 {offsets = [0, 16], sizes = [8, 8], strides = [1, 1]} : vector<8x64xbf16> to vector<8x8xbf16>
    %55 = vector.extract_strided_slice %20 {offsets = [0, 48], sizes = [8, 8], strides = [1, 1]} : vector<8x64xbf16> to vector<8x8xbf16>
    %cst_30 = arith.constant dense<0.000000e+00> : vector<8x8xf32>
    %56 = tpu.matmul %53, %54, %cst_30 {dimension_numbers = #tpu.dot_dimension_numbers<[1], [1], [0], [0], [0, 0, 1, 0], [], []>} : vector<8x8xbf16>, vector<8x8xbf16>, vector<8x8xf32> -> vector<8x8xf32>
    %cst_31 = arith.constant dense<0xFF800000> : vector<8xf32>
    %57 = vector.multi_reduction <maximumf>, %56, %cst_31 [1] : vector<8x8xf32> to vector<8xf32>
    %58 = vector.shape_cast %57 : vector<8xf32> to vector<8x1xf32>
    %59 = vector.broadcast %58 : vector<8x1xf32> to vector<8x8xf32>
    %60 = arith.subf %56, %59 : vector<8x8xf32>
    %61 = math.exp %60 : vector<8x8xf32>
    %cst_32 = arith.constant dense<0.000000e+00> : vector<8xf32>
    %62 = vector.multi_reduction <add>, %61, %cst_32 [1] : vector<8x8xf32> to vector<8xf32>
    %63 = vector.shape_cast %62 : vector<8xf32> to vector<8x1xf32>
    %64 = tpu.reciprocal %63 {approx = true} : vector<8x1xf32> -> vector<8x1xf32>
    %65 = vector.broadcast %64 : vector<8x1xf32> to vector<8x8xf32>
    %66 = arith.mulf %61, %65 : vector<8x8xf32>
    %67 = arith.truncf %66 : vector<8x8xf32> to vector<8x8xbf16>
    %cst_33 = arith.constant dense<0.000000e+00> : vector<8x8xf32>
    %68 = tpu.matmul %67, %55, %cst_33 {dimension_numbers = #tpu.dot_dimension_numbers<[1], [0], [0], [1], [0, 0, 1, 1], [], []>} : vector<8x8xbf16>, vector<8x8xbf16>, vector<8x8xf32> -> vector<8x8xf32>
    %69 = vector.extract_strided_slice %19 {offsets = [0, 24], sizes = [8, 8], strides = [1, 1]} : vector<8x32xbf16> to vector<8x8xbf16>
    %70 = vector.extract_strided_slice %20 {offsets = [0, 24], sizes = [8, 8], strides = [1, 1]} : vector<8x64xbf16> to vector<8x8xbf16>
    %71 = vector.extract_strided_slice %20 {offsets = [0, 56], sizes = [8, 8], strides = [1, 1]} : vector<8x64xbf16> to vector<8x8xbf16>
    %cst_34 = arith.constant dense<0.000000e+00> : vector<8x8xf32>
    %72 = tpu.matmul %69, %70, %cst_34 {dimension_numbers = #tpu.dot_dimension_numbers<[1], [1], [0], [0], [0, 0, 1, 0], [], []>} : vector<8x8xbf16>, vector<8x8xbf16>, vector<8x8xf32> -> vector<8x8xf32>
    %cst_35 = arith.constant dense<0xFF800000> : vector<8xf32>
    %73 = vector.multi_reduction <maximumf>, %72, %cst_35 [1] : vector<8x8xf32> to vector<8xf32>
    %74 = vector.shape_cast %73 : vector<8xf32> to vector<8x1xf32>
    %75 = vector.broadcast %74 : vector<8x1xf32> to vector<8x8xf32>
    %76 = arith.subf %72, %75 : vector<8x8xf32>
    %77 = math.exp %76 : vector<8x8xf32>
    %cst_36 = arith.constant dense<0.000000e+00> : vector<8xf32>
    %78 = vector.multi_reduction <add>, %77, %cst_36 [1] : vector<8x8xf32> to vector<8xf32>
    %79 = vector.shape_cast %78 : vector<8xf32> to vector<8x1xf32>
    %80 = tpu.reciprocal %79 {approx = true} : vector<8x1xf32> -> vector<8x1xf32>
    %81 = vector.broadcast %80 : vector<8x1xf32> to vector<8x8xf32>
    %82 = arith.mulf %77, %81 : vector<8x8xf32>
    %83 = arith.truncf %82 : vector<8x8xf32> to vector<8x8xbf16>
    %cst_37 = arith.constant dense<0.000000e+00> : vector<8x8xf32>
    %84 = tpu.matmul %83, %71, %cst_37 {dimension_numbers = #tpu.dot_dimension_numbers<[1], [0], [0], [1], [0, 0, 1, 1], [], []>} : vector<8x8xbf16>, vector<8x8xbf16>, vector<8x8xf32> -> vector<8x8xf32>
    %85 = tpu.concatenate %36, %52, %68, %84 in 1 : vector<8x8xf32>, vector<8x8xf32>, vector<8x8xf32>, vector<8x8xf32> -> vector<8x32xf32>
    %86 = arith.truncf %85 : vector<8x32xf32> to vector<8x32xbf16>
    %cst_38 = arith.constant dense<0.000000e+00> : vector<8x32xf32>
    %87 = tpu.matmul %86, %9, %cst_38 {dimension_numbers = #tpu.dot_dimension_numbers<[1], [0], [0], [1], [0, 0, 1, 1], [], []>} : vector<8x32xbf16>, vector<32x32xbf16>, vector<8x32xf32> -> vector<8x32xf32>
    %88 = vector.broadcast %10 : vector<1x32xf32> to vector<8x32xf32>
    %89 = arith.addf %87, %88 : vector<8x32xf32>
    %90 = arith.addf %4, %89 : vector<8x32xf32>
    %cst_39 = arith.constant dense<0.000000e+00> : vector<8xf32>
    %91 = vector.multi_reduction <add>, %90, %cst_39 [1] : vector<8x32xf32> to vector<8xf32>
    %92 = vector.shape_cast %91 : vector<8xf32> to vector<8x1xf32>
    %cst_40 = arith.constant 3.200000e+01 : f32
    %93 = vector.broadcast %cst_40 : f32 to vector<8x1xf32>
    %94 = arith.divf %92, %93 : vector<8x1xf32>
    %95 = vector.broadcast %94 : vector<8x1xf32> to vector<8x32xf32>
    %96 = arith.subf %90, %95 : vector<8x32xf32>
    %97 = arith.mulf %96, %96 : vector<8x32xf32>
    %cst_41 = arith.constant dense<0.000000e+00> : vector<8xf32>
    %98 = vector.multi_reduction <add>, %97, %cst_41 [1] : vector<8x32xf32> to vector<8xf32>
    %99 = vector.shape_cast %98 : vector<8xf32> to vector<8x1xf32>
    %cst_42 = arith.constant 3.200000e+01 : f32
    %100 = vector.broadcast %cst_42 : f32 to vector<8x1xf32>
    %101 = arith.divf %99, %100 : vector<8x1xf32>
    %cst_43 = arith.constant 9.99999974E-6 : f32
    %102 = vector.broadcast %cst_43 : f32 to vector<8x1xf32>
    %103 = arith.addf %101, %102 : vector<8x1xf32>
    %104 = math.rsqrt %103 : vector<8x1xf32>
    %105 = vector.broadcast %104 : vector<8x1xf32> to vector<8x32xf32>
    %106 = arith.mulf %96, %105 : vector<8x32xf32>
    %107 = vector.broadcast %11 : vector<1x32xf32> to vector<8x32xf32>
    %108 = arith.mulf %106, %107 : vector<8x32xf32>
    %109 = vector.broadcast %12 : vector<1x32xf32> to vector<8x32xf32>
    %110 = arith.addf %108, %109 : vector<8x32xf32>
    %111 = arith.truncf %110 : vector<8x32xf32> to vector<8x32xbf16>
    %c0_44 = arith.constant 0 : index
    %c0_45 = arith.constant 0 : index
    %112 = vector.load %arg11[%c0_44, %c0_45] : memref<32x32xbf16, #tpu.memory_space<vmem>>, vector<32x32xbf16>
    %c0_46 = arith.constant 0 : index
    %c0_47 = arith.constant 0 : index
    %113 = vector.load %arg12[%c0_46, %c0_47] : memref<1x32xf32, #tpu.memory_space<vmem>>, vector<1x32xf32>
    %c0_48 = arith.constant 0 : index
    %c0_49 = arith.constant 0 : index
    %114 = vector.load %arg13[%c0_48, %c0_49] : memref<32x64xbf16, #tpu.memory_space<vmem>>, vector<32x64xbf16>
    %c0_50 = arith.constant 0 : index
    %c0_51 = arith.constant 0 : index
    %115 = vector.load %arg14[%c0_50, %c0_51] : memref<1x64xf32, #tpu.memory_space<vmem>>, vector<1x64xf32>
    %c0_52 = arith.constant 0 : index
    %c0_53 = arith.constant 0 : index
    %116 = vector.load %arg15[%c0_52, %c0_53] : memref<32x32xbf16, #tpu.memory_space<vmem>>, vector<32x32xbf16>
    %c0_54 = arith.constant 0 : index
    %c0_55 = arith.constant 0 : index
    %117 = vector.load %arg16[%c0_54, %c0_55] : memref<1x32xf32, #tpu.memory_space<vmem>>, vector<1x32xf32>
    %c0_56 = arith.constant 0 : index
    %c0_57 = arith.constant 0 : index
    %118 = vector.load %arg17[%c0_56, %c0_57] : memref<1x32xf32, #tpu.memory_space<vmem>>, vector<1x32xf32>
    %c0_58 = arith.constant 0 : index
    %c0_59 = arith.constant 0 : index
    %119 = vector.load %arg18[%c0_58, %c0_59] : memref<1x32xf32, #tpu.memory_space<vmem>>, vector<1x32xf32>
    %cst_60 = arith.constant dense<0.000000e+00> : vector<8x32xf32>
    %120 = tpu.matmul %111, %112, %cst_60 {dimension_numbers = #tpu.dot_dimension_numbers<[1], [0], [0], [1], [0, 0, 1, 1], [], []>} : vector<8x32xbf16>, vector<32x32xbf16>, vector<8x32xf32> -> vector<8x32xf32>
    %121 = vector.broadcast %113 : vector<1x32xf32> to vector<8x32xf32>
    %122 = arith.addf %120, %121 : vector<8x32xf32>
    %cst_61 = arith.constant dense<0.000000e+00> : vector<8x64xf32>
    %123 = tpu.matmul %3, %114, %cst_61 {dimension_numbers = #tpu.dot_dimension_numbers<[1], [0], [0], [1], [0, 0, 1, 1], [], []>} : vector<8x32xbf16>, vector<32x64xbf16>, vector<8x64xf32> -> vector<8x64xf32>
    %124 = vector.broadcast %115 : vector<1x64xf32> to vector<8x64xf32>
    %125 = arith.addf %123, %124 : vector<8x64xf32>
    %126 = arith.truncf %122 : vector<8x32xf32> to vector<8x32xbf16>
    %127 = arith.truncf %125 : vector<8x64xf32> to vector<8x64xbf16>
    %128 = vector.extract_strided_slice %126 {offsets = [0, 0], sizes = [8, 8], strides = [1, 1]} : vector<8x32xbf16> to vector<8x8xbf16>
    %129 = vector.extract_strided_slice %127 {offsets = [0, 0], sizes = [8, 8], strides = [1, 1]} : vector<8x64xbf16> to vector<8x8xbf16>
    %130 = vector.extract_strided_slice %127 {offsets = [0, 32], sizes = [8, 8], strides = [1, 1]} : vector<8x64xbf16> to vector<8x8xbf16>
    %cst_62 = arith.constant dense<0.000000e+00> : vector<8x8xf32>
    %131 = tpu.matmul %128, %129, %cst_62 {dimension_numbers = #tpu.dot_dimension_numbers<[1], [1], [0], [0], [0, 0, 1, 0], [], []>} : vector<8x8xbf16>, vector<8x8xbf16>, vector<8x8xf32> -> vector<8x8xf32>
    %cst_63 = arith.constant dense<0xFF800000> : vector<8xf32>
    %132 = vector.multi_reduction <maximumf>, %131, %cst_63 [1] : vector<8x8xf32> to vector<8xf32>
    %133 = vector.shape_cast %132 : vector<8xf32> to vector<8x1xf32>
    %134 = vector.broadcast %133 : vector<8x1xf32> to vector<8x8xf32>
    %135 = arith.subf %131, %134 : vector<8x8xf32>
    %136 = math.exp %135 : vector<8x8xf32>
    %cst_64 = arith.constant dense<0.000000e+00> : vector<8xf32>
    %137 = vector.multi_reduction <add>, %136, %cst_64 [1] : vector<8x8xf32> to vector<8xf32>
    %138 = vector.shape_cast %137 : vector<8xf32> to vector<8x1xf32>
    %139 = tpu.reciprocal %138 {approx = true} : vector<8x1xf32> -> vector<8x1xf32>
    %140 = vector.broadcast %139 : vector<8x1xf32> to vector<8x8xf32>
    %141 = arith.mulf %136, %140 : vector<8x8xf32>
    %142 = arith.truncf %141 : vector<8x8xf32> to vector<8x8xbf16>
    %cst_65 = arith.constant dense<0.000000e+00> : vector<8x8xf32>
    %143 = tpu.matmul %142, %130, %cst_65 {dimension_numbers = #tpu.dot_dimension_numbers<[1], [0], [0], [1], [0, 0, 1, 1], [], []>} : vector<8x8xbf16>, vector<8x8xbf16>, vector<8x8xf32> -> vector<8x8xf32>
    %144 = vector.extract_strided_slice %126 {offsets = [0, 8], sizes = [8, 8], strides = [1, 1]} : vector<8x32xbf16> to vector<8x8xbf16>
    %145 = vector.extract_strided_slice %127 {offsets = [0, 8], sizes = [8, 8], strides = [1, 1]} : vector<8x64xbf16> to vector<8x8xbf16>
    %146 = vector.extract_strided_slice %127 {offsets = [0, 40], sizes = [8, 8], strides = [1, 1]} : vector<8x64xbf16> to vector<8x8xbf16>
    %cst_66 = arith.constant dense<0.000000e+00> : vector<8x8xf32>
    %147 = tpu.matmul %144, %145, %cst_66 {dimension_numbers = #tpu.dot_dimension_numbers<[1], [1], [0], [0], [0, 0, 1, 0], [], []>} : vector<8x8xbf16>, vector<8x8xbf16>, vector<8x8xf32> -> vector<8x8xf32>
    %cst_67 = arith.constant dense<0xFF800000> : vector<8xf32>
    %148 = vector.multi_reduction <maximumf>, %147, %cst_67 [1] : vector<8x8xf32> to vector<8xf32>
    %149 = vector.shape_cast %148 : vector<8xf32> to vector<8x1xf32>
    %150 = vector.broadcast %149 : vector<8x1xf32> to vector<8x8xf32>
    %151 = arith.subf %147, %150 : vector<8x8xf32>
    %152 = math.exp %151 : vector<8x8xf32>
    %cst_68 = arith.constant dense<0.000000e+00> : vector<8xf32>
    %153 = vector.multi_reduction <add>, %152, %cst_68 [1] : vector<8x8xf32> to vector<8xf32>
    %154 = vector.shape_cast %153 : vector<8xf32> to vector<8x1xf32>
    %155 = tpu.reciprocal %154 {approx = true} : vector<8x1xf32> -> vector<8x1xf32>
    %156 = vector.broadcast %155 : vector<8x1xf32> to vector<8x8xf32>
    %157 = arith.mulf %152, %156 : vector<8x8xf32>
    %158 = arith.truncf %157 : vector<8x8xf32> to vector<8x8xbf16>
    %cst_69 = arith.constant dense<0.000000e+00> : vector<8x8xf32>
    %159 = tpu.matmul %158, %146, %cst_69 {dimension_numbers = #tpu.dot_dimension_numbers<[1], [0], [0], [1], [0, 0, 1, 1], [], []>} : vector<8x8xbf16>, vector<8x8xbf16>, vector<8x8xf32> -> vector<8x8xf32>
    %160 = vector.extract_strided_slice %126 {offsets = [0, 16], sizes = [8, 8], strides = [1, 1]} : vector<8x32xbf16> to vector<8x8xbf16>
    %161 = vector.extract_strided_slice %127 {offsets = [0, 16], sizes = [8, 8], strides = [1, 1]} : vector<8x64xbf16> to vector<8x8xbf16>
    %162 = vector.extract_strided_slice %127 {offsets = [0, 48], sizes = [8, 8], strides = [1, 1]} : vector<8x64xbf16> to vector<8x8xbf16>
    %cst_70 = arith.constant dense<0.000000e+00> : vector<8x8xf32>
    %163 = tpu.matmul %160, %161, %cst_70 {dimension_numbers = #tpu.dot_dimension_numbers<[1], [1], [0], [0], [0, 0, 1, 0], [], []>} : vector<8x8xbf16>, vector<8x8xbf16>, vector<8x8xf32> -> vector<8x8xf32>
    %cst_71 = arith.constant dense<0xFF800000> : vector<8xf32>
    %164 = vector.multi_reduction <maximumf>, %163, %cst_71 [1] : vector<8x8xf32> to vector<8xf32>
    %165 = vector.shape_cast %164 : vector<8xf32> to vector<8x1xf32>
    %166 = vector.broadcast %165 : vector<8x1xf32> to vector<8x8xf32>
    %167 = arith.subf %163, %166 : vector<8x8xf32>
    %168 = math.exp %167 : vector<8x8xf32>
    %cst_72 = arith.constant dense<0.000000e+00> : vector<8xf32>
    %169 = vector.multi_reduction <add>, %168, %cst_72 [1] : vector<8x8xf32> to vector<8xf32>
    %170 = vector.shape_cast %169 : vector<8xf32> to vector<8x1xf32>
    %171 = tpu.reciprocal %170 {approx = true} : vector<8x1xf32> -> vector<8x1xf32>
    %172 = vector.broadcast %171 : vector<8x1xf32> to vector<8x8xf32>
    %173 = arith.mulf %168, %172 : vector<8x8xf32>
    %174 = arith.truncf %173 : vector<8x8xf32> to vector<8x8xbf16>
    %cst_73 = arith.constant dense<0.000000e+00> : vector<8x8xf32>
    %175 = tpu.matmul %174, %162, %cst_73 {dimension_numbers = #tpu.dot_dimension_numbers<[1], [0], [0], [1], [0, 0, 1, 1], [], []>} : vector<8x8xbf16>, vector<8x8xbf16>, vector<8x8xf32> -> vector<8x8xf32>
    %176 = vector.extract_strided_slice %126 {offsets = [0, 24], sizes = [8, 8], strides = [1, 1]} : vector<8x32xbf16> to vector<8x8xbf16>
    %177 = vector.extract_strided_slice %127 {offsets = [0, 24], sizes = [8, 8], strides = [1, 1]} : vector<8x64xbf16> to vector<8x8xbf16>
    %178 = vector.extract_strided_slice %127 {offsets = [0, 56], sizes = [8, 8], strides = [1, 1]} : vector<8x64xbf16> to vector<8x8xbf16>
    %cst_74 = arith.constant dense<0.000000e+00> : vector<8x8xf32>
    %179 = tpu.matmul %176, %177, %cst_74 {dimension_numbers = #tpu.dot_dimension_numbers<[1], [1], [0], [0], [0, 0, 1, 0], [], []>} : vector<8x8xbf16>, vector<8x8xbf16>, vector<8x8xf32> -> vector<8x8xf32>
    %cst_75 = arith.constant dense<0xFF800000> : vector<8xf32>
    %180 = vector.multi_reduction <maximumf>, %179, %cst_75 [1] : vector<8x8xf32> to vector<8xf32>
    %181 = vector.shape_cast %180 : vector<8xf32> to vector<8x1xf32>
    %182 = vector.broadcast %181 : vector<8x1xf32> to vector<8x8xf32>
    %183 = arith.subf %179, %182 : vector<8x8xf32>
    %184 = math.exp %183 : vector<8x8xf32>
    %cst_76 = arith.constant dense<0.000000e+00> : vector<8xf32>
    %185 = vector.multi_reduction <add>, %184, %cst_76 [1] : vector<8x8xf32> to vector<8xf32>
    %186 = vector.shape_cast %185 : vector<8xf32> to vector<8x1xf32>
    %187 = tpu.reciprocal %186 {approx = true} : vector<8x1xf32> -> vector<8x1xf32>
    %188 = vector.broadcast %187 : vector<8x1xf32> to vector<8x8xf32>
    %189 = arith.mulf %184, %188 : vector<8x8xf32>
    %190 = arith.truncf %189 : vector<8x8xf32> to vector<8x8xbf16>
    %cst_77 = arith.constant dense<0.000000e+00> : vector<8x8xf32>
    %191 = tpu.matmul %190, %178, %cst_77 {dimension_numbers = #tpu.dot_dimension_numbers<[1], [0], [0], [1], [0, 0, 1, 1], [], []>} : vector<8x8xbf16>, vector<8x8xbf16>, vector<8x8xf32> -> vector<8x8xf32>
    %192 = tpu.concatenate %143, %159, %175, %191 in 1 : vector<8x8xf32>, vector<8x8xf32>, vector<8x8xf32>, vector<8x8xf32> -> vector<8x32xf32>
    %193 = arith.truncf %192 : vector<8x32xf32> to vector<8x32xbf16>
    %cst_78 = arith.constant dense<0.000000e+00> : vector<8x32xf32>
    %194 = tpu.matmul %193, %116, %cst_78 {dimension_numbers = #tpu.dot_dimension_numbers<[1], [0], [0], [1], [0, 0, 1, 1], [], []>} : vector<8x32xbf16>, vector<32x32xbf16>, vector<8x32xf32> -> vector<8x32xf32>
    %195 = vector.broadcast %117 : vector<1x32xf32> to vector<8x32xf32>
    %196 = arith.addf %194, %195 : vector<8x32xf32>
    %197 = arith.addf %110, %196 : vector<8x32xf32>
    %cst_79 = arith.constant dense<0.000000e+00> : vector<8xf32>
    %198 = vector.multi_reduction <add>, %197, %cst_79 [1] : vector<8x32xf32> to vector<8xf32>
    %199 = vector.shape_cast %198 : vector<8xf32> to vector<8x1xf32>
    %cst_80 = arith.constant 3.200000e+01 : f32
    %200 = vector.broadcast %cst_80 : f32 to vector<8x1xf32>
    %201 = arith.divf %199, %200 : vector<8x1xf32>
    %202 = vector.broadcast %201 : vector<8x1xf32> to vector<8x32xf32>
    %203 = arith.subf %197, %202 : vector<8x32xf32>
    %204 = arith.mulf %203, %203 : vector<8x32xf32>
    %cst_81 = arith.constant dense<0.000000e+00> : vector<8xf32>
    %205 = vector.multi_reduction <add>, %204, %cst_81 [1] : vector<8x32xf32> to vector<8xf32>
    %206 = vector.shape_cast %205 : vector<8xf32> to vector<8x1xf32>
    %cst_82 = arith.constant 3.200000e+01 : f32
    %207 = vector.broadcast %cst_82 : f32 to vector<8x1xf32>
    %208 = arith.divf %206, %207 : vector<8x1xf32>
    %cst_83 = arith.constant 9.99999974E-6 : f32
    %209 = vector.broadcast %cst_83 : f32 to vector<8x1xf32>
    %210 = arith.addf %208, %209 : vector<8x1xf32>
    %211 = math.rsqrt %210 : vector<8x1xf32>
    %212 = vector.broadcast %211 : vector<8x1xf32> to vector<8x32xf32>
    %213 = arith.mulf %203, %212 : vector<8x32xf32>
    %214 = vector.broadcast %118 : vector<1x32xf32> to vector<8x32xf32>
    %215 = arith.mulf %213, %214 : vector<8x32xf32>
    %216 = vector.broadcast %119 : vector<1x32xf32> to vector<8x32xf32>
    %217 = arith.addf %215, %216 : vector<8x32xf32>
    %218 = arith.truncf %217 : vector<8x32xf32> to vector<8x32xbf16>
    %c0_84 = arith.constant 0 : index
    %c0_85 = arith.constant 0 : index
    %219 = vector.load %arg19[%c0_84, %c0_85] : memref<32x128xbf16, #tpu.memory_space<vmem>>, vector<32x128xbf16>
    %cst_86 = arith.constant dense<0.000000e+00> : vector<8x128xf32>
    %220 = tpu.matmul %218, %219, %cst_86 {dimension_numbers = #tpu.dot_dimension_numbers<[1], [0], [0], [1], [0, 0, 1, 1], [], []>} : vector<8x32xbf16>, vector<32x128xbf16>, vector<8x128xf32> -> vector<8x128xf32>
    %c0_87 = arith.constant 0 : index
    %c0_88 = arith.constant 0 : index
    %221 = vector.load %arg20[%c0_87, %c0_88] : memref<1x128xf32, #tpu.memory_space<vmem>>, vector<1x128xf32>
    %222 = vector.broadcast %221 : vector<1x128xf32> to vector<8x128xf32>
    %223 = arith.addf %220, %222 : vector<8x128xf32>
    %cst_89 = arith.constant 0.000000e+00 : f32
    %224 = vector.broadcast %cst_89 : f32 to vector<8x128xf32>
    %225 = arith.maximumf %223, %224 : vector<8x128xf32>
    %226 = arith.truncf %225 : vector<8x128xf32> to vector<8x128xbf16>
    %c0_90 = arith.constant 0 : index
    %c0_91 = arith.constant 0 : index
    %227 = vector.load %arg21[%c0_90, %c0_91] : memref<128x32xbf16, #tpu.memory_space<vmem>>, vector<128x32xbf16>
    %cst_92 = arith.constant dense<0.000000e+00> : vector<8x32xf32>
    %228 = tpu.matmul %226, %227, %cst_92 {dimension_numbers = #tpu.dot_dimension_numbers<[1], [0], [0], [1], [0, 0, 1, 1], [], []>} : vector<8x128xbf16>, vector<128x32xbf16>, vector<8x32xf32> -> vector<8x32xf32>
    %c0_93 = arith.constant 0 : index
    %c0_94 = arith.constant 0 : index
    %229 = vector.load %arg22[%c0_93, %c0_94] : memref<1x32xf32, #tpu.memory_space<vmem>>, vector<1x32xf32>
    %230 = vector.broadcast %229 : vector<1x32xf32> to vector<8x32xf32>
    %231 = arith.addf %228, %230 : vector<8x32xf32>
    %232 = arith.addf %217, %231 : vector<8x32xf32>
    %c0_95 = arith.constant 0 : index
    %c0_96 = arith.constant 0 : index
    %233 = vector.load %arg23[%c0_95, %c0_96] : memref<1x32xf32, #tpu.memory_space<vmem>>, vector<1x32xf32>
    %c0_97 = arith.constant 0 : index
    %c0_98 = arith.constant 0 : index
    %234 = vector.load %arg24[%c0_97, %c0_98] : memref<1x32xf32, #tpu.memory_space<vmem>>, vector<1x32xf32>
    %cst_99 = arith.constant dense<0.000000e+00> : vector<8xf32>
    %235 = vector.multi_reduction <add>, %232, %cst_99 [1] : vector<8x32xf32> to vector<8xf32>
    %236 = vector.shape_cast %235 : vector<8xf32> to vector<8x1xf32>
    %cst_100 = arith.constant 3.200000e+01 : f32
    %237 = vector.broadcast %cst_100 : f32 to vector<8x1xf32>
    %238 = arith.divf %236, %237 : vector<8x1xf32>
    %239 = vector.broadcast %238 : vector<8x1xf32> to vector<8x32xf32>
    %240 = arith.subf %232, %239 : vector<8x32xf32>
    %241 = arith.mulf %240, %240 : vector<8x32xf32>
    %cst_101 = arith.constant dense<0.000000e+00> : vector<8xf32>
    %242 = vector.multi_reduction <add>, %241, %cst_101 [1] : vector<8x32xf32> to vector<8xf32>
    %243 = vector.shape_cast %242 : vector<8xf32> to vector<8x1xf32>
    %cst_102 = arith.constant 3.200000e+01 : f32
    %244 = vector.broadcast %cst_102 : f32 to vector<8x1xf32>
    %245 = arith.divf %243, %244 : vector<8x1xf32>
    %cst_103 = arith.constant 9.99999974E-6 : f32
    %246 = vector.broadcast %cst_103 : f32 to vector<8x1xf32>
    %247 = arith.addf %245, %246 : vector<8x1xf32>
    %248 = math.rsqrt %247 : vector<8x1xf32>
    %249 = vector.broadcast %248 : vector<8x1xf32> to vector<8x32xf32>
    %250 = arith.mulf %240, %249 : vector<8x32xf32>
    %251 = vector.broadcast %233 : vector<1x32xf32> to vector<8x32xf32>
    %252 = arith.mulf %250, %251 : vector<8x32xf32>
    %253 = vector.broadcast %234 : vector<1x32xf32> to vector<8x32xf32>
    %254 = arith.addf %252, %253 : vector<8x32xf32>
    %255 = arith.truncf %254 : vector<8x32xf32> to vector<8x32xbf16>
    %c0_104 = arith.constant 0 : index
    %c0_105 = arith.constant 0 : index
    %c0_106 = arith.constant 0 : index
    %256 = vector.load %arg25[%c0_104, %c0_105, %c0_106] : memref<1x8x32xbf16, #tpu.memory_space<vmem>>, vector<1x8x32xbf16>
    %257 = vector.shape_cast %256 : vector<1x8x32xbf16> to vector<8x32xbf16>
    %258 = vector.shape_cast %255 : vector<8x32xbf16> to vector<1x8x32xbf16>
    tpu.vector_store %arg25[%c0_104, %c0_105, %c0_106], %258 {strides = array<i32>} : memref<1x8x32xbf16, #tpu.memory_space<vmem>>, vector<1x8x32xbf16>,
    return
  }
  func.func @transform_0(%arg0: i32) -> (i32, i32, i32) {
    %c0_i32 = arith.constant 0 : i32
    %c0_i32_0 = arith.constant 0 : i32
    %c0_i32_1 = arith.constant 0 : i32
    return %arg0, %c0_i32, %c0_i32_0 : i32, i32, i32
  }
  func.func @transform_1(%arg0: i32) -> (i32, i32, i32) {
    %c0_i32 = arith.constant 0 : i32
    %c0_i32_0 = arith.constant 0 : i32
    %c0_i32_1 = arith.constant 0 : i32
    return %arg0, %c0_i32, %c0_i32_0 : i32, i32, i32
  }
  func.func @transform_2(%arg0: i32) -> (i32, i32) {
    %c0_i32 = arith.constant 0 : i32
    %c0_i32_0 = arith.constant 0 : i32
    %c0_i32_1 = arith.constant 0 : i32
    return %c0_i32, %c0_i32_0 : i32, i32
  }
  func.func @transform_3(%arg0: i32) -> (i32, i32) {
    %c0_i32 = arith.constant 0 : i32
    %c0_i32_0 = arith.constant 0 : i32
    %c0_i32_1 = arith.constant 0 : i32
    return %c0_i32, %c0_i32_0 : i32, i32
  }
  func.func @transform_4(%arg0: i32) -> (i32, i32) {
    %c0_i32 = arith.constant 0 : i32
    %c0_i32_0 = arith.constant 0 : i32
    %c0_i32_1 = arith.constant 0 : i32
    return %c0_i32, %c0_i32_0 : i32, i32
  }
  func.func @transform_5(%arg0: i32) -> (i32, i32) {
    %c0_i32 = arith.constant 0 : i32
    %c0_i32_0 = arith.constant 0 : i32
    %c0_i32_1 = arith.constant 0 : i32
    return %c0_i32, %c0_i32_0 : i32, i32
  }
  func.func @transform_6(%arg0: i32) -> (i32, i32) {
    %c0_i32 = arith.constant 0 : i32
    %c0_i32_0 = arith.constant 0 : i32
    %c0_i32_1 = arith.constant 0 : i32
    return %c0_i32, %c0_i32_0 : i32, i32
  }
  func.func @transform_7(%arg0: i32) -> (i32, i32) {
    %c0_i32 = arith.constant 0 : i32
    %c0_i32_0 = arith.constant 0 : i32
    %c0_i32_1 = arith.constant 0 : i32
    return %c0_i32, %c0_i32_0 : i32, i32
  }
  func.func @transform_8(%arg0: i32) -> (i32, i32) {
    %c0_i32 = arith.constant 0 : i32
    %c0_i32_0 = arith.constant 0 : i32
    %c0_i32_1 = arith.constant 0 : i32
    return %c0_i32, %c0_i32_0 : i32, i32
  }
  func.func @transform_9(%arg0: i32) -> (i32, i32) {
    %c0_i32 = arith.constant 0 : i32
    %c0_i32_0 = arith.constant 0 : i32
    %c0_i32_1 = arith.constant 0 : i32
    return %c0_i32, %c0_i32_0 : i32, i32
  }
  func.func @transform_10(%arg0: i32) -> (i32, i32) {
    %c0_i32 = arith.constant 0 : i32
    %c0_i32_0 = arith.constant 0 : i32
    %c0_i32_1 = arith.constant 0 : i32
    return %c0_i32, %c0_i32_0 : i32, i32
  }
  func.func @transform_11(%arg0: i32) -> (i32, i32) {
    %c0_i32 = arith.constant 0 : i32
    %c0_i32_0 = arith.constant 0 : i32
    %c0_i32_1 = arith.constant 0 : i32
    return %c0_i32, %c0_i32_0 : i32, i32
  }
  func.func @transform_12(%arg0: i32) -> (i32, i32) {
    %c0_i32 = arith.constant 0 : i32
    %c0_i32_0 = arith.constant 0 : i32
    %c0_i32_1 = arith.constant 0 : i32
    return %c0_i32, %c0_i32_0 : i32, i32
  }
  func.func @transform_13(%arg0: i32) -> (i32, i32) {
    %c0_i32 = arith.constant 0 : i32
    %c0_i32_0 = arith.constant 0 : i32
    %c0_i32_1 = arith.constant 0 : i32
    return %c0_i32, %c0_i32_0 : i32, i32
  }
  func.func @transform_14(%arg0: i32) -> (i32, i32) {
    %c0_i32 = arith.constant 0 : i32
    %c0_i32_0 = arith.constant 0 : i32
    %c0_i32_1 = arith.constant 0 : i32
    return %c0_i32, %c0_i32_0 : i32, i32
  }
  func.func @transform_15(%arg0: i32) -> (i32, i32) {
    %c0_i32 = arith.constant 0 : i32
    %c0_i32_0 = arith.constant 0 : i32
    %c0_i32_1 = arith.constant 0 : i32
    return %c0_i32, %c0_i32_0 : i32, i32
  }
  func.func @transform_16(%arg0: i32) -> (i32, i32) {
    %c0_i32 = arith.constant 0 : i32
    %c0_i32_0 = arith.constant 0 : i32
    %c0_i32_1 = arith.constant 0 : i32
    return %c0_i32, %c0_i32_0 : i32, i32
  }
  func.func @transform_17(%arg0: i32) -> (i32, i32) {
    %c0_i32 = arith.constant 0 : i32
    %c0_i32_0 = arith.constant 0 : i32
    %c0_i32_1 = arith.constant 0 : i32
    return %c0_i32, %c0_i32_0 : i32, i32
  }
  func.func @transform_18(%arg0: i32) -> (i32, i32) {
    %c0_i32 = arith.constant 0 : i32
    %c0_i32_0 = arith.constant 0 : i32
    %c0_i32_1 = arith.constant 0 : i32
    return %c0_i32, %c0_i32_0 : i32, i32
  }
  func.func @transform_19(%arg0: i32) -> (i32, i32) {
    %c0_i32 = arith.constant 0 : i32
    %c0_i32_0 = arith.constant 0 : i32
    %c0_i32_1 = arith.constant 0 : i32
    return %c0_i32, %c0_i32_0 : i32, i32
  }
  func.func @transform_20(%arg0: i32) -> (i32, i32) {
    %c0_i32 = arith.constant 0 : i32
    %c0_i32_0 = arith.constant 0 : i32
    %c0_i32_1 = arith.constant 0 : i32
    return %c0_i32, %c0_i32_0 : i32, i32
  }
  func.func @transform_21(%arg0: i32) -> (i32, i32) {
    %c0_i32 = arith.constant 0 : i32
    %c0_i32_0 = arith.constant 0 : i32
    %c0_i32_1 = arith.constant 0 : i32
    return %c0_i32, %c0_i32_0 : i32, i32
  }
  func.func @transform_22(%arg0: i32) -> (i32, i32) {
    %c0_i32 = arith.constant 0 : i32
    %c0_i32_0 = arith.constant 0 : i32
    %c0_i32_1 = arith.constant 0 : i32
    return %c0_i32, %c0_i32_0 : i32, i32
  }
  func.func @transform_23(%arg0: i32) -> (i32, i32) {
    %c0_i32 = arith.constant 0 : i32
    %c0_i32_0 = arith.constant 0 : i32
    %c0_i32_1 = arith.constant 0 : i32
    return %c0_i32, %c0_i32_0 : i32, i32
  }
  func.func @transform_24(%arg0: i32) -> (i32, i32, i32) {
    %c0_i32 = arith.constant 0 : i32
    %c0_i32_0 = arith.constant 0 : i32
    %c0_i32_1 = arith.constant 0 : i32
    return %arg0, %c0_i32, %c0_i32_0 : i32, i32, i32
  }
}

module attributes {stable_mosaic.version = 11 : i64} {
  func.func @kernel(%arg0: i32, %arg1: memref<1x8x32xbf16, #tpu.memory_space<vmem>>, %arg2: memref<1x8x32xbf16, #tpu.memory_space<vmem>>, %arg3: memref<32x32xbf16, #tpu.memory_space<vmem>>, %arg4: memref<1x32xf32, #tpu.memory_space<vmem>>, %arg5: memref<32x64xbf16, #tpu.memory_space<vmem>>, %arg6: memref<1x64xf32, #tpu.memory_space<vmem>>, %arg7: memref<32x32xbf16, #tpu.memory_space<vmem>>, %arg8: memref<1x32xf32, #tpu.memory_space<vmem>>, %arg9: memref<1x32xf32, #tpu.memory_space<vmem>>, %arg10: memref<1x32xf32, #tpu.memory_space<vmem>>, %arg11: memref<32x32xbf16, #tpu.memory_space<vmem>>, %arg12: memref<1x32xf32, #tpu.memory_space<vmem>>, %arg13: memref<32x64xbf16, #tpu.memory_space<vmem>>, %arg14: memref<1x64xf32, #tpu.memory_space<vmem>>, %arg15: memref<32x32xbf16, #tpu.memory_space<vmem>>, %arg16: memref<1x32xf32, #tpu.memory_space<vmem>>, %arg17: memref<1x32xf32, #tpu.memory_space<vmem>>, %arg18: memref<1x32xf32, #tpu.memory_space<vmem>>, %arg19: memref<32x128xbf16, #tpu.memory_space<vmem>>, %arg20: memref<1x128xf32, #tpu.memory_space<vmem>>, %arg21: memref<128x32xbf16, #tpu.memory_space<vmem>>, %arg22: memref<1x32xf32, #tpu.memory_space<vmem>>, %arg23: memref<1x32xf32, #tpu.memory_space<vmem>>, %arg24: memref<1x32xf32, #tpu.memory_space<vmem>>, %arg25: memref<1x8x32xbf16, #tpu.memory_space<vmem>>) attributes {dimension_semantics = [#tpu.dimension_semantics<parallel>], iteration_bounds = array<i64: 2>, scalar_prefetch = 0 : i64, scratch_operands = 0 : i64, tpu.core_type = #tpu.core_type<tc>, window_params = [{transform_indices = @transform_0, window_bounds = array<i64: 1, 8, 32>}, {transform_indices = @transform_1, window_bounds = array<i64: 1, 8, 32>}, {pipeline_mode = #tpu.pipeline_mode<synchronous>, transform_indices = @transform_2, window_bounds = array<i64: 32, 32>}, {pipeline_mode = #tpu.pipeline_mode<synchronous>, transform_indices = @transform_3, window_bounds = array<i64: 1, 32>}, {pipeline_mode = #tpu.pipeline_mode<synchronous>, transform_indices = @transform_4, window_bounds = array<i64: 32, 64>}, {pipeline_mode = #tpu.pipeline_mode<synchronous>, transform_indices = @transform_5, window_bounds = array<i64: 1, 64>}, {pipeline_mode = #tpu.pipeline_mode<synchronous>, transform_indices = @transform_6, window_bounds = array<i64: 32, 32>}, {pipeline_mode = #tpu.pipeline_mode<synchronous>, transform_indices = @transform_7, window_bounds = array<i64: 1, 32>}, {pipeline_mode = #tpu.pipeline_mode<synchronous>, transform_indices = @transform_8, window_bounds = array<i64: 1, 32>}, {pipeline_mode = #tpu.pipeline_mode<synchronous>, transform_indices = @transform_9, window_bounds = array<i64: 1, 32>}, {pipeline_mode = #tpu.pipeline_mode<synchronous>, transform_indices = @transform_10, window_bounds = array<i64: 32, 32>}, {pipeline_mode = #tpu.pipeline_mode<synchronous>, transform_indices = @transform_11, window_bounds = array<i64: 1, 32>}, {pipeline_mode = #tpu.pipeline_mode<synchronous>, transform_indices = @transform_12, window_bounds = array<i64: 32, 64>}, {pipeline_mode = #tpu.pipeline_mode<synchronous>, transform_indices = @transform_13, window_bounds = array<i64: 1, 64>}, {pipeline_mode = #tpu.pipeline_mode<synchronous>, transform_indices = @transform_14, window_bounds = array<i64: 32, 32>}, {pipeline_mode = #tpu.pipeline_mode<synchronous>, transform_indices = @transform_15, window_bounds = array<i64: 1, 32>}, {pipeline_mode = #tpu.pipeline_mode<synchronous>, transform_indices = @transform_16, window_bounds = array<i64: 1, 32>}, {pipeline_mode = #tpu.pipeline_mode<synchronous>, transform_indices = @transform_17, window_bounds = array<i64: 1, 32>}, {pipeline_mode = #tpu.pipeline_mode<synchronous>, transform_indices = @transform_18, window_bounds = array<i64: 32, 128>}, {pipeline_mode = #tpu.pipeline_mode<synchronous>, transform_indices = @transform_19, window_bounds = array<i64: 1, 128>}, {pipeline_mode = #tpu.pipeline_mode<synchronous>, transform_indices = @transform_20, window_bounds = array<i64: 128, 32>}, {pipeline_mode = #tpu.pipeline_mode<synchronous>, transform_indices = @transform_21, window_bounds = array<i64: 1, 32>}, {pipeline_mode = #tpu.pipeline_mode<synchronous>, transform_indices = @transform_22, window_bounds = array<i64: 1, 32>}, {pipeline_mode = #tpu.pipeline_mode<synchronous>, transform_indices = @transform_23, window_bounds = array<i64: 1, 32>}, {transform_indices = @transform_24, window_bounds = array<i64: 1, 8, 32>}]} {
    %c0 = arith.constant 0 : index
    %c0_0 = arith.constant 0 : index
    %c0_1 = arith.constant 0 : index
    %0 = vector.load %arg1[%c0, %c0_0, %c0_1] : memref<1x8x32xbf16, #tpu.memory_space<vmem>>, vector<1x8x32xbf16>
    %1 = vector.shape_cast %0 : vector<1x8x32xbf16> to vector<8x32xbf16>
    %c0_2 = arith.constant 0 : index
    %c0_3 = arith.constant 0 : index
    %c0_4 = arith.constant 0 : index
    %2 = vector.load %arg2[%c0_2, %c0_3, %c0_4] : memref<1x8x32xbf16, #tpu.memory_space<vmem>>, vector<1x8x32xbf16>
    %3 = vector.shape_cast %2 : vector<1x8x32xbf16> to vector<8x32xbf16>
    %4 = arith.extf %1 : vector<8x32xbf16> to vector<8x32xf32>
    %c0_5 = arith.constant 0 : index
    %c0_6 = arith.constant 0 : index
    %5 = vector.load %arg3[%c0_5, %c0_6] : memref<32x32xbf16, #tpu.memory_space<vmem>>, vector<32x32xbf16>
    %c0_7 = arith.constant 0 : index
    %c0_8 = arith.constant 0 : index
    %6 = vector.load %arg4[%c0_7, %c0_8] : memref<1x32xf32, #tpu.memory_space<vmem>>, vector<1x32xf32>
    %c0_9 = arith.constant 0 : index
    %c0_10 = arith.constant 0 : index
    %7 = vector.load %arg5[%c0_9, %c0_10] : memref<32x64xbf16, #tpu.memory_space<vmem>>, vector<32x64xbf16>
    %c0_11 = arith.constant 0 : index
    %c0_12 = arith.constant 0 : index
    %8 = vector.load %arg6[%c0_11, %c0_12] : memref<1x64xf32, #tpu.memory_space<vmem>>, vector<1x64xf32>
    %c0_13 = arith.constant 0 : index
    %c0_14 = arith.constant 0 : index
    %9 = vector.load %arg7[%c0_13, %c0_14] : memref<32x32xbf16, #tpu.memory_space<vmem>>, vector<32x32xbf16>
    %c0_15 = arith.constant 0 : index
    %c0_16 = arith.constant 0 : index
    %10 = vector.load %arg8[%c0_15, %c0_16] : memref<1x32xf32, #tpu.memory_space<vmem>>, vector<1x32xf32>
    %c0_17 = arith.constant 0 : index
    %c0_18 = arith.constant 0 : index
    %11 = vector.load %arg9[%c0_17, %c0_18] : memref<1x32xf32, #tpu.memory_space<vmem>>, vector<1x32xf32>
    %c0_19 = arith.constant 0 : index
    %c0_20 = arith.constant 0 : index
    %12 = vector.load %arg10[%c0_19, %c0_20] : memref<1x32xf32, #tpu.memory_space<vmem>>, vector<1x32xf32>
    %cst = arith.constant dense<0.000000e+00> : vector<8x32xf32>
    %13 = tpu.matmul %1, %5, %cst {dimension_numbers = #tpu.dot_dimension_numbers<[1], [0], [0], [1], [0, 0, 1, 1], [], []>} : vector<8x32xbf16>, vector<32x32xbf16>, vector<8x32xf32> -> vector<8x32xf32>
    %14 = vector.broadcast %6 : vector<1x32xf32> to vector<8x32xf32>
    %15 = arith.addf %13, %14 : vector<8x32xf32>
    %cst_21 = arith.constant dense<0.000000e+00> : vector<8x64xf32>
    %16 = tpu.matmul %1, %7, %cst_21 {dimension_numbers = #tpu.dot_dimension_numbers<[1], [0], [0], [1], [0, 0, 1, 1], [], []>} : vector<8x32xbf16>, vector<32x64xbf16>, vector<8x64xf32> -> vector<8x64xf32>
    %17 = vector.broadcast %8 : vector<1x64xf32> to vector<8x64xf32>
    %18 = arith.addf %16, %17 : vector<8x64xf32>
    %19 = arith.truncf %15 : vector<8x32xf32> to vector<8x32xbf16>
    %20 = arith.truncf %18 : vector<8x64xf32> to vector<8x64xbf16>
    %21 = vector.extract_strided_slice %19 {offsets = [0, 0], sizes = [8, 8], strides = [1, 1]} : vector<8x32xbf16> to vector<8x8xbf16>
    %22 = vector.extract_strided_slice %20 {offsets = [0, 0], sizes = [8, 8], strides = [1, 1]} : vector<8x64xbf16> to vector<8x8xbf16>
    %23 = vector.extract_strided_slice %20 {offsets = [0, 32], sizes = [8, 8], strides = [1, 1]} : vector<8x64xbf16> to vector<8x8xbf16>
    %cst_22 = arith.constant dense<0.000000e+00> : vector<8x8xf32>
    %24 = tpu.matmul %21, %22, %cst_22 {dimension_numbers = #tpu.dot_dimension_numbers<[1], [1], [0], [0], [0, 0, 1, 0], [], []>} : vector<8x8xbf16>, vector<8x8xbf16>, vector<8x8xf32> -> vector<8x8xf32>
    %cst_23 = arith.constant dense<0xFF800000> : vector<8xf32>
    %25 = vector.multi_reduction <maximumf>, %24, %cst_23 [1] : vector<8x8xf32> to vector<8xf32>
    %26 = vector.shape_cast %25 : vector<8xf32> to vector<8x1xf32>
    %27 = vector.broadcast %26 : vector<8x1xf32> to vector<8x8xf32>
    %28 = arith.subf %24, %27 : vector<8x8xf32>
    %29 = math.exp %28 : vector<8x8xf32>
    %cst_24 = arith.constant dense<0.000000e+00> : vector<8xf32>
    %30 = vector.multi_reduction <add>, %29, %cst_24 [1] : vector<8x8xf32> to vector<8xf32>
    %31 = vector.shape_cast %30 : vector<8xf32> to vector<8x1xf32>
    %32 = tpu.reciprocal %31 {approx = true} : vector<8x1xf32> -> vector<8x1xf32>
    %33 = vector.broadcast %32 : vector<8x1xf32> to vector<8x8xf32>
    %34 = arith.mulf %29, %33 : vector<8x8xf32>
    %35 = arith.truncf %34 : vector<8x8xf32> to vector<8x8xbf16>
    %cst_25 = arith.constant dense<0.000000e+00> : vector<8x8xf32>
    %36 = tpu.matmul %35, %23, %cst_25 {dimension_numbers = #tpu.dot_dimension_numbers<[1], [0], [0], [1], [0, 0, 1, 1], [], []>} : vector<8x8xbf16>, vector<8x8xbf16>, vector<8x8xf32> -> vector<8x8xf32>
    %37 = vector.extract_strided_slice %19 {offsets = [0, 8], sizes = [8, 8], strides = [1, 1]} : vector<8x32xbf16> to vector<8x8xbf16>
    %38 = vector.extract_strided_slice %20 {offsets = [0, 8], sizes = [8, 8], strides = [1, 1]} : vector<8x64xbf16> to vector<8x8xbf16>
    %39 = vector.extract_strided_slice %20 {offsets = [0, 40], sizes = [8, 8], strides = [1, 1]} : vector<8x64xbf16> to vector<8x8xbf16>
    %cst_26 = arith.constant dense<0.000000e+00> : vector<8x8xf32>
    %40 = tpu.matmul %37, %38, %cst_26 {dimension_numbers = #tpu.dot_dimension_numbers<[1], [1], [0], [0], [0, 0, 1, 0], [], []>} : vector<8x8xbf16>, vector<8x8xbf16>, vector<8x8xf32> -> vector<8x8xf32>
    %cst_27 = arith.constant dense<0xFF800000> : vector<8xf32>
    %41 = vector.multi_reduction <maximumf>, %40, %cst_27 [1] : vector<8x8xf32> to vector<8xf32>
    %42 = vector.shape_cast %41 : vector<8xf32> to vector<8x1xf32>
    %43 = vector.broadcast %42 : vector<8x1xf32> to vector<8x8xf32>
    %44 = arith.subf %40, %43 : vector<8x8xf32>
    %45 = math.exp %44 : vector<8x8xf32>
    %cst_28 = arith.constant dense<0.000000e+00> : vector<8xf32>
    %46 = vector.multi_reduction <add>, %45, %cst_28 [1] : vector<8x8xf32> to vector<8xf32>
    %47 = vector.shape_cast %46 : vector<8xf32> to vector<8x1xf32>
    %48 = tpu.reciprocal %47 {approx = true} : vector<8x1xf32> -> vector<8x1xf32>
    %49 = vector.broadcast %48 : vector<8x1xf32> to vector<8x8xf32>
    %50 = arith.mulf %45, %49 : vector<8x8xf32>
    %51 = arith.truncf %50 : vector<8x8xf32> to vector<8x8xbf16>
    %cst_29 = arith.constant dense<0.000000e+00> : vector<8x8xf32>
    %52 = tpu.matmul %51, %39, %cst_29 {dimension_numbers = #tpu.dot_dimension_numbers<[1], [0], [0], [1], [0, 0, 1, 1], [], []>} : vector<8x8xbf16>, vector<8x8xbf16>, vector<8x8xf32> -> vector<8x8xf32>
    %53 = vector.extract_strided_slice %19 {offsets = [0, 16], sizes = [8, 8], strides = [1, 1]} : vector<8x32xbf16> to vector<8x8xbf16>
    %54 = vector.extract_strided_slice %20 {offsets = [0, 16], sizes = [8, 8], strides = [1, 1]} : vector<8x64xbf16> to vector<8x8xbf16>
    %55 = vector.extract_strided_slice %20 {offsets = [0, 48], sizes = [8, 8], strides = [1, 1]} : vector<8x64xbf16> to vector<8x8xbf16>
    %cst_30 = arith.constant dense<0.000000e+00> : vector<8x8xf32>
    %56 = tpu.matmul %53, %54, %cst_30 {dimension_numbers = #tpu.dot_dimension_numbers<[1], [1], [0], [0], [0, 0, 1, 0], [], []>} : vector<8x8xbf16>, vector<8x8xbf16>, vector<8x8xf32> -> vector<8x8xf32>
    %cst_31 = arith.constant dense<0xFF800000> : vector<8xf32>
    %57 = vector.multi_reduction <maximumf>, %56, %cst_31 [1] : vector<8x8xf32> to vector<8xf32>
    %58 = vector.shape_cast %57 : vector<8xf32> to vector<8x1xf32>
    %59 = vector.broadcast %58 : vector<8x1xf32> to vector<8x8xf32>
    %60 = arith.subf %56, %59 : vector<8x8xf32>
    %61 = math.exp %60 : vector<8x8xf32>
    %cst_32 = arith.constant dense<0.000000e+00> : vector<8xf32>
    %62 = vector.multi_reduction <add>, %61, %cst_32 [1] : vector<8x8xf32> to vector<8xf32>
    %63 = vector.shape_cast %62 : vector<8xf32> to vector<8x1xf32>
    %64 = tpu.reciprocal %63 {approx = true} : vector<8x1xf32> -> vector<8x1xf32>
    %65 = vector.broadcast %64 : vector<8x1xf32> to vector<8x8xf32>
    %66 = arith.mulf %61, %65 : vector<8x8xf32>
    %67 = arith.truncf %66 : vector<8x8xf32> to vector<8x8xbf16>
    %cst_33 = arith.constant dense<0.000000e+00> : vector<8x8xf32>
    %68 = tpu.matmul %67, %55, %cst_33 {dimension_numbers = #tpu.dot_dimension_numbers<[1], [0], [0], [1], [0, 0, 1, 1], [], []>} : vector<8x8xbf16>, vector<8x8xbf16>, vector<8x8xf32> -> vector<8x8xf32>
    %69 = vector.extract_strided_slice %19 {offsets = [0, 24], sizes = [8, 8], strides = [1, 1]} : vector<8x32xbf16> to vector<8x8xbf16>
    %70 = vector.extract_strided_slice %20 {offsets = [0, 24], sizes = [8, 8], strides = [1, 1]} : vector<8x64xbf16> to vector<8x8xbf16>
    %71 = vector.extract_strided_slice %20 {offsets = [0, 56], sizes = [8, 8], strides = [1, 1]} : vector<8x64xbf16> to vector<8x8xbf16>
    %cst_34 = arith.constant dense<0.000000e+00> : vector<8x8xf32>
    %72 = tpu.matmul %69, %70, %cst_34 {dimension_numbers = #tpu.dot_dimension_numbers<[1], [1], [0], [0], [0, 0, 1, 0], [], []>} : vector<8x8xbf16>, vector<8x8xbf16>, vector<8x8xf32> -> vector<8x8xf32>
    %cst_35 = arith.constant dense<0xFF800000> : vector<8xf32>
    %73 = vector.multi_reduction <maximumf>, %72, %cst_35 [1] : vector<8x8xf32> to vector<8xf32>
    %74 = vector.shape_cast %73 : vector<8xf32> to vector<8x1xf32>
    %75 = vector.broadcast %74 : vector<8x1xf32> to vector<8x8xf32>
    %76 = arith.subf %72, %75 : vector<8x8xf32>
    %77 = math.exp %76 : vector<8x8xf32>
    %cst_36 = arith.constant dense<0.000000e+00> : vector<8xf32>
    %78 = vector.multi_reduction <add>, %77, %cst_36 [1] : vector<8x8xf32> to vector<8xf32>
    %79 = vector.shape_cast %78 : vector<8xf32> to vector<8x1xf32>
    %80 = tpu.reciprocal %79 {approx = true} : vector<8x1xf32> -> vector<8x1xf32>
    %81 = vector.broadcast %80 : vector<8x1xf32> to vector<8x8xf32>
    %82 = arith.mulf %77, %81 : vector<8x8xf32>
    %83 = arith.truncf %82 : vector<8x8xf32> to vector<8x8xbf16>
    %cst_37 = arith.constant dense<0.000000e+00> : vector<8x8xf32>
    %84 = tpu.matmul %83, %71, %cst_37 {dimension_numbers = #tpu.dot_dimension_numbers<[1], [0], [0], [1], [0, 0, 1, 1], [], []>} : vector<8x8xbf16>, vector<8x8xbf16>, vector<8x8xf32> -> vector<8x8xf32>
    %85 = tpu.concatenate %36, %52, %68, %84 in 1 : vector<8x8xf32>, vector<8x8xf32>, vector<8x8xf32>, vector<8x8xf32> -> vector<8x32xf32>
    %86 = arith.truncf %85 : vector<8x32xf32> to vector<8x32xbf16>
    %cst_38 = arith.constant dense<0.000000e+00> : vector<8x32xf32>
    %87 = tpu.matmul %86, %9, %cst_38 {dimension_numbers = #tpu.dot_dimension_numbers<[1], [0], [0], [1], [0, 0, 1, 1], [], []>} : vector<8x32xbf16>, vector<32x32xbf16>, vector<8x32xf32> -> vector<8x32xf32>
    %88 = vector.broadcast %10 : vector<1x32xf32> to vector<8x32xf32>
    %89 = arith.addf %87, %88 : vector<8x32xf32>
    %90 = arith.addf %4, %89 : vector<8x32xf32>
    %cst_39 = arith.constant dense<0.000000e+00> : vector<8xf32>
    %91 = vector.multi_reduction <add>, %90, %cst_39 [1] : vector<8x32xf32> to vector<8xf32>
    %92 = vector.shape_cast %91 : vector<8xf32> to vector<8x1xf32>
    %cst_40 = arith.constant 3.200000e+01 : f32
    %93 = vector.broadcast %cst_40 : f32 to vector<8x1xf32>
    %94 = arith.divf %92, %93 : vector<8x1xf32>
    %95 = vector.broadcast %94 : vector<8x1xf32> to vector<8x32xf32>
    %96 = arith.subf %90, %95 : vector<8x32xf32>
    %97 = arith.mulf %96, %96 : vector<8x32xf32>
    %cst_41 = arith.constant dense<0.000000e+00> : vector<8xf32>
    %98 = vector.multi_reduction <add>, %97, %cst_41 [1] : vector<8x32xf32> to vector<8xf32>
    %99 = vector.shape_cast %98 : vector<8xf32> to vector<8x1xf32>
    %cst_42 = arith.constant 3.200000e+01 : f32
    %100 = vector.broadcast %cst_42 : f32 to vector<8x1xf32>
    %101 = arith.divf %99, %100 : vector<8x1xf32>
    %cst_43 = arith.constant 9.99999974E-6 : f32
    %102 = vector.broadcast %cst_43 : f32 to vector<8x1xf32>
    %103 = arith.addf %101, %102 : vector<8x1xf32>
    %104 = math.rsqrt %103 : vector<8x1xf32>
    %105 = vector.broadcast %104 : vector<8x1xf32> to vector<8x32xf32>
    %106 = arith.mulf %96, %105 : vector<8x32xf32>
    %107 = vector.broadcast %11 : vector<1x32xf32> to vector<8x32xf32>
    %108 = arith.mulf %106, %107 : vector<8x32xf32>
    %109 = vector.broadcast %12 : vector<1x32xf32> to vector<8x32xf32>
    %110 = arith.addf %108, %109 : vector<8x32xf32>
    %111 = arith.truncf %110 : vector<8x32xf32> to vector<8x32xbf16>
    %c0_44 = arith.constant 0 : index
    %c0_45 = arith.constant 0 : index
    %112 = vector.load %arg11[%c0_44, %c0_45] : memref<32x32xbf16, #tpu.memory_space<vmem>>, vector<32x32xbf16>
    %c0_46 = arith.constant 0 : index
    %c0_47 = arith.constant 0 : index
    %113 = vector.load %arg12[%c0_46, %c0_47] : memref<1x32xf32, #tpu.memory_space<vmem>>, vector<1x32xf32>
    %c0_48 = arith.constant 0 : index
    %c0_49 = arith.constant 0 : index
    %114 = vector.load %arg13[%c0_48, %c0_49] : memref<32x64xbf16, #tpu.memory_space<vmem>>, vector<32x64xbf16>
    %c0_50 = arith.constant 0 : index
    %c0_51 = arith.constant 0 : index
    %115 = vector.load %arg14[%c0_50, %c0_51] : memref<1x64xf32, #tpu.memory_space<vmem>>, vector<1x64xf32>
    %c0_52 = arith.constant 0 : index
    %c0_53 = arith.constant 0 : index
    %116 = vector.load %arg15[%c0_52, %c0_53] : memref<32x32xbf16, #tpu.memory_space<vmem>>, vector<32x32xbf16>
    %c0_54 = arith.constant 0 : index
    %c0_55 = arith.constant 0 : index
    %117 = vector.load %arg16[%c0_54, %c0_55] : memref<1x32xf32, #tpu.memory_space<vmem>>, vector<1x32xf32>
    %c0_56 = arith.constant 0 : index
    %c0_57 = arith.constant 0 : index
    %118 = vector.load %arg17[%c0_56, %c0_57] : memref<1x32xf32, #tpu.memory_space<vmem>>, vector<1x32xf32>
    %c0_58 = arith.constant 0 : index
    %c0_59 = arith.constant 0 : index
    %119 = vector.load %arg18[%c0_58, %c0_59] : memref<1x32xf32, #tpu.memory_space<vmem>>, vector<1x32xf32>
    %cst_60 = arith.constant dense<0.000000e+00> : vector<8x32xf32>
    %120 = tpu.matmul %111, %112, %cst_60 {dimension_numbers = #tpu.dot_dimension_numbers<[1], [0], [0], [1], [0, 0, 1, 1], [], []>} : vector<8x32xbf16>, vector<32x32xbf16>, vector<8x32xf32> -> vector<8x32xf32>
    %121 = vector.broadcast %113 : vector<1x32xf32> to vector<8x32xf32>
    %122 = arith.addf %120, %121 : vector<8x32xf32>
    %cst_61 = arith.constant dense<0.000000e+00> : vector<8x64xf32>
    %123 = tpu.matmul %3, %114, %cst_61 {dimension_numbers = #tpu.dot_dimension_numbers<[1], [0], [0], [1], [0, 0, 1, 1], [], []>} : vector<8x32xbf16>, vector<32x64xbf16>, vector<8x64xf32> -> vector<8x64xf32>
    %124 = vector.broadcast %115 : vector<1x64xf32> to vector<8x64xf32>
    %125 = arith.addf %123, %124 : vector<8x64xf32>
    %126 = arith.truncf %122 : vector<8x32xf32> to vector<8x32xbf16>
    %127 = arith.truncf %125 : vector<8x64xf32> to vector<8x64xbf16>
    %128 = vector.extract_strided_slice %126 {offsets = [0, 0], sizes = [8, 8], strides = [1, 1]} : vector<8x32xbf16> to vector<8x8xbf16>
    %129 = vector.extract_strided_slice %127 {offsets = [0, 0], sizes = [8, 8], strides = [1, 1]} : vector<8x64xbf16> to vector<8x8xbf16>
    %130 = vector.extract_strided_slice %127 {offsets = [0, 32], sizes = [8, 8], strides = [1, 1]} : vector<8x64xbf16> to vector<8x8xbf16>
    %cst_62 = arith.constant dense<0.000000e+00> : vector<8x8xf32>
    %131 = tpu.matmul %128, %129, %cst_62 {dimension_numbers = #tpu.dot_dimension_numbers<[1], [1], [0], [0], [0, 0, 1, 0], [], []>} : vector<8x8xbf16>, vector<8x8xbf16>, vector<8x8xf32> -> vector<8x8xf32>
    %cst_63 = arith.constant dense<0xFF800000> : vector<8xf32>
    %132 = vector.multi_reduction <maximumf>, %131, %cst_63 [1] : vector<8x8xf32> to vector<8xf32>
    %133 = vector.shape_cast %132 : vector<8xf32> to vector<8x1xf32>
    %134 = vector.broadcast %133 : vector<8x1xf32> to vector<8x8xf32>
    %135 = arith.subf %131, %134 : vector<8x8xf32>
    %136 = math.exp %135 : vector<8x8xf32>
    %cst_64 = arith.constant dense<0.000000e+00> : vector<8xf32>
    %137 = vector.multi_reduction <add>, %136, %cst_64 [1] : vector<8x8xf32> to vector<8xf32>
    %138 = vector.shape_cast %137 : vector<8xf32> to vector<8x1xf32>
    %139 = tpu.reciprocal %138 {approx = true} : vector<8x1xf32> -> vector<8x1xf32>
    %140 = vector.broadcast %139 : vector<8x1xf32> to vector<8x8xf32>
    %141 = arith.mulf %136, %140 : vector<8x8xf32>
    %142 = arith.truncf %141 : vector<8x8xf32> to vector<8x8xbf16>
    %cst_65 = arith.constant dense<0.000000e+00> : vector<8x8xf32>
    %143 = tpu.matmul %142, %130, %cst_65 {dimension_numbers = #tpu.dot_dimension_numbers<[1], [0], [0], [1], [0, 0, 1, 1], [], []>} : vector<8x8xbf16>, vector<8x8xbf16>, vector<8x8xf32> -> vector<8x8xf32>
    %144 = vector.extract_strided_slice %126 {offsets = [0, 8], sizes = [8, 8], strides = [1, 1]} : vector<8x32xbf16> to vector<8x8xbf16>
    %145 = vector.extract_strided_slice %127 {offsets = [0, 8], sizes = [8, 8], strides = [1, 1]} : vector<8x64xbf16> to vector<8x8xbf16>
    %146 = vector.extract_strided_slice %127 {offsets = [0, 40], sizes = [8, 8], strides = [1, 1]} : vector<8x64xbf16> to vector<8x8xbf16>
    %cst_66 = arith.constant dense<0.000000e+00> : vector<8x8xf32>
    %147 = tpu.matmul %144, %145, %cst_66 {dimension_numbers = #tpu.dot_dimension_numbers<[1], [1], [0], [0], [0, 0, 1, 0], [], []>} : vector<8x8xbf16>, vector<8x8xbf16>, vector<8x8xf32> -> vector<8x8xf32>
    %cst_67 = arith.constant dense<0xFF800000> : vector<8xf32>
    %148 = vector.multi_reduction <maximumf>, %147, %cst_67 [1] : vector<8x8xf32> to vector<8xf32>
    %149 = vector.shape_cast %148 : vector<8xf32> to vector<8x1xf32>
    %150 = vector.broadcast %149 : vector<8x1xf32> to vector<8x8xf32>
    %151 = arith.subf %147, %150 : vector<8x8xf32>
    %152 = math.exp %151 : vector<8x8xf32>
    %cst_68 = arith.constant dense<0.000000e+00> : vector<8xf32>
    %153 = vector.multi_reduction <add>, %152, %cst_68 [1] : vector<8x8xf32> to vector<8xf32>
    %154 = vector.shape_cast %153 : vector<8xf32> to vector<8x1xf32>
    %155 = tpu.reciprocal %154 {approx = true} : vector<8x1xf32> -> vector<8x1xf32>
    %156 = vector.broadcast %155 : vector<8x1xf32> to vector<8x8xf32>
    %157 = arith.mulf %152, %156 : vector<8x8xf32>
    %158 = arith.truncf %157 : vector<8x8xf32> to vector<8x8xbf16>
    %cst_69 = arith.constant dense<0.000000e+00> : vector<8x8xf32>
    %159 = tpu.matmul %158, %146, %cst_69 {dimension_numbers = #tpu.dot_dimension_numbers<[1], [0], [0], [1], [0, 0, 1, 1], [], []>} : vector<8x8xbf16>, vector<8x8xbf16>, vector<8x8xf32> -> vector<8x8xf32>
    %160 = vector.extract_strided_slice %126 {offsets = [0, 16], sizes = [8, 8], strides = [1, 1]} : vector<8x32xbf16> to vector<8x8xbf16>
    %161 = vector.extract_strided_slice %127 {offsets = [0, 16], sizes = [8, 8], strides = [1, 1]} : vector<8x64xbf16> to vector<8x8xbf16>
    %162 = vector.extract_strided_slice %127 {offsets = [0, 48], sizes = [8, 8], strides = [1, 1]} : vector<8x64xbf16> to vector<8x8xbf16>
    %cst_70 = arith.constant dense<0.000000e+00> : vector<8x8xf32>
    %163 = tpu.matmul %160, %161, %cst_70 {dimension_numbers = #tpu.dot_dimension_numbers<[1], [1], [0], [0], [0, 0, 1, 0], [], []>} : vector<8x8xbf16>, vector<8x8xbf16>, vector<8x8xf32> -> vector<8x8xf32>
    %cst_71 = arith.constant dense<0xFF800000> : vector<8xf32>
    %164 = vector.multi_reduction <maximumf>, %163, %cst_71 [1] : vector<8x8xf32> to vector<8xf32>
    %165 = vector.shape_cast %164 : vector<8xf32> to vector<8x1xf32>
    %166 = vector.broadcast %165 : vector<8x1xf32> to vector<8x8xf32>
    %167 = arith.subf %163, %166 : vector<8x8xf32>
    %168 = math.exp %167 : vector<8x8xf32>
    %cst_72 = arith.constant dense<0.000000e+00> : vector<8xf32>
    %169 = vector.multi_reduction <add>, %168, %cst_72 [1] : vector<8x8xf32> to vector<8xf32>
    %170 = vector.shape_cast %169 : vector<8xf32> to vector<8x1xf32>
    %171 = tpu.reciprocal %170 {approx = true} : vector<8x1xf32> -> vector<8x1xf32>
    %172 = vector.broadcast %171 : vector<8x1xf32> to vector<8x8xf32>
    %173 = arith.mulf %168, %172 : vector<8x8xf32>
    %174 = arith.truncf %173 : vector<8x8xf32> to vector<8x8xbf16>
    %cst_73 = arith.constant dense<0.000000e+00> : vector<8x8xf32>
    %175 = tpu.matmul %174, %162, %cst_73 {dimension_numbers = #tpu.dot_dimension_numbers<[1], [0], [0], [1], [0, 0, 1, 1], [], []>} : vector<8x8xbf16>, vector<8x8xbf16>, vector<8x8xf32> -> vector<8x8xf32>
    %176 = vector.extract_strided_slice %126 {offsets = [0, 24], sizes = [8, 8], strides = [1, 1]} : vector<8x32xbf16> to vector<8x8xbf16>
    %177 = vector.extract_strided_slice %127 {offsets = [0, 24], sizes = [8, 8], strides = [1, 1]} : vector<8x64xbf16> to vector<8x8xbf16>
    %178 = vector.extract_strided_slice %127 {offsets = [0, 56], sizes = [8, 8], strides = [1, 1]} : vector<8x64xbf16> to vector<8x8xbf16>
    %cst_74 = arith.constant dense<0.000000e+00> : vector<8x8xf32>
    %179 = tpu.matmul %176, %177, %cst_74 {dimension_numbers = #tpu.dot_dimension_numbers<[1], [1], [0], [0], [0, 0, 1, 0], [], []>} : vector<8x8xbf16>, vector<8x8xbf16>, vector<8x8xf32> -> vector<8x8xf32>
    %cst_75 = arith.constant dense<0xFF800000> : vector<8xf32>
    %180 = vector.multi_reduction <maximumf>, %179, %cst_75 [1] : vector<8x8xf32> to vector<8xf32>
    %181 = vector.shape_cast %180 : vector<8xf32> to vector<8x1xf32>
    %182 = vector.broadcast %181 : vector<8x1xf32> to vector<8x8xf32>
    %183 = arith.subf %179, %182 : vector<8x8xf32>
    %184 = math.exp %183 : vector<8x8xf32>
    %cst_76 = arith.constant dense<0.000000e+00> : vector<8xf32>
    %185 = vector.multi_reduction <add>, %184, %cst_76 [1] : vector<8x8xf32> to vector<8xf32>
    %186 = vector.shape_cast %185 : vector<8xf32> to vector<8x1xf32>
    %187 = tpu.reciprocal %186 {approx = true} : vector<8x1xf32> -> vector<8x1xf32>
    %188 = vector.broadcast %187 : vector<8x1xf32> to vector<8x8xf32>
    %189 = arith.mulf %184, %188 : vector<8x8xf32>
    %190 = arith.truncf %189 : vector<8x8xf32> to vector<8x8xbf16>
    %cst_77 = arith.constant dense<0.000000e+00> : vector<8x8xf32>
    %191 = tpu.matmul %190, %178, %cst_77 {dimension_numbers = #tpu.dot_dimension_numbers<[1], [0], [0], [1], [0, 0, 1, 1], [], []>} : vector<8x8xbf16>, vector<8x8xbf16>, vector<8x8xf32> -> vector<8x8xf32>
    %192 = tpu.concatenate %143, %159, %175, %191 in 1 : vector<8x8xf32>, vector<8x8xf32>, vector<8x8xf32>, vector<8x8xf32> -> vector<8x32xf32>
    %193 = arith.truncf %192 : vector<8x32xf32> to vector<8x32xbf16>
    %cst_78 = arith.constant dense<0.000000e+00> : vector<8x32xf32>
    %194 = tpu.matmul %193, %116, %cst_78 {dimension_numbers = #tpu.dot_dimension_numbers<[1], [0], [0], [1], [0, 0, 1, 1], [], []>} : vector<8x32xbf16>, vector<32x32xbf16>, vector<8x32xf32> -> vector<8x32xf32>
    %195 = vector.broadcast %117 : vector<1x32xf32> to vector<8x32xf32>
    %196 = arith.addf %194, %195 : vector<8x32xf32>
    %197 = arith.addf %110, %196 : vector<8x32xf32>
    %cst_79 = arith.constant dense<0.000000e+00> : vector<8xf32>
    %198 = vector.multi_reduction <add>, %197, %cst_79 [1] : vector<8x32xf32> to vector<8xf32>
    %199 = vector.shape_cast %198 : vector<8xf32> to vector<8x1xf32>
    %cst_80 = arith.constant 3.200000e+01 : f32
    %200 = vector.broadcast %cst_80 : f32 to vector<8x1xf32>
    %201 = arith.divf %199, %200 : vector<8x1xf32>
    %202 = vector.broadcast %201 : vector<8x1xf32> to vector<8x32xf32>
    %203 = arith.subf %197, %202 : vector<8x32xf32>
    %204 = arith.mulf %203, %203 : vector<8x32xf32>
    %cst_81 = arith.constant dense<0.000000e+00> : vector<8xf32>
    %205 = vector.multi_reduction <add>, %204, %cst_81 [1] : vector<8x32xf32> to vector<8xf32>
    %206 = vector.shape_cast %205 : vector<8xf32> to vector<8x1xf32>
    %cst_82 = arith.constant 3.200000e+01 : f32
    %207 = vector.broadcast %cst_82 : f32 to vector<8x1xf32>
    %208 = arith.divf %206, %207 : vector<8x1xf32>
    %cst_83 = arith.constant 9.99999974E-6 : f32
    %209 = vector.broadcast %cst_83 : f32 to vector<8x1xf32>
    %210 = arith.addf %208, %209 : vector<8x1xf32>
    %211 = math.rsqrt %210 : vector<8x1xf32>
    %212 = vector.broadcast %211 : vector<8x1xf32> to vector<8x32xf32>
    %213 = arith.mulf %203, %212 : vector<8x32xf32>
    %214 = vector.broadcast %118 : vector<1x32xf32> to vector<8x32xf32>
    %215 = arith.mulf %213, %214 : vector<8x32xf32>
    %216 = vector.broadcast %119 : vector<1x32xf32> to vector<8x32xf32>
    %217 = arith.addf %215, %216 : vector<8x32xf32>
    %218 = arith.truncf %217 : vector<8x32xf32> to vector<8x32xbf16>
    %c0_84 = arith.constant 0 : index
    %c0_85 = arith.constant 0 : index
    %219 = vector.load %arg19[%c0_84, %c0_85] : memref<32x128xbf16, #tpu.memory_space<vmem>>, vector<32x128xbf16>
    %cst_86 = arith.constant dense<0.000000e+00> : vector<8x128xf32>
    %220 = tpu.matmul %218, %219, %cst_86 {dimension_numbers = #tpu.dot_dimension_numbers<[1], [0], [0], [1], [0, 0, 1, 1], [], []>} : vector<8x32xbf16>, vector<32x128xbf16>, vector<8x128xf32> -> vector<8x128xf32>
    %c0_87 = arith.constant 0 : index
    %c0_88 = arith.constant 0 : index
    %221 = vector.load %arg20[%c0_87, %c0_88] : memref<1x128xf32, #tpu.memory_space<vmem>>, vector<1x128xf32>
    %222 = vector.broadcast %221 : vector<1x128xf32> to vector<8x128xf32>
    %223 = arith.addf %220, %222 : vector<8x128xf32>
    %cst_89 = arith.constant 0.000000e+00 : f32
    %224 = vector.broadcast %cst_89 : f32 to vector<8x128xf32>
    %225 = arith.maximumf %223, %224 : vector<8x128xf32>
    %226 = arith.truncf %225 : vector<8x128xf32> to vector<8x128xbf16>
    %c0_90 = arith.constant 0 : index
    %c0_91 = arith.constant 0 : index
    %227 = vector.load %arg21[%c0_90, %c0_91] : memref<128x32xbf16, #tpu.memory_space<vmem>>, vector<128x32xbf16>
    %cst_92 = arith.constant dense<0.000000e+00> : vector<8x32xf32>
    %228 = tpu.matmul %226, %227, %cst_92 {dimension_numbers = #tpu.dot_dimension_numbers<[1], [0], [0], [1], [0, 0, 1, 1], [], []>} : vector<8x128xbf16>, vector<128x32xbf16>, vector<8x32xf32> -> vector<8x32xf32>
    %c0_93 = arith.constant 0 : index
    %c0_94 = arith.constant 0 : index
    %229 = vector.load %arg22[%c0_93, %c0_94] : memref<1x32xf32, #tpu.memory_space<vmem>>, vector<1x32xf32>
    %230 = vector.broadcast %229 : vector<1x32xf32> to vector<8x32xf32>
    %231 = arith.addf %228, %230 : vector<8x32xf32>
    %232 = arith.addf %217, %231 : vector<8x32xf32>
    %c0_95 = arith.constant 0 : index
    %c0_96 = arith.constant 0 : index
    %233 = vector.load %arg23[%c0_95, %c0_96] : memref<1x32xf32, #tpu.memory_space<vmem>>, vector<1x32xf32>
    %c0_97 = arith.constant 0 : index
    %c0_98 = arith.constant 0 : index
    %234 = vector.load %arg24[%c0_97, %c0_98] : memref<1x32xf32, #tpu.memory_space<vmem>>, vector<1x32xf32>
    %cst_99 = arith.constant dense<0.000000e+00> : vector<8xf32>
    %235 = vector.multi_reduction <add>, %232, %cst_99 [1] : vector<8x32xf32> to vector<8xf32>
    %236 = vector.shape_cast %235 : vector<8xf32> to vector<8x1xf32>
    %cst_100 = arith.constant 3.200000e+01 : f32
    %237 = vector.broadcast %cst_100 : f32 to vector<8x1xf32>
    %238 = arith.divf %236, %237 : vector<8x1xf32>
    %239 = vector.broadcast %238 : vector<8x1xf32> to vector<8x32xf32>
    %240 = arith.subf %232, %239 : vector<8x32xf32>
    %241 = arith.mulf %240, %240 : vector<8x32xf32>
    %cst_101 = arith.constant dense<0.000000e+00> : vector<8xf32>
    %242 = vector.multi_reduction <add>, %241, %cst_101 [1] : vector<8x32xf32> to vector<8xf32>
    %243 = vector.shape_cast %242 : vector<8xf32> to vector<8x1xf32>
    %cst_102 = arith.constant 3.200000e+01 : f32
    %244 = vector.broadcast %cst_102 : f32 to vector<8x1xf32>
    %245 = arith.divf %243, %244 : vector<8x1xf32>
    %cst_103 = arith.constant 9.99999974E-6 : f32
    %246 = vector.broadcast %cst_103 : f32 to vector<8x1xf32>
    %247 = arith.addf %245, %246 : vector<8x1xf32>
    %248 = math.rsqrt %247 : vector<8x1xf32>
    %249 = vector.broadcast %248 : vector<8x1xf32> to vector<8x32xf32>
    %250 = arith.mulf %240, %249 : vector<8x32xf32>
    %251 = vector.broadcast %233 : vector<1x32xf32> to vector<8x32xf32>
    %252 = arith.mulf %250, %251 : vector<8x32xf32>
    %253 = vector.broadcast %234 : vector<1x32xf32> to vector<8x32xf32>
    %254 = arith.addf %252, %253 : vector<8x32xf32>
    %255 = arith.truncf %254 : vector<8x32xf32> to vector<8x32xbf16>
    %c0_104 = arith.constant 0 : index
    %c0_105 = arith.constant 0 : index
    %c0_106 = arith.constant 0 : index
    %256 = vector.load %arg25[%c0_104, %c0_105, %c0_106] : memref<1x8x32xbf16, #tpu.memory_space<vmem>>, vector<1x8x32xbf16>
    %257 = vector.shape_cast %256 : vector<1x8x32xbf16> to vector<8x32xbf16>
    %258 = vector.shape_cast %255 : vector<8x32xbf16> to vector<1x8x32xbf16>
    tpu.vector_store %arg25[%c0_104, %c0_105, %c0_106], %258 {strides = array<i32>} : memref<1x8x32xbf16, #tpu.memory_space<vmem>>, vector<1x8x32xbf16>,
    return
  }
  func.func @transform_0(%arg0: i32) -> (i32, i32, i32) {
    %c0_i32 = arith.constant 0 : i32
    %c0_i32_0 = arith.constant 0 : i32
    %c0_i32_1 = arith.constant 0 : i32
    return %arg0, %c0_i32, %c0_i32_0 : i32, i32, i32
  }
  func.func @transform_1(%arg0: i32) -> (i32, i32, i32) {
    %c0_i32 = arith.constant 0 : i32
    %c0_i32_0 = arith.constant 0 : i32
    %c0_i32_1 = arith.constant 0 : i32
    return %arg0, %c0_i32, %c0_i32_0 : i32, i32, i32
  }
  func.func @transform_2(%arg0: i32) -> (i32, i32) {
    %c0_i32 = arith.constant 0 : i32
    %c0_i32_0 = arith.constant 0 : i32
    %c0_i32_1 = arith.constant 0 : i32
    return %c0_i32, %c0_i32_0 : i32, i32
  }
  func.func @transform_3(%arg0: i32) -> (i32, i32) {
    %c0_i32 = arith.constant 0 : i32
    %c0_i32_0 = arith.constant 0 : i32
    %c0_i32_1 = arith.constant 0 : i32
    return %c0_i32, %c0_i32_0 : i32, i32
  }
  func.func @transform_4(%arg0: i32) -> (i32, i32) {
    %c0_i32 = arith.constant 0 : i32
    %c0_i32_0 = arith.constant 0 : i32
    %c0_i32_1 = arith.constant 0 : i32
    return %c0_i32, %c0_i32_0 : i32, i32
  }
  func.func @transform_5(%arg0: i32) -> (i32, i32) {
    %c0_i32 = arith.constant 0 : i32
    %c0_i32_0 = arith.constant 0 : i32
    %c0_i32_1 = arith.constant 0 : i32
    return %c0_i32, %c0_i32_0 : i32, i32
  }
  func.func @transform_6(%arg0: i32) -> (i32, i32) {
    %c0_i32 = arith.constant 0 : i32
    %c0_i32_0 = arith.constant 0 : i32
    %c0_i32_1 = arith.constant 0 : i32
    return %c0_i32, %c0_i32_0 : i32, i32
  }
  func.func @transform_7(%arg0: i32) -> (i32, i32) {
    %c0_i32 = arith.constant 0 : i32
    %c0_i32_0 = arith.constant 0 : i32
    %c0_i32_1 = arith.constant 0 : i32
    return %c0_i32, %c0_i32_0 : i32, i32
  }
  func.func @transform_8(%arg0: i32) -> (i32, i32) {
    %c0_i32 = arith.constant 0 : i32
    %c0_i32_0 = arith.constant 0 : i32
    %c0_i32_1 = arith.constant 0 : i32
    return %c0_i32, %c0_i32_0 : i32, i32
  }
  func.func @transform_9(%arg0: i32) -> (i32, i32) {
    %c0_i32 = arith.constant 0 : i32
    %c0_i32_0 = arith.constant 0 : i32
    %c0_i32_1 = arith.constant 0 : i32
    return %c0_i32, %c0_i32_0 : i32, i32
  }
  func.func @transform_10(%arg0: i32) -> (i32, i32) {
    %c0_i32 = arith.constant 0 : i32
    %c0_i32_0 = arith.constant 0 : i32
    %c0_i32_1 = arith.constant 0 : i32
    return %c0_i32, %c0_i32_0 : i32, i32
  }
  func.func @transform_11(%arg0: i32) -> (i32, i32) {
    %c0_i32 = arith.constant 0 : i32
    %c0_i32_0 = arith.constant 0 : i32
    %c0_i32_1 = arith.constant 0 : i32
    return %c0_i32, %c0_i32_0 : i32, i32
  }
  func.func @transform_12(%arg0: i32) -> (i32, i32) {
    %c0_i32 = arith.constant 0 : i32
    %c0_i32_0 = arith.constant 0 : i32
    %c0_i32_1 = arith.constant 0 : i32
    return %c0_i32, %c0_i32_0 : i32, i32
  }
  func.func @transform_13(%arg0: i32) -> (i32, i32) {
    %c0_i32 = arith.constant 0 : i32
    %c0_i32_0 = arith.constant 0 : i32
    %c0_i32_1 = arith.constant 0 : i32
    return %c0_i32, %c0_i32_0 : i32, i32
  }
  func.func @transform_14(%arg0: i32) -> (i32, i32) {
    %c0_i32 = arith.constant 0 : i32
    %c0_i32_0 = arith.constant 0 : i32
    %c0_i32_1 = arith.constant 0 : i32
    return %c0_i32, %c0_i32_0 : i32, i32
  }
  func.func @transform_15(%arg0: i32) -> (i32, i32) {
    %c0_i32 = arith.constant 0 : i32
    %c0_i32_0 = arith.constant 0 : i32
    %c0_i32_1 = arith.constant 0 : i32
    return %c0_i32, %c0_i32_0 : i32, i32
  }
  func.func @transform_16(%arg0: i32) -> (i32, i32) {
    %c0_i32 = arith.constant 0 : i32
    %c0_i32_0 = arith.constant 0 : i32
    %c0_i32_1 = arith.constant 0 : i32
    return %c0_i32, %c0_i32_0 : i32, i32
  }
  func.func @transform_17(%arg0: i32) -> (i32, i32) {
    %c0_i32 = arith.constant 0 : i32
    %c0_i32_0 = arith.constant 0 : i32
    %c0_i32_1 = arith.constant 0 : i32
    return %c0_i32, %c0_i32_0 : i32, i32
  }
  func.func @transform_18(%arg0: i32) -> (i32, i32) {
    %c0_i32 = arith.constant 0 : i32
    %c0_i32_0 = arith.constant 0 : i32
    %c0_i32_1 = arith.constant 0 : i32
    return %c0_i32, %c0_i32_0 : i32, i32
  }
  func.func @transform_19(%arg0: i32) -> (i32, i32) {
    %c0_i32 = arith.constant 0 : i32
    %c0_i32_0 = arith.constant 0 : i32
    %c0_i32_1 = arith.constant 0 : i32
    return %c0_i32, %c0_i32_0 : i32, i32
  }
  func.func @transform_20(%arg0: i32) -> (i32, i32) {
    %c0_i32 = arith.constant 0 : i32
    %c0_i32_0 = arith.constant 0 : i32
    %c0_i32_1 = arith.constant 0 : i32
    return %c0_i32, %c0_i32_0 : i32, i32
  }
  func.func @transform_21(%arg0: i32) -> (i32, i32) {
    %c0_i32 = arith.constant 0 : i32
    %c0_i32_0 = arith.constant 0 : i32
    %c0_i32_1 = arith.constant 0 : i32
    return %c0_i32, %c0_i32_0 : i32, i32
  }
  func.func @transform_22(%arg0: i32) -> (i32, i32) {
    %c0_i32 = arith.constant 0 : i32
    %c0_i32_0 = arith.constant 0 : i32
    %c0_i32_1 = arith.constant 0 : i32
    return %c0_i32, %c0_i32_0 : i32, i32
  }
  func.func @transform_23(%arg0: i32) -> (i32, i32) {
    %c0_i32 = arith.constant 0 : i32
    %c0_i32_0 = arith.constant 0 : i32
    %c0_i32_1 = arith.constant 0 : i32
    return %c0_i32, %c0_i32_0 : i32, i32
  }
  func.func @transform_24(%arg0: i32) -> (i32, i32, i32) {
    %c0_i32 = arith.constant 0 : i32
    %c0_i32_0 = arith.constant 0 : i32
    %c0_i32_1 = arith.constant 0 : i32
    return %arg0, %c0_i32, %c0_i32_0 : i32, i32, i32
  }
}

</mosaic_0001>

<llo_original>
// kernel: transformer_decoder.2
$region0: #{transformer_decoder.2}
  #allocation0 [shape = 'u32[]', space=smem, size = 0x4, offset = 0x4, fixed_abs, tag = 'smem constant byte address 0x4 - core index']
  #allocation1 [shape = 'u32[144,128]{1,0:T(1,128)}', space=vmem, size = 0x12000, scoped, tag = 'internal scratch']
  %s0 = inlined_call_operand.hbm [shape: bf16[2,8,32], index: 0, kind: input, shape index: {}]
  %s1 = inlined_call_operand.vmem [shape: bf16[2,8,32], index: 1, kind: input, shape index: {}]
  %s2 = inlined_call_operand.vmem [shape: bf16[32,32], index: 2, kind: input, shape index: {}]
  %s3 = inlined_call_operand.vmem [shape: f32[1,32], index: 3, kind: input, shape index: {}]
  %s4 = inlined_call_operand.vmem [shape: bf16[32,64], index: 4, kind: input, shape index: {}]
  %s5 = inlined_call_operand.vmem [shape: f32[1,64], index: 5, kind: input, shape index: {}]
  %s6 = inlined_call_operand.vmem [shape: bf16[32,32], index: 6, kind: input, shape index: {}]
  %s7 = inlined_call_operand.vmem [shape: f32[1,32], index: 7, kind: input, shape index: {}]
  %s8 = inlined_call_operand.hbm [shape: f32[1,32], index: 8, kind: input, shape index: {}]
  %s9 = inlined_call_operand.hbm [shape: f32[1,32], index: 9, kind: input, shape index: {}]
  %s10 = inlined_call_operand.vmem [shape: bf16[32,32], index: 10, kind: input, shape index: {}]
  %s11 = inlined_call_operand.hbm [shape: f32[1,32], index: 11, kind: input, shape index: {}]
  %s12 = inlined_call_operand.vmem [shape: bf16[32,64], index: 12, kind: input, shape index: {}]
  %s13 = inlined_call_operand.hbm [shape: f32[1,64], index: 13, kind: input, shape index: {}]
  %s14 = inlined_call_operand.hbm [shape: bf16[32,32], index: 14, kind: input, shape index: {}]
  %s15 = inlined_call_operand.hbm [shape: f32[1,32], index: 15, kind: input, shape index: {}]
  %s16 = inlined_call_operand.vmem [shape: f32[1,32], index: 16, kind: input, shape index: {}]
  %s17 = inlined_call_operand.hbm [shape: f32[1,32], index: 17, kind: input, shape index: {}]
  %s18 = inlined_call_operand.vmem [shape: bf16[32,128], index: 18, kind: input, shape index: {}]
  %s19 = inlined_call_operand.hbm [shape: f32[1,128], index: 19, kind: input, shape index: {}]
  %s20 = inlined_call_operand.vmem [shape: bf16[128,32], index: 20, kind: input, shape index: {}]
  %s21 = inlined_call_operand.hbm [shape: f32[1,32], index: 21, kind: input, shape index: {}]
  %s22 = inlined_call_operand.vmem [shape: f32[1,32], index: 22, kind: input, shape index: {}]
  %s23 = inlined_call_operand.vmem [shape: f32[1,32], index: 23, kind: input, shape index: {}]
  %s24 = inlined_call_operand.vmem [shape: bf16[2,8,32], index: 24, kind: output, shape index: {}]
  %s25 = sld [smem:[#allocation0]]
  $region169: #{transformer_decoder.2} parent=0
    _
  %s27 = ssub.s32 1, %s25
  %s28 = scalar_select 0, %s27, %s25
  $region1: #{transformer_decoder.2} parent=0
    #allocation2 [shape = 'u8[4096]{0}', space=vmem, size = 0x1000, scoped, tag = 'input window, operand 0']
    #allocation3 [shape = 's32[2]{0}', space=sflag, size = 0x8, scoped, tag = 'scoped memory for transformer_decoder.2']
    #allocation4 [shape = 'u8[512]{0}', space=vmem, size = 0x400, scoped, tag = 'input window, operand 8, single buffered']
    #allocation5 [shape = 's32[1]{0}', space=sflag, size = 0x4, scoped, tag = 'scoped memory for transformer_decoder.2']
    #allocation6 [shape = 'u8[512]{0}', space=vmem, size = 0x400, scoped, tag = 'input window, operand 9, single buffered']
    #allocation7 [shape = 'u8[512]{0}', space=vmem, size = 0x400, scoped, tag = 'input window, operand 11, single buffered']
    #allocation8 [shape = 's32[1]{0}', space=sflag, size = 0x4, scoped, tag = 'scoped memory for transformer_decoder.2']
    #allocation9 [shape = 'u8[512]{0}', space=vmem, size = 0x400, scoped, tag = 'input window, operand 13, single buffered']
    #allocation10 [shape = 'u8[8192]{0}', space=vmem, size = 0x2000, scoped, tag = 'input window, operand 14, single buffered']
    #allocation11 [shape = 's32[1]{0}', space=sflag, size = 0x4, scoped, tag = 'scoped memory for transformer_decoder.2']
    #allocation12 [shape = 'u8[512]{0}', space=vmem, size = 0x400, scoped, tag = 'input window, operand 15, single buffered']
    #allocation13 [shape = 'u8[512]{0}', space=vmem, size = 0x400, scoped, tag = 'input window, operand 17, single buffered']
    #allocation14 [shape = 's32[1]{0}', space=sflag, size = 0x4, scoped, tag = 'scoped memory for transformer_decoder.2']
    #allocation15 [shape = 'u8[512]{0}', space=vmem, size = 0x400, scoped, tag = 'input window, operand 19, single buffered']
    #allocation16 [shape = 'u8[512]{0}', space=vmem, size = 0x400, scoped, tag = 'input window, operand 21, single buffered']
    #allocation17 [shape = 's32[1]{0}', space=sflag, size = 0x4, scoped, tag = 'scoped memory for transformer_decoder.2']
    %29 = vsyncpa [#allocation3], 0
    %s30 = scalar_lea.sflag [#allocation3], 1
    %31 = vsyncpa %s30, 0
    %32 = vsyncpa [#allocation5], 0
    %33 = vsyncpa [#allocation8], 0
    %34 = vsyncpa [#allocation11], 0
    %35 = vsyncpa [#allocation14], 0
    %36 = vsyncpa [#allocation17], 0
    loop: start=0, step=1, limit=4
    $region2: #{transformer_decoder.2} parent=1 // loop_pre_header
      _
    $region3: #{transformer_decoder.2} parent=1 // loop_header
      %s38 = sphi 0, %s42
      %p39 = scmp.ge.s32.totalorder %s38, 4
      %s48 = sphi 0, %s50
      %s51 = sphi 0, %s48
      %s52 = sphi 0, %s51
      %s68 = sphi 0, %s52
      %s74 = sphi 0, %s76
      %s77 = sphi 0, %s74
      %s78 = sphi 0, %s77
      %s94 = sphi 0, %s78
      %s98 = sphi 0, %s98
      %s100 = sphi 0, %s98
      %s101 = sphi 0, %s100
      %s115 = sphi 0, %s101
      %s119 = sphi 0, %s119
      %s121 = sphi 0, %s119
      %s122 = sphi 0, %s121
      %s136 = sphi 0, %s122
      %s140 = sphi 0, %s140
      %s142 = sphi 0, %s140
      %s143 = sphi 0, %s142
      %s157 = sphi 0, %s143
      %s161 = sphi 0, %s161
      %s163 = sphi 0, %s161
      %s164 = sphi 0, %s163
      %s178 = sphi 0, %s164
      %s182 = sphi 0, %s182
      %s184 = sphi 0, %s182
      %s185 = sphi 0, %s184
      %s199 = sphi 0, %s185
      %s203 = sphi 0, %s203
      %s205 = sphi 0, %s203
      %s206 = sphi 0, %s205
      %s220 = sphi 0, %s206
      %s224 = sphi 0, %s224
      %s226 = sphi 0, %s224
      %s227 = sphi 0, %s226
      %s241 = sphi 0, %s227
      %s245 = sphi 0, %s245
      %s247 = sphi 0, %s245
      %s248 = sphi 0, %s247
      %s262 = sphi 0, %s248
      %s266 = sphi 0, %s266
      %s268 = sphi 0, %s266
      %s269 = sphi 0, %s268
      %s283 = sphi 0, %s269
      %s287 = sphi 0, %s287
      %s289 = sphi 0, %s287
      %s290 = sphi 0, %s289
      %s304 = sphi 0, %s290
      %s308 = sphi 0, %s308
      %s310 = sphi 0, %s308
      %s311 = sphi 0, %s310
      %s325 = sphi 0, %s311
      %s329 = sphi 0, %s329
      %s331 = sphi 0, %s329
      %s332 = sphi 0, %s331
      %s346 = sphi 0, %s332
      %s350 = sphi 0, %s350
      %s352 = sphi 0, %s350
      %s353 = sphi 0, %s352
      %s367 = sphi 0, %s353
      %s371 = sphi 0, %s371
      %s373 = sphi 0, %s371
      %s374 = sphi 0, %s373
      %s388 = sphi 0, %s374
      %s392 = sphi 0, %s392
      %s394 = sphi 0, %s392
      %s395 = sphi 0, %s394
      %s409 = sphi 0, %s395
      %s413 = sphi 0, %s413
      %s415 = sphi 0, %s413
      %s416 = sphi 0, %s415
      %s430 = sphi 0, %s416
      %s434 = sphi 0, %s434
      %s436 = sphi 0, %s434
      %s437 = sphi 0, %s436
      %s451 = sphi 0, %s437
      %s455 = sphi 0, %s455
      %s457 = sphi 0, %s455
      %s458 = sphi 0, %s457
      %s472 = sphi 0, %s458
      %s476 = sphi 0, %s476
      %s478 = sphi 0, %s476
      %s479 = sphi 0, %s478
      %s493 = sphi 0, %s479
      %s497 = sphi 0, %s497
      %s499 = sphi 0, %s497
      %s500 = sphi 0, %s499
      %s514 = sphi 0, %s500
      %s518 = sphi 0, %s518
      %s520 = sphi 0, %s518
      %s521 = sphi 0, %s520
      %s535 = sphi 0, %s521
      %s539 = sphi 0, %s539
      %s541 = sphi 0, %s539
      %s542 = sphi 0, %s541
      %s556 = sphi 0, %s542
      %s562 = sphi 0, %s564
      %s565 = sphi 0, %s562
      %s566 = sphi 0, %s565
      %s582 = sphi 0, %s566
    $region4: #{transformer_decoder.2} parent=1 // loop_header_branch
      %41 = sbr.rel (%p39) target = $region8
    $region5: #{transformer_decoder.2} parent=1 // loop_body
      %s43 = ssub.s32 %s38, 1
      %s44 = ssub.s32 %s38, 2
      %s45 = sadd.s32 %s38, 1
      %s46 = ssub.s32 %s38, %s45
      %p47 = scmp.eq.s32.totalorder %s46, 0
      %s49 = sadd.s32 %s48, 1
      %s50 = scalar_select %p47, %s48, %s49
      %p53 = pneg %p47
      %p54 = scmp.eq.s32.totalorder %s38, 1
      %p55 = por %p53, %p54
      %p56 = scmp.ne.s32.totalorder %s48, %s51
      %p57 = scmp.eq.s32.totalorder %s38, 0
      %p58 = por %p56, %p57
      %p59 = scmp.ne.s32.totalorder %s48, %s51
      %p60 = scmp.eq.s32.totalorder %s43, 1
      %p61 = por %p59, %p60
      %p62 = scmp.ne.s32.totalorder %s51, %s52
      %p63 = scmp.eq.s32.totalorder %s43, 0
      %p64 = por %p62, %p63
      %p65 = scmp.ne.s32.totalorder %s51, %s52
      %p66 = scmp.eq.s32.totalorder %s44, 1
      %p67 = por %p65, %p66
      %p69 = scmp.ne.s32.totalorder %s52, %s68
      %p70 = scmp.eq.s32.totalorder %s44, 0
      %p71 = por %p69, %p70
      %s72 = ssub.s32 %s38, %s45
      %p73 = scmp.eq.s32.totalorder %s72, 0
      %s75 = sadd.s32 %s74, 1
      %s76 = scalar_select %p73, %s74, %s75
      %p79 = pneg %p73
      %p80 = scmp.eq.s32.totalorder %s38, 1
      %p81 = por %p79, %p80
      %p82 = scmp.ne.s32.totalorder %s74, %s77
      %p83 = scmp.eq.s32.totalorder %s38, 0
      %p84 = por %p82, %p83
      %p85 = scmp.ne.s32.totalorder %s74, %s77
      %p86 = scmp.eq.s32.totalorder %s43, 1
      %p87 = por %p85, %p86
      %p88 = scmp.ne.s32.totalorder %s77, %s78
      %p89 = scmp.eq.s32.totalorder %s43, 0
      %p90 = por %p88, %p89
      %p91 = scmp.ne.s32.totalorder %s77, %s78
      %p92 = scmp.eq.s32.totalorder %s44, 1
      %p93 = por %p91, %p92
      %p95 = scmp.ne.s32.totalorder %s78, %s94
      %p96 = scmp.eq.s32.totalorder %s44, 0
      %p97 = por %p95, %p96
      %s99 = sadd.s32 %s98, 1
      %p102 = scmp.eq.s32.totalorder %s38, 1
      %p103 = scmp.ne.s32.totalorder %s98, %s100
      %p104 = scmp.eq.s32.totalorder %s38, 0
      %p105 = por %p103, %p104
      %p106 = scmp.ne.s32.totalorder %s98, %s100
      %p107 = scmp.eq.s32.totalorder %s43, 1
      %p108 = por %p106, %p107
      %p109 = scmp.ne.s32.totalorder %s100, %s101
      %p110 = scmp.eq.s32.totalorder %s43, 0
      %p111 = por %p109, %p110
      %p112 = scmp.ne.s32.totalorder %s100, %s101
      %p113 = scmp.eq.s32.totalorder %s44, 1
      %p114 = por %p112, %p113
      %p116 = scmp.ne.s32.totalorder %s101, %s115
      %p117 = scmp.eq.s32.totalorder %s44, 0
      %p118 = por %p116, %p117
      %s120 = sadd.s32 %s119, 1
      %p123 = scmp.eq.s32.totalorder %s38, 1
      %p124 = scmp.ne.s32.totalorder %s119, %s121
      %p125 = scmp.eq.s32.totalorder %s38, 0
      %p126 = por %p124, %p125
      %p127 = scmp.ne.s32.totalorder %s119, %s121
      %p128 = scmp.eq.s32.totalorder %s43, 1
      %p129 = por %p127, %p128
      %p130 = scmp.ne.s32.totalorder %s121, %s122
      %p131 = scmp.eq.s32.totalorder %s43, 0
      %p132 = por %p130, %p131
      %p133 = scmp.ne.s32.totalorder %s121, %s122
      %p134 = scmp.eq.s32.totalorder %s44, 1
      %p135 = por %p133, %p134
      %p137 = scmp.ne.s32.totalorder %s122, %s136
      %p138 = scmp.eq.s32.totalorder %s44, 0
      %p139 = por %p137, %p138
      %s141 = sadd.s32 %s140, 1
      %p144 = scmp.eq.s32.totalorder %s38, 1
      %p145 = scmp.ne.s32.totalorder %s140, %s142
      %p146 = scmp.eq.s32.totalorder %s38, 0
      %p147 = por %p145, %p146
      %p148 = scmp.ne.s32.totalorder %s140, %s142
      %p149 = scmp.eq.s32.totalorder %s43, 1
      %p150 = por %p148, %p149
      %p151 = scmp.ne.s32.totalorder %s142, %s143
      %p152 = scmp.eq.s32.totalorder %s43, 0
      %p153 = por %p151, %p152
      %p154 = scmp.ne.s32.totalorder %s142, %s143
      %p155 = scmp.eq.s32.totalorder %s44, 1
      %p156 = por %p154, %p155
      %p158 = scmp.ne.s32.totalorder %s143, %s157
      %p159 = scmp.eq.s32.totalorder %s44, 0
      %p160 = por %p158, %p159
      %s162 = sadd.s32 %s161, 1
      %p165 = scmp.eq.s32.totalorder %s38, 1
      %p166 = scmp.ne.s32.totalorder %s161, %s163
      %p167 = scmp.eq.s32.totalorder %s38, 0
      %p168 = por %p166, %p167
      %p169 = scmp.ne.s32.totalorder %s161, %s163
      %p170 = scmp.eq.s32.totalorder %s43, 1
      %p171 = por %p169, %p170
      %p172 = scmp.ne.s32.totalorder %s163, %s164
      %p173 = scmp.eq.s32.totalorder %s43, 0
      %p174 = por %p172, %p173
      %p175 = scmp.ne.s32.totalorder %s163, %s164
      %p176 = scmp.eq.s32.totalorder %s44, 1
      %p177 = por %p175, %p176
      %p179 = scmp.ne.s32.totalorder %s164, %s178
      %p180 = scmp.eq.s32.totalorder %s44, 0
      %p181 = por %p179, %p180
      %s183 = sadd.s32 %s182, 1
      %p186 = scmp.eq.s32.totalorder %s38, 1
      %p187 = scmp.ne.s32.totalorder %s182, %s184
      %p188 = scmp.eq.s32.totalorder %s38, 0
      %p189 = por %p187, %p188
      %p190 = scmp.ne.s32.totalorder %s182, %s184
      %p191 = scmp.eq.s32.totalorder %s43, 1
      %p192 = por %p190, %p191
      %p193 = scmp.ne.s32.totalorder %s184, %s185
      %p194 = scmp.eq.s32.totalorder %s43, 0
      %p195 = por %p193, %p194
      %p196 = scmp.ne.s32.totalorder %s184, %s185
      %p197 = scmp.eq.s32.totalorder %s44, 1
      %p198 = por %p196, %p197
      %p200 = scmp.ne.s32.totalorder %s185, %s199
      %p201 = scmp.eq.s32.totalorder %s44, 0
      %p202 = por %p200, %p201
      %s204 = sadd.s32 %s203, 1
      %p207 = scmp.eq.s32.totalorder %s38, 1
      %p208 = scmp.ne.s32.totalorder %s203, %s205
      %p209 = scmp.eq.s32.totalorder %s38, 0
      %p210 = por %p208, %p209
      %p211 = scmp.ne.s32.totalorder %s203, %s205
      %p212 = scmp.eq.s32.totalorder %s43, 1
      %p213 = por %p211, %p212
      %p214 = scmp.ne.s32.totalorder %s205, %s206
      %p215 = scmp.eq.s32.totalorder %s43, 0
      %p216 = por %p214, %p215
      %p217 = scmp.ne.s32.totalorder %s205, %s206
      %p218 = scmp.eq.s32.totalorder %s44, 1
      %p219 = por %p217, %p218
      %p221 = scmp.ne.s32.totalorder %s206, %s220
      %p222 = scmp.eq.s32.totalorder %s44, 0
      %p223 = por %p221, %p222
      %s225 = sadd.s32 %s224, 1
      %p228 = scmp.eq.s32.totalorder %s38, 1
      %p229 = scmp.ne.s32.totalorder %s224, %s226
      %p230 = scmp.eq.s32.totalorder %s38, 0
      %p231 = por %p229, %p230
      %p232 = scmp.ne.s32.totalorder %s224, %s226
      %p233 = scmp.eq.s32.totalorder %s43, 1
      %p234 = por %p232, %p233
      %p235 = scmp.ne.s32.totalorder %s226, %s227
      %p236 = scmp.eq.s32.totalorder %s43, 0
      %p237 = por %p235, %p236
      %p238 = scmp.ne.s32.totalorder %s226, %s227
      %p239 = scmp.eq.s32.totalorder %s44, 1
      %p240 = por %p238, %p239
      %p242 = scmp.ne.s32.totalorder %s227, %s241
      %p243 = scmp.eq.s32.totalorder %s44, 0
      %p244 = por %p242, %p243
      %s246 = sadd.s32 %s245, 1
      %p249 = scmp.eq.s32.totalorder %s38, 1
      %p250 = scmp.ne.s32.totalorder %s245, %s247
      %p251 = scmp.eq.s32.totalorder %s38, 0
      %p252 = por %p250, %p251
      %p253 = scmp.ne.s32.totalorder %s245, %s247
      %p254 = scmp.eq.s32.totalorder %s43, 1
      %p255 = por %p253, %p254
      %p256 = scmp.ne.s32.totalorder %s247, %s248
      %p257 = scmp.eq.s32.totalorder %s43, 0
      %p258 = por %p256, %p257
      %p259 = scmp.ne.s32.totalorder %s247, %s248
      %p260 = scmp.eq.s32.totalorder %s44, 1
      %p261 = por %p259, %p260
      %p263 = scmp.ne.s32.totalorder %s248, %s262
      %p264 = scmp.eq.s32.totalorder %s44, 0
      %p265 = por %p263, %p264
      %s267 = sadd.s32 %s266, 1
      %p270 = scmp.eq.s32.totalorder %s38, 1
      %p271 = scmp.ne.s32.totalorder %s266, %s268
      %p272 = scmp.eq.s32.totalorder %s38, 0
      %p273 = por %p271, %p272
      %p274 = scmp.ne.s32.totalorder %s266, %s268
      %p275 = scmp.eq.s32.totalorder %s43, 1
      %p276 = por %p274, %p275
      %p277 = scmp.ne.s32.totalorder %s268, %s269
      %p278 = scmp.eq.s32.totalorder %s43, 0
      %p279 = por %p277, %p278
      %p280 = scmp.ne.s32.totalorder %s268, %s269
      %p281 = scmp.eq.s32.totalorder %s44, 1
      %p282 = por %p280, %p281
      %p284 = scmp.ne.s32.totalorder %s269, %s283
      %p285 = scmp.eq.s32.totalorder %s44, 0
      %p286 = por %p284, %p285
      %s288 = sadd.s32 %s287, 1
      %p291 = scmp.eq.s32.totalorder %s38, 1
      %p292 = scmp.ne.s32.totalorder %s287, %s289
      %p293 = scmp.eq.s32.totalorder %s38, 0
      %p294 = por %p292, %p293
      %p295 = scmp.ne.s32.totalorder %s287, %s289
      %p296 = scmp.eq.s32.totalorder %s43, 1
      %p297 = por %p295, %p296
      %p298 = scmp.ne.s32.totalorder %s289, %s290
      %p299 = scmp.eq.s32.totalorder %s43, 0
      %p300 = por %p298, %p299
      %p301 = scmp.ne.s32.totalorder %s289, %s290
      %p302 = scmp.eq.s32.totalorder %s44, 1
      %p303 = por %p301, %p302
      %p305 = scmp.ne.s32.totalorder %s290, %s304
      %p306 = scmp.eq.s32.totalorder %s44, 0
      %p307 = por %p305, %p306
      %s309 = sadd.s32 %s308, 1
      %p312 = scmp.eq.s32.totalorder %s38, 1
      %p313 = scmp.ne.s32.totalorder %s308, %s310
      %p314 = scmp.eq.s32.totalorder %s38, 0
      %p315 = por %p313, %p314
      %p316 = scmp.ne.s32.totalorder %s308, %s310
      %p317 = scmp.eq.s32.totalorder %s43, 1
      %p318 = por %p316, %p317
      %p319 = scmp.ne.s32.totalorder %s310, %s311
      %p320 = scmp.eq.s32.totalorder %s43, 0
      %p321 = por %p319, %p320
      %p322 = scmp.ne.s32.totalorder %s310, %s311
      %p323 = scmp.eq.s32.totalorder %s44, 1
      %p324 = por %p322, %p323
      %p326 = scmp.ne.s32.totalorder %s311, %s325
      %p327 = scmp.eq.s32.totalorder %s44, 0
      %p328 = por %p326, %p327
      %s330 = sadd.s32 %s329, 1
      %p333 = scmp.eq.s32.totalorder %s38, 1
      %p334 = scmp.ne.s32.totalorder %s329, %s331
      %p335 = scmp.eq.s32.totalorder %s38, 0
      %p336 = por %p334, %p335
      %p337 = scmp.ne.s32.totalorder %s329, %s331
      %p338 = scmp.eq.s32.totalorder %s43, 1
      %p339 = por %p337, %p338
      %p340 = scmp.ne.s32.totalorder %s331, %s332
      %p341 = scmp.eq.s32.totalorder %s43, 0
      %p342 = por %p340, %p341
      %p343 = scmp.ne.s32.totalorder %s331, %s332
      %p344 = scmp.eq.s32.totalorder %s44, 1
      %p345 = por %p343, %p344
      %p347 = scmp.ne.s32.totalorder %s332, %s346
      %p348 = scmp.eq.s32.totalorder %s44, 0
      %p349 = por %p347, %p348
      %s351 = sadd.s32 %s350, 1
      %p354 = scmp.eq.s32.totalorder %s38, 1
      %p355 = scmp.ne.s32.totalorder %s350, %s352
      %p356 = scmp.eq.s32.totalorder %s38, 0
      %p357 = por %p355, %p356
      %p358 = scmp.ne.s32.totalorder %s350, %s352
      %p359 = scmp.eq.s32.totalorder %s43, 1
      %p360 = por %p358, %p359
      %p361 = scmp.ne.s32.totalorder %s352, %s353
      %p362 = scmp.eq.s32.totalorder %s43, 0
      %p363 = por %p361, %p362
      %p364 = scmp.ne.s32.totalorder %s352, %s353
      %p365 = scmp.eq.s32.totalorder %s44, 1
      %p366 = por %p364, %p365
      %p368 = scmp.ne.s32.totalorder %s353, %s367
      %p369 = scmp.eq.s32.totalorder %s44, 0
      %p370 = por %p368, %p369
      %s372 = sadd.s32 %s371, 1
      %p375 = scmp.eq.s32.totalorder %s38, 1
      %p376 = scmp.ne.s32.totalorder %s371, %s373
      %p377 = scmp.eq.s32.totalorder %s38, 0
      %p378 = por %p376, %p377
      %p379 = scmp.ne.s32.totalorder %s371, %s373
      %p380 = scmp.eq.s32.totalorder %s43, 1
      %p381 = por %p379, %p380
      %p382 = scmp.ne.s32.totalorder %s373, %s374
      %p383 = scmp.eq.s32.totalorder %s43, 0
      %p384 = por %p382, %p383
      %p385 = scmp.ne.s32.totalorder %s373, %s374
      %p386 = scmp.eq.s32.totalorder %s44, 1
      %p387 = por %p385, %p386
      %p389 = scmp.ne.s32.totalorder %s374, %s388
      %p390 = scmp.eq.s32.totalorder %s44, 0
      %p391 = por %p389, %p390
      %s393 = sadd.s32 %s392, 1
      %p396 = scmp.eq.s32.totalorder %s38, 1
      %p397 = scmp.ne.s32.totalorder %s392, %s394
      %p398 = scmp.eq.s32.totalorder %s38, 0
      %p399 = por %p397, %p398
      %p400 = scmp.ne.s32.totalorder %s392, %s394
      %p401 = scmp.eq.s32.totalorder %s43, 1
      %p402 = por %p400, %p401
      %p403 = scmp.ne.s32.totalorder %s394, %s395
      %p404 = scmp.eq.s32.totalorder %s43, 0
      %p405 = por %p403, %p404
      %p406 = scmp.ne.s32.totalorder %s394, %s395
      %p407 = scmp.eq.s32.totalorder %s44, 1
      %p408 = por %p406, %p407
      %p410 = scmp.ne.s32.totalorder %s395, %s409
      %p411 = scmp.eq.s32.totalorder %s44, 0
      %p412 = por %p410, %p411
      %s414 = sadd.s32 %s413, 1
      %p417 = scmp.eq.s32.totalorder %s38, 1
      %p418 = scmp.ne.s32.totalorder %s413, %s415
      %p419 = scmp.eq.s32.totalorder %s38, 0
      %p420 = por %p418, %p419
      %p421 = scmp.ne.s32.totalorder %s413, %s415
      %p422 = scmp.eq.s32.totalorder %s43, 1
      %p423 = por %p421, %p422
      %p424 = scmp.ne.s32.totalorder %s415, %s416
      %p425 = scmp.eq.s32.totalorder %s43, 0
      %p426 = por %p424, %p425
      %p427 = scmp.ne.s32.totalorder %s415, %s416
      %p428 = scmp.eq.s32.totalorder %s44, 1
      %p429 = por %p427, %p428
      %p431 = scmp.ne.s32.totalorder %s416, %s430
      %p432 = scmp.eq.s32.totalorder %s44, 0
      %p433 = por %p431, %p432
      %s435 = sadd.s32 %s434, 1
      %p438 = scmp.eq.s32.totalorder %s38, 1
      %p439 = scmp.ne.s32.totalorder %s434, %s436
      %p440 = scmp.eq.s32.totalorder %s38, 0
      %p441 = por %p439, %p440
      %p442 = scmp.ne.s32.totalorder %s434, %s436
      %p443 = scmp.eq.s32.totalorder %s43, 1
      %p444 = por %p442, %p443
      %p445 = scmp.ne.s32.totalorder %s436, %s437
      %p446 = scmp.eq.s32.totalorder %s43, 0
      %p447 = por %p445, %p446
      %p448 = scmp.ne.s32.totalorder %s436, %s437
      %p449 = scmp.eq.s32.totalorder %s44, 1
      %p450 = por %p448, %p449
      %p452 = scmp.ne.s32.totalorder %s437, %s451
      %p453 = scmp.eq.s32.totalorder %s44, 0
      %p454 = por %p452, %p453
      %s456 = sadd.s32 %s455, 1
      %p459 = scmp.eq.s32.totalorder %s38, 1
      %p460 = scmp.ne.s32.totalorder %s455, %s457
      %p461 = scmp.eq.s32.totalorder %s38, 0
      %p462 = por %p460, %p461
      %p463 = scmp.ne.s32.totalorder %s455, %s457
      %p464 = scmp.eq.s32.totalorder %s43, 1
      %p465 = por %p463, %p464
      %p466 = scmp.ne.s32.totalorder %s457, %s458
      %p467 = scmp.eq.s32.totalorder %s43, 0
      %p468 = por %p466, %p467
      %p469 = scmp.ne.s32.totalorder %s457, %s458
      %p470 = scmp.eq.s32.totalorder %s44, 1
      %p471 = por %p469, %p470
      %p473 = scmp.ne.s32.totalorder %s458, %s472
      %p474 = scmp.eq.s32.totalorder %s44, 0
      %p475 = por %p473, %p474
      %s477 = sadd.s32 %s476, 1
      %p480 = scmp.eq.s32.totalorder %s38, 1
      %p481 = scmp.ne.s32.totalorder %s476, %s478
      %p482 = scmp.eq.s32.totalorder %s38, 0
      %p483 = por %p481, %p482
      %p484 = scmp.ne.s32.totalorder %s476, %s478
      %p485 = scmp.eq.s32.totalorder %s43, 1
      %p486 = por %p484, %p485
      %p487 = scmp.ne.s32.totalorder %s478, %s479
      %p488 = scmp.eq.s32.totalorder %s43, 0
      %p489 = por %p487, %p488
      %p490 = scmp.ne.s32.totalorder %s478, %s479
      %p491 = scmp.eq.s32.totalorder %s44, 1
      %p492 = por %p490, %p491
      %p494 = scmp.ne.s32.totalorder %s479, %s493
      %p495 = scmp.eq.s32.totalorder %s44, 0
      %p496 = por %p494, %p495
      %s498 = sadd.s32 %s497, 1
      %p501 = scmp.eq.s32.totalorder %s38, 1
      %p502 = scmp.ne.s32.totalorder %s497, %s499
      %p503 = scmp.eq.s32.totalorder %s38, 0
      %p504 = por %p502, %p503
      %p505 = scmp.ne.s32.totalorder %s497, %s499
      %p506 = scmp.eq.s32.totalorder %s43, 1
      %p507 = por %p505, %p506
      %p508 = scmp.ne.s32.totalorder %s499, %s500
      %p509 = scmp.eq.s32.totalorder %s43, 0
      %p510 = por %p508, %p509
      %p511 = scmp.ne.s32.totalorder %s499, %s500
      %p512 = scmp.eq.s32.totalorder %s44, 1
      %p513 = por %p511, %p512
      %p515 = scmp.ne.s32.totalorder %s500, %s514
      %p516 = scmp.eq.s32.totalorder %s44, 0
      %p517 = por %p515, %p516
      %s519 = sadd.s32 %s518, 1
      %p522 = scmp.eq.s32.totalorder %s38, 1
      %p523 = scmp.ne.s32.totalorder %s518, %s520
      %p524 = scmp.eq.s32.totalorder %s38, 0
      %p525 = por %p523, %p524
      %p526 = scmp.ne.s32.totalorder %s518, %s520
      %p527 = scmp.eq.s32.totalorder %s43, 1
      %p528 = por %p526, %p527
      %p529 = scmp.ne.s32.totalorder %s520, %s521
      %p530 = scmp.eq.s32.totalorder %s43, 0
      %p531 = por %p529, %p530
      %p532 = scmp.ne.s32.totalorder %s520, %s521
      %p533 = scmp.eq.s32.totalorder %s44, 1
      %p534 = por %p532, %p533
      %p536 = scmp.ne.s32.totalorder %s521, %s535
      %p537 = scmp.eq.s32.totalorder %s44, 0
      %p538 = por %p536, %p537
      %s540 = sadd.s32 %s539, 1
      %p543 = scmp.eq.s32.totalorder %s38, 1
      %p544 = scmp.ne.s32.totalorder %s539, %s541
      %p545 = scmp.eq.s32.totalorder %s38, 0
      %p546 = por %p544, %p545
      %p547 = scmp.ne.s32.totalorder %s539, %s541
      %p548 = scmp.eq.s32.totalorder %s43, 1
      %p549 = por %p547, %p548
      %p550 = scmp.ne.s32.totalorder %s541, %s542
      %p551 = scmp.eq.s32.totalorder %s43, 0
      %p552 = por %p550, %p551
      %p553 = scmp.ne.s32.totalorder %s541, %s542
      %p554 = scmp.eq.s32.totalorder %s44, 1
      %p555 = por %p553, %p554
      %p557 = scmp.ne.s32.totalorder %s542, %s556
      %p558 = scmp.eq.s32.totalorder %s44, 0
      %p559 = por %p557, %p558
      %s560 = ssub.s32 %s38, %s45
      %p561 = scmp.eq.s32.totalorder %s560, 0
      %s563 = sadd.s32 %s562, 1
      %s564 = scalar_select %p561, %s562, %s563
      %p567 = pneg %p561
      %p568 = scmp.eq.s32.totalorder %s38, 1
      %p569 = por %p567, %p568
      %p570 = scmp.ne.s32.totalorder %s562, %s565
      %p571 = scmp.eq.s32.totalorder %s38, 0
      %p572 = por %p570, %p571
      %p573 = scmp.ne.s32.totalorder %s562, %s565
      %p574 = scmp.eq.s32.totalorder %s43, 1
      %p575 = por %p573, %p574
      %p576 = scmp.ne.s32.totalorder %s565, %s566
      %p577 = scmp.eq.s32.totalorder %s43, 0
      %p578 = por %p576, %p577
      %p579 = scmp.ne.s32.totalorder %s565, %s566
      %p580 = scmp.eq.s32.totalorder %s44, 1
      %p581 = por %p579, %p580
      %p583 = scmp.ne.s32.totalorder %s566, %s582
      %p584 = scmp.eq.s32.totalorder %s44, 0
      %p585 = por %p583, %p584
      %p586 = scmp.le.s32.totalorder 1, %s38
      %p587 = scmp.lt.s32.totalorder %s38, 3
      %p588 = pnand %p586, %p587
      %p589 = pneg %p588
      // Predicated region
      $region9: #{transformer_decoder.2} parent=5 // pred_check
        _
      $region10: #{transformer_decoder.2} parent=5 // pred_check_branch
        %591 = sbr.rel (%p588) target = $region12
      $region11: #{transformer_decoder.2} parent=5 // pred_region
        %s592 = ssub.s32 %s38, 1
        // Predicated region
        $region13: #{transformer_decoder.2} parent=11 // pred_check
          %p593 = pneg %p111
        $region14: #{transformer_decoder.2} parent=11 // pred_check_branch
          %595 = sbr.rel (%p593) target = $region16
        $region15: #{transformer_decoder.2} parent=11 // pred_region
          _
        $region16: #{transformer_decoder.2} parent=11 // pred_fallthru
          _
        // Predicated region
        $region17: #{transformer_decoder.2} parent=11 // pred_check
          %p596 = pneg %p132
        $region18: #{transformer_decoder.2} parent=11 // pred_check_branch
          %598 = sbr.rel (%p596) target = $region20
        $region19: #{transformer_decoder.2} parent=11 // pred_region
          _
        $region20: #{transformer_decoder.2} parent=11 // pred_fallthru
          _
        // Predicated region
        $region21: #{transformer_decoder.2} parent=11 // pred_check
          %p599 = pneg %p153
        $region22: #{transformer_decoder.2} parent=11 // pred_check_branch
          %601 = sbr.rel (%p599) target = $region24
        $region23: #{transformer_decoder.2} parent=11 // pred_region
          _
        $region24: #{transformer_decoder.2} parent=11 // pred_fallthru
          _
        // Predicated region
        $region25: #{transformer_decoder.2} parent=11 // pred_check
          %p602 = pneg %p174
        $region26: #{transformer_decoder.2} parent=11 // pred_check_branch
          %604 = sbr.rel (%p602) target = $region28
        $region27: #{transformer_decoder.2} parent=11 // pred_region
          _
        $region28: #{transformer_decoder.2} parent=11 // pred_fallthru
          _
        // Predicated region
        $region29: #{transformer_decoder.2} parent=11 // pred_check
          %p605 = pneg %p195
        $region30: #{transformer_decoder.2} parent=11 // pred_check_branch
          %607 = sbr.rel (%p605) target = $region32
        $region31: #{transformer_decoder.2} parent=11 // pred_region
          _
        $region32: #{transformer_decoder.2} parent=11 // pred_fallthru
          _
        // Predicated region
        $region33: #{transformer_decoder.2} parent=11 // pred_check
          %p608 = pneg %p216
        $region34: #{transformer_decoder.2} parent=11 // pred_check_branch
          %610 = sbr.rel (%p608) target = $region36
        $region35: #{transformer_decoder.2} parent=11 // pred_region
          _
        $region36: #{transformer_decoder.2} parent=11 // pred_fallthru
          _
        // Predicated region
        $region37: #{transformer_decoder.2} parent=11 // pred_check
          %p611 = pneg %p237
        $region38: #{transformer_decoder.2} parent=11 // pred_check_branch
          %613 = sbr.rel (%p611) target = $region40
        $region39: #{transformer_decoder.2} parent=11 // pred_region
          %s615 = ssub.s32 16, 16
          %616 = vsyncadd [#allocation5], %s615
          %s618 = sshll.u32 [#allocation4], 4
          %s619 = int_to_ptr.vmem [resolvable:$true] %s618
          %621 = dma.hbm_to_vmem [thread:$0]  %s8, 16, %s619, [#allocation5]
        $region40: #{transformer_decoder.2} parent=11 // pred_fallthru
          _
        // Predicated region
        $region41: #{transformer_decoder.2} parent=11 // pred_check
          %p622 = pneg %p258
        $region42: #{transformer_decoder.2} parent=11 // pred_check_branch
          %624 = sbr.rel (%p622) target = $region44
        $region43: #{transformer_decoder.2} parent=11 // pred_region
          %s626 = ssub.s32 16, 16
          %627 = vsyncadd [#allocation5], %s626
          %s629 = sshll.u32 [#allocation6], 4
          %s630 = int_to_ptr.vmem [resolvable:$true] %s629
          %632 = dma.hbm_to_vmem [thread:$0]  %s9, 16, %s630, [#allocation5]
        $region44: #{transformer_decoder.2} parent=11 // pred_fallthru
          _
        // Predicated region
        $region45: #{transformer_decoder.2} parent=11 // pred_check
          %p633 = pneg %p279
        $region46: #{transformer_decoder.2} parent=11 // pred_check_branch
          %635 = sbr.rel (%p633) target = $region48
        $region47: #{transformer_decoder.2} parent=11 // pred_region
          _
        $region48: #{transformer_decoder.2} parent=11 // pred_fallthru
          _
        // Predicated region
        $region49: #{transformer_decoder.2} parent=11 // pred_check
          %p636 = pneg %p300
        $region50: #{transformer_decoder.2} parent=11 // pred_check_branch
          %638 = sbr.rel (%p636) target = $region52
        $region51: #{transformer_decoder.2} parent=11 // pred_region
          %s640 = ssub.s32 16, 16
          %641 = vsyncadd [#allocation8], %s640
          %s643 = sshll.u32 [#allocation7], 4
          %s644 = int_to_ptr.vmem [resolvable:$true] %s643
          %646 = dma.hbm_to_vmem [thread:$0]  %s11, 16, %s644, [#allocation8]
        $region52: #{transformer_decoder.2} parent=11 // pred_fallthru
          _
        // Predicated region
        $region53: #{transformer_decoder.2} parent=11 // pred_check
          %p647 = pneg %p321
        $region54: #{transformer_decoder.2} parent=11 // pred_check_branch
          %649 = sbr.rel (%p647) target = $region56
        $region55: #{transformer_decoder.2} parent=11 // pred_region
          _
        $region56: #{transformer_decoder.2} parent=11 // pred_fallthru
          _
        // Predicated region
        $region57: #{transformer_decoder.2} parent=11 // pred_check
          %p650 = pneg %p342
        $region58: #{transformer_decoder.2} parent=11 // pred_check_branch
          %652 = sbr.rel (%p650) target = $region60
        $region59: #{transformer_decoder.2} parent=11 // pred_region
          %s654 = ssub.s32 16, 16
          %655 = vsyncadd [#allocation8], %s654
          %s657 = sshll.u32 [#allocation9], 4
          %s658 = int_to_ptr.vmem [resolvable:$true] %s657
          %660 = dma.hbm_to_vmem [thread:$0]  %s13, 16, %s658, [#allocation8]
        $region60: #{transformer_decoder.2} parent=11 // pred_fallthru
          _
        // Predicated region
        $region61: #{transformer_decoder.2} parent=11 // pred_check
          %p661 = pneg %p363
        $region62: #{transformer_decoder.2} parent=11 // pred_check_branch
          %663 = sbr.rel (%p661) target = $region64
        $region63: #{transformer_decoder.2} parent=11 // pred_region
          %s665 = ssub.s32 256, 256
          %666 = vsyncadd [#allocation11], %s665
          %s667 = sshll.u32 [#allocation10], 4
          %s668 = int_to_ptr.vmem [resolvable:$true] %s667
          %673 = dma.hbm_to_vmem [thread:$0]  %s14, 256, %s668, [#allocation11], 64, 64, 4
        $region64: #{transformer_decoder.2} parent=11 // pred_fallthru
          _
        // Predicated region
        $region65: #{transformer_decoder.2} parent=11 // pred_check
          %p674 = pneg %p384
        $region66: #{transformer_decoder.2} parent=11 // pred_check_branch
          %676 = sbr.rel (%p674) target = $region68
        $region67: #{transformer_decoder.2} parent=11 // pred_region
          %s678 = ssub.s32 16, 16
          %679 = vsyncadd [#allocation11], %s678
          %s681 = sshll.u32 [#allocation12], 4
          %s682 = int_to_ptr.vmem [resolvable:$true] %s681
          %684 = dma.hbm_to_vmem [thread:$0]  %s15, 16, %s682, [#allocation11]
        $region68: #{transformer_decoder.2} parent=11 // pred_fallthru
          _
        // Predicated region
        $region69: #{transformer_decoder.2} parent=11 // pred_check
          %p685 = pneg %p405
        $region70: #{transformer_decoder.2} parent=11 // pred_check_branch
          %687 = sbr.rel (%p685) target = $region72
        $region71: #{transformer_decoder.2} parent=11 // pred_region
          _
        $region72: #{transformer_decoder.2} parent=11 // pred_fallthru
          _
        // Predicated region
        $region73: #{transformer_decoder.2} parent=11 // pred_check
          %p688 = pneg %p426
        $region74: #{transformer_decoder.2} parent=11 // pred_check_branch
          %690 = sbr.rel (%p688) target = $region76
        $region75: #{transformer_decoder.2} parent=11 // pred_region
          %s692 = ssub.s32 16, 16
          %693 = vsyncadd [#allocation14], %s692
          %s695 = sshll.u32 [#allocation13], 4
          %s696 = int_to_ptr.vmem [resolvable:$true] %s695
          %698 = dma.hbm_to_vmem [thread:$0]  %s17, 16, %s696, [#allocation14]
        $region76: #{transformer_decoder.2} parent=11 // pred_fallthru
          _
        // Predicated region
        $region77: #{transformer_decoder.2} parent=11 // pred_check
          %p699 = pneg %p447
        $region78: #{transformer_decoder.2} parent=11 // pred_check_branch
          %701 = sbr.rel (%p699) target = $region80
        $region79: #{transformer_decoder.2} parent=11 // pred_region
          _
        $region80: #{transformer_decoder.2} parent=11 // pred_fallthru
          _
        // Predicated region
        $region81: #{transformer_decoder.2} parent=11 // pred_check
          %p702 = pneg %p468
        $region82: #{transformer_decoder.2} parent=11 // pred_check_branch
          %704 = sbr.rel (%p702) target = $region84
        $region83: #{transformer_decoder.2} parent=11 // pred_region
          %s706 = ssub.s32 16, 16
          %707 = vsyncadd [#allocation14], %s706
          %s709 = sshll.u32 [#allocation15], 4
          %s710 = int_to_ptr.vmem [resolvable:$true] %s709
          %712 = dma.hbm_to_vmem [thread:$0]  %s19, 16, %s710, [#allocation14]
        $region84: #{transformer_decoder.2} parent=11 // pred_fallthru
          _
        // Predicated region
        $region85: #{transformer_decoder.2} parent=11 // pred_check
          %p713 = pneg %p489
        $region86: #{transformer_decoder.2} parent=11 // pred_check_branch
          %715 = sbr.rel (%p713) target = $region88
        $region87: #{transformer_decoder.2} parent=11 // pred_region
          _
        $region88: #{transformer_decoder.2} parent=11 // pred_fallthru
          _
        // Predicated region
        $region89: #{transformer_decoder.2} parent=11 // pred_check
          %p716 = pneg %p510
        $region90: #{transformer_decoder.2} parent=11 // pred_check_branch
          %718 = sbr.rel (%p716) target = $region92
        $region91: #{transformer_decoder.2} parent=11 // pred_region
          %s720 = ssub.s32 16, 16
          %721 = vsyncadd [#allocation17], %s720
          %s723 = sshll.u32 [#allocation16], 4
          %s724 = int_to_ptr.vmem [resolvable:$true] %s723
          %726 = dma.hbm_to_vmem [thread:$0]  %s21, 16, %s724, [#allocation17]
        $region92: #{transformer_decoder.2} parent=11 // pred_fallthru
          _
        // Predicated region
        $region93: #{transformer_decoder.2} parent=11 // pred_check
          %p727 = pneg %p531
        $region94: #{transformer_decoder.2} parent=11 // pred_check_branch
          %729 = sbr.rel (%p727) target = $region96
        $region95: #{transformer_decoder.2} parent=11 // pred_region
          _
        $region96: #{transformer_decoder.2} parent=11 // pred_fallthru
          _
        // Predicated region
        $region97: #{transformer_decoder.2} parent=11 // pred_check
          %p730 = pneg %p552
        $region98: #{transformer_decoder.2} parent=11 // pred_check_branch
          %732 = sbr.rel (%p730) target = $region100
        $region99: #{transformer_decoder.2} parent=11 // pred_region
          _
        $region100: #{transformer_decoder.2} parent=11 // pred_fallthru
          _
      $region12: #{transformer_decoder.2} parent=5 // pred_fallthru
        _
      %p733 = scmp.lt.s32.totalorder %s38, 2
      // Predicated region
      $region101: #{transformer_decoder.2} parent=5 // pred_check
        %p734 = pneg %p733
      $region102: #{transformer_decoder.2} parent=5 // pred_check_branch
        %736 = sbr.rel (%p734) target = $region104
      $region103: #{transformer_decoder.2} parent=5 // pred_region
        // Predicated region
        $region105: #{transformer_decoder.2} parent=103 // pred_check
          %p737 = pneg %p58
        $region106: #{transformer_decoder.2} parent=103 // pred_check_branch
          %739 = sbr.rel (%p737) target = $region108
        $region107: #{transformer_decoder.2} parent=103 // pred_region
          %s740 = sand.u32 %s48, 1
          %s741 = scalar_lea.sflag [#allocation3], %s740
          %s742 = sand.u32 %s48, 1
          %s743 = smul.addr %s742, 4
          %s744 = scalar_lea.vmem [#allocation2], %s743
          %s746 = ssub.s32 64, 64
          %747 = vsyncadd %s741, %s746
          %s748 = smul.addr %s38, 64
          %s749 = scalar_lea.hbm %s0, %s748
          %s751 = sshll.u32 %s744, 4
          %s752 = int_to_ptr.vmem [resolvable:$true] %s751
          %754 = dma.hbm_to_vmem [thread:$0]  %s749, 64, %s752, %s741
        $region108: #{transformer_decoder.2} parent=103 // pred_fallthru
          _
        // Predicated region
        $region109: #{transformer_decoder.2} parent=103 // pred_check
          %p755 = pneg %p84
        $region110: #{transformer_decoder.2} parent=103 // pred_check_branch
          %757 = sbr.rel (%p755) target = $region112
        $region111: #{transformer_decoder.2} parent=103 // pred_region
          %p758 = scmp.lt.s32.totalorder %s38, 1
          %s759 = scalar_select %p758, %s38, 1
          %s760 = smul.addr %s759, 4
          %s761 = scalar_lea.vmem %s1, %s760
        $region112: #{transformer_decoder.2} parent=103 // pred_fallthru
          _
      $region104: #{transformer_decoder.2} parent=5 // pred_fallthru
        _
      %p762 = scmp.le.s32.totalorder 1, %s38
      %p763 = scmp.lt.s32.totalorder %s38, 3
      %p764 = pnand %p762, %p763
      %p765 = pneg %p764
      // Predicated region
      $region113: #{transformer_decoder.2} parent=5 // pred_check
        _
      $region114: #{transformer_decoder.2} parent=5 // pred_check_branch
        %767 = sbr.rel (%p764) target = $region116
      $region115: #{transformer_decoder.2} parent=5 // pred_region
        %s768 = ssub.s32 %s38, 1
        %s769 = sand.u32 %s51, 1
        %s770 = scalar_lea.sflag [#allocation3], %s769
        %s771 = sand.u32 %s51, 1
        %s772 = smul.addr %s771, 4
        %s773 = scalar_lea.vmem [#allocation2], %s772
        // Predicated region
        $region117: #{transformer_decoder.2} parent=115 // pred_check
          %p774 = pneg %p64
        $region118: #{transformer_decoder.2} parent=115 // pred_check_branch
          %776 = sbr.rel (%p774) target = $region120
        $region119: #{transformer_decoder.2} parent=115 // pred_region
          %777 = dma.done %s770, 64
        $region120: #{transformer_decoder.2} parent=115 // pred_fallthru
          _
        // Predicated region
        $region121: #{transformer_decoder.2} parent=115 // pred_check
          %p778 = pneg %p237
        $region122: #{transformer_decoder.2} parent=115 // pred_check_branch
          %780 = sbr.rel (%p778) target = $region124
        $region123: #{transformer_decoder.2} parent=115 // pred_region
          %781 = dma.done [#allocation5], 16
        $region124: #{transformer_decoder.2} parent=115 // pred_fallthru
          _
        // Predicated region
        $region125: #{transformer_decoder.2} parent=115 // pred_check
          %p782 = pneg %p258
        $region126: #{transformer_decoder.2} parent=115 // pred_check_branch
          %784 = sbr.rel (%p782) target = $region128
        $region127: #{transformer_decoder.2} parent=115 // pred_region
          %785 = dma.done [#allocation5], 16
        $region128: #{transformer_decoder.2} parent=115 // pred_fallthru
          _
        // Predicated region
        $region129: #{transformer_decoder.2} parent=115 // pred_check
          %p786 = pneg %p300
        $region130: #{transformer_decoder.2} parent=115 // pred_check_branch
          %788 = sbr.rel (%p786) target = $region132
        $region131: #{transformer_decoder.2} parent=115 // pred_region
          %789 = dma.done [#allocation8], 16
        $region132: #{transformer_decoder.2} parent=115 // pred_fallthru
          _
        // Predicated region
        $region133: #{transformer_decoder.2} parent=115 // pred_check
          %p790 = pneg %p342
        $region134: #{transformer_decoder.2} parent=115 // pred_check_branch
          %792 = sbr.rel (%p790) target = $region136
        $region135: #{transformer_decoder.2} parent=115 // pred_region
          %793 = dma.done [#allocation8], 16
        $region136: #{transformer_decoder.2} parent=115 // pred_fallthru
          _
        // Predicated region
        $region137: #{transformer_decoder.2} parent=115 // pred_check
          %p794 = pneg %p363
        $region138: #{transformer_decoder.2} parent=115 // pred_check_branch
          %796 = sbr.rel (%p794) target = $region140
        $region139: #{transformer_decoder.2} parent=115 // pred_region
          %797 = dma.done [#allocation11], 256
        $region140: #{transformer_decoder.2} parent=115 // pred_fallthru
          _
        // Predicated region
        $region141: #{transformer_decoder.2} parent=115 // pred_check
          %p798 = pneg %p384
        $region142: #{transformer_decoder.2} parent=115 // pred_check_branch
          %800 = sbr.rel (%p798) target = $region144
        $region143: #{transformer_decoder.2} parent=115 // pred_region
          %801 = dma.done [#allocation11], 16
        $region144: #{transformer_decoder.2} parent=115 // pred_fallthru
          _
        // Predicated region
        $region145: #{transformer_decoder.2} parent=115 // pred_check
          %p802 = pneg %p426
        $region146: #{transformer_decoder.2} parent=115 // pred_check_branch
          %804 = sbr.rel (%p802) target = $region148
        $region147: #{transformer_decoder.2} parent=115 // pred_region
          %805 = dma.done [#allocation14], 16
        $region148: #{transformer_decoder.2} parent=115 // pred_fallthru
          _
        // Predicated region
        $region149: #{transformer_decoder.2} parent=115 // pred_check
          %p806 = pneg %p468
        $region150: #{transformer_decoder.2} parent=115 // pred_check_branch
          %808 = sbr.rel (%p806) target = $region152
        $region151: #{transformer_decoder.2} parent=115 // pred_region
          %809 = dma.done [#allocation14], 16
        $region152: #{transformer_decoder.2} parent=115 // pred_fallthru
          _
        // Predicated region
        $region153: #{transformer_decoder.2} parent=115 // pred_check
          %p810 = pneg %p510
        $region154: #{transformer_decoder.2} parent=115 // pred_check_branch
          %812 = sbr.rel (%p810) target = $region156
        $region155: #{transformer_decoder.2} parent=115 // pred_region
          %813 = dma.done [#allocation17], 16
        $region156: #{transformer_decoder.2} parent=115 // pred_fallthru
          _
        %s814 = sand.u32 %s51, 1
        %s815 = scalar_lea.sflag [#allocation3], %s814
        %s816 = sand.u32 %s51, 1
        %s817 = smul.addr %s816, 4
        %s818 = scalar_lea.vmem [#allocation2], %s817
        %p819 = pneg %p64
        %p820 = pneg %p61
        %p821 = scmp.lt.s32.totalorder %s43, 1
        %s822 = scalar_select %p821, %s43, 1
        %s823 = smul.addr %s822, 4
        %s824 = scalar_lea.vmem %s1, %s823
        %p825 = pneg %p90
        %p826 = pneg %p87
        %p827 = pneg %p111
        %p828 = pneg %p108
        %p829 = pneg %p132
        %p830 = pneg %p129
        %p831 = pneg %p153
        %p832 = pneg %p150
        %p833 = pneg %p174
        %p834 = pneg %p171
        %p835 = pneg %p195
        %p836 = pneg %p192
        %p837 = pneg %p216
        %p838 = pneg %p213
        %p839 = pneg %p237
        %p840 = pneg %p234
        %p841 = pneg %p258
        %p842 = pneg %p255
        %p843 = pneg %p279
        %p844 = pneg %p276
        %p845 = pneg %p300
        %p846 = pneg %p297
        %p847 = pneg %p321
        %p848 = pneg %p318
        %p849 = pneg %p342
        %p850 = pneg %p339
        %p851 = pneg %p363
        %p852 = pneg %p360
        %p853 = pneg %p384
        %p854 = pneg %p381
        %p855 = pneg %p405
        %p856 = pneg %p402
        %p857 = pneg %p426
        %p858 = pneg %p423
        %p859 = pneg %p447
        %p860 = pneg %p444
        %p861 = pneg %p468
        %p862 = pneg %p465
        %p863 = pneg %p489
        %p864 = pneg %p486
        %p865 = pneg %p510
        %p866 = pneg %p507
        %p867 = pneg %p531
        %p868 = pneg %p528
        %p869 = pneg %p552
        %p870 = pneg %p549
        %p871 = pneg %p578
        %p872 = pneg %p575
        %p873 = scmp.lt.s32.totalorder %s43, 1
        %s874 = scalar_select %p873, %s43, 1
        %s875 = smul.addr %s874, 4
        %s876 = scalar_lea.vmem %s24, %s875
        %p877 = scmp.lt.s32.totalorder %s43, 1
        %s878 = scalar_select %p877, %s43, 1
        %s879 = smul.addr %s878, 4
        %s880 = scalar_lea.vmem %s1, %s879
        %p881 = scmp.lt.s32.totalorder %s43, 1
        %s882 = scalar_select %p881, %s43, 1
        %s883 = smul.addr %s882, 4
        %s884 = scalar_lea.vmem %s24, %s883
        %v886 = vld [vmem:[%s773] sm:$0xf]
        %v887 = vld [vmem:[%s880] sm:$0xf]
        %v888 = vunpack.c.l.bf16 %v886
        %v889 = vld [vmem:[%s2] sm:$0xf]
        %v890 = vld [vmem:[%s2 + $0x4] sm:$0xf]
        %v891 = vld [vmem:[%s2 + $0x8] sm:$0xf]
        %v892 = vld [vmem:[%s2 + $0xc] sm:$0xf]
        %v893 = vld [vmem:[%s3] sm:$0x1]
        %v894 = vld [vmem:[%s4] sm:$0xf]
        %v895 = vld [vmem:[%s4 + $0x4] sm:$0xf]
        %v896 = vld [vmem:[%s4 + $0x8] sm:$0xf]
        %v897 = vld [vmem:[%s4 + $0xc] sm:$0xf]
        %v898 = vld [vmem:[%s5] sm:$0x1]
        %v899 = vld [vmem:[%s6] sm:$0xf]
        %v900 = vld [vmem:[%s6 + $0x4] sm:$0xf]
        %v901 = vld [vmem:[%s6 + $0x8] sm:$0xf]
        %v902 = vld [vmem:[%s6 + $0xc] sm:$0xf]
        %v903 = vld [vmem:[%s7] sm:$0x1]
        %v904 = vld [vmem:[#allocation4] sm:$0x1]
        %v905 = vld [vmem:[#allocation6] sm:$0x1]
        %v907 = vlaneseq
        %v908 = vshrl.u32 %v907, 7
        %v909 = vsub.s32 0, %v908
        %v910 = vrot.slane %v893, %v909
        %v916 = vunpack.c.l.b16 %v889
        %v917 = vunpack.c.l.b16 %v890
        %v918 = vunpack.c.l.b16 %v891
        %v919 = vunpack.c.l.b16 %v892
        %v920 = vpack.c.b16 %v917, %v916
        %v921 = vpack.c.b16 %v919, %v918
        %vm924 = vcmask 261120
        %v926 = vsel %vm924, %v886, 0
        %928 = vmatprep.subr.bf16.mxu0 0
        %929 = vmatpush1.bf16.msra.mxu0 %v920
        %930 = vmatprep.subr.bf16.mxu0 0
        %931 = vmatpush1.bf16.msra.mxu0 %v921
        %932 = vmatprep.subr.bf16.mxu0 0
        %933 = vmatpush1.bf16.msra.mxu0 0
        %934 = vmatprep.subr.bf16.mxu0 0
        %935 = vmatpush1.bf16.msra.mxu0 0
        %936 = vmatprep.subr.bf16.mxu0 0
        %937 = vmatpush1.bf16.msra.mxu0 0
        %938 = vmatprep.subr.bf16.mxu0 0
        %939 = vmatpush1.bf16.msra.mxu0 0
        %940 = vmatprep.subr.bf16.mxu0 0
        %941 = vmatpush1.bf16.msra.mxu0 0
        %942 = vmatprep.subr.bf16.mxu0 0
        %943 = vmatpush1.bf16.msra.mxu0 0
        %944 = vmatprep.subr.bf16.mxu0 0
        %945 = vmatpush1.bf16.msra.mxu0 0
        %946 = vmatprep.subr.bf16.mxu0 0
        %947 = vmatpush1.bf16.msra.mxu0 0
        %948 = vmatprep.subr.bf16.mxu0 0
        %949 = vmatpush1.bf16.msra.mxu0 0
        %950 = vmatprep.subr.bf16.mxu0 0
        %951 = vmatpush1.bf16.msra.mxu0 0
        %952 = vmatprep.subr.bf16.mxu0 0
        %953 = vmatpush1.bf16.msra.mxu0 0
        %954 = vmatprep.subr.bf16.mxu0 0
        %955 = vmatpush1.bf16.msra.mxu0 0
        %956 = vmatprep.subr.bf16.mxu0 0
        %957 = vmatpush1.bf16.msra.mxu0 0
        %958 = vmatprep.subr.bf16.mxu0 0
        %959 = vmatpush1.bf16.msra.mxu0 0
        %960 = vmatprep.mubr.bf16.mxu0 0
        %961 = vmatmul.mubr.bf16.gmra.mrb[0].mxu0 %v926
        %v962 = vpop.f32.mrb[0].mxu0
        %v963 = vadd.f32 %v910, %v962
        %v964 = vpop.f32.mrb[0].mxu0
        %v965 = vpop.f32.mrb[0].mxu0
        %v966 = vpop.f32.mrb[0].mxu0
        %967 = vdwg.mxu0
        %v969 = vlaneseq
        %v970 = vshrl.u32 %v969, 7
        %v971 = vsub.s32 0, %v970
        %v972 = vrot.slane %v898, %v971
        %v978 = vunpack.c.l.b16 %v894
        %v979 = vunpack.c.l.b16 %v895
        %v980 = vunpack.c.l.b16 %v896
        %v981 = vunpack.c.l.b16 %v897
        %v982 = vpack.c.b16 %v979, %v978
        %v983 = vpack.c.b16 %v981, %v980
        %986 = vmatprep.subr.bf16.mxu0 0
        %987 = vmatpush1.bf16.msra.mxu0 %v982
        %988 = vmatprep.subr.bf16.mxu0 0
        %989 = vmatpush1.bf16.msra.mxu0 %v983
        %990 = vmatprep.subr.bf16.mxu0 0
        %991 = vmatpush1.bf16.msra.mxu0 0
        %992 = vmatprep.subr.bf16.mxu0 0
        %993 = vmatpush1.bf16.msra.mxu0 0
        %994 = vmatprep.subr.bf16.mxu0 0
        %995 = vmatpush1.bf16.msra.mxu0 0
        %996 = vmatprep.subr.bf16.mxu0 0
        %997 = vmatpush1.bf16.msra.mxu0 0
        %998 = vmatprep.subr.bf16.mxu0 0
        %999 = vmatpush1.bf16.msra.mxu0 0
        %1000 = vmatprep.subr.bf16.mxu0 0
        %1001 = vmatpush1.bf16.msra.mxu0 0
        %1002 = vmatprep.subr.bf16.mxu0 0
        %1003 = vmatpush1.bf16.msra.mxu0 0
        %1004 = vmatprep.subr.bf16.mxu0 0
        %1005 = vmatpush1.bf16.msra.mxu0 0
        %1006 = vmatprep.subr.bf16.mxu0 0
        %1007 = vmatpush1.bf16.msra.mxu0 0
        %1008 = vmatprep.subr.bf16.mxu0 0
        %1009 = vmatpush1.bf16.msra.mxu0 0
        %1010 = vmatprep.subr.bf16.mxu0 0
        %1011 = vmatpush1.bf16.msra.mxu0 0
        %1012 = vmatprep.subr.bf16.mxu0 0
        %1013 = vmatpush1.bf16.msra.mxu0 0
        %1014 = vmatprep.subr.bf16.mxu0 0
        %1015 = vmatpush1.bf16.msra.mxu0 0
        %1016 = vmatprep.subr.bf16.mxu0 0
        %1017 = vmatpush1.bf16.msra.mxu0 0
        %1018 = vmatprep.mubr.bf16.mxu0 0
        %1019 = vmatmul.mubr.bf16.gmra.mrb[0].mxu0 %v926
        %v1020 = vpop.f32.mrb[0].mxu0
        %v1021 = vadd.f32 %v972, %v1020
        %v1022 = vpop.f32.mrb[0].mxu0
        %v1023 = vpop.f32.mrb[0].mxu0
        %v1024 = vpop.f32.mrb[0].mxu0
        %1025 = vdwg.mxu0
        %v1026 = vpack.c.bf16 %v963, %v963
        %v1027 = vpack.c.bf16 %v1021, %v1021
        %vm1028 = vcmask 64512
        %v1030 = vsel %vm1028, %v1026, 0
        %v1033 = vsel %vm1028, %v1027, 0
        %1035 = vmatprep.subr.bf16.mxu0 0
        %1036 = vmatpush1.bf16.xpose.msra.mxu0 %v1033
        %1037 = vmatprep.subr.bf16.mxu0 0
        %1038 = vmatpush1.bf16.xpose.msra.mxu0 0
        %1039 = vmatprep.subr.bf16.mxu0 0
        %1040 = vmatpush1.bf16.xpose.msra.mxu0 0
        %1041 = vmatprep.subr.bf16.mxu0 0
        %1042 = vmatpush1.bf16.xpose.msra.mxu0 0
        %1043 = vmatprep.subr.bf16.mxu0 0
        %1044 = vmatpush1.bf16.xpose.msra.mxu0 0
        %1045 = vmatprep.subr.bf16.mxu0 0
        %1046 = vmatpush1.bf16.xpose.msra.mxu0 0
        %1047 = vmatprep.subr.bf16.mxu0 0
        %1048 = vmatpush1.bf16.xpose.msra.mxu0 0
        %1049 = vmatprep.subr.bf16.mxu0 0
        %1050 = vmatpush1.bf16.xpose.msra.mxu0 0
        %1051 = vmatprep.subr.bf16.mxu0 0
        %1052 = vmatpush1.bf16.xpose.msra.mxu0 0
        %1053 = vmatprep.subr.bf16.mxu0 0
        %1054 = vmatpush1.bf16.xpose.msra.mxu0 0
        %1055 = vmatprep.subr.bf16.mxu0 0
        %1056 = vmatpush1.bf16.xpose.msra.mxu0 0
        %1057 = vmatprep.subr.bf16.mxu0 0
        %1058 = vmatpush1.bf16.xpose.msra.mxu0 0
        %1059 = vmatprep.subr.bf16.mxu0 0
        %1060 = vmatpush1.bf16.xpose.msra.mxu0 0
        %1061 = vmatprep.subr.bf16.mxu0 0
        %1062 = vmatpush1.bf16.xpose.msra.mxu0 0
        %1063 = vmatprep.subr.bf16.mxu0 0
        %1064 = vmatpush1.bf16.xpose.msra.mxu0 0
        %1065 = vmatprep.subr.bf16.mxu0 0
        %1066 = vmatpush1.bf16.xpose.msra.mxu0 0
        %1067 = vmatprep.mubr.bf16.mxu0 0
        %1068 = vmatmul.mubr.bf16.gmra.mrb[0].mxu0 %v1030
        %v1069 = vpop.f32.mrb[0].mxu0
        %v1070 = vadd.f32 0.0, %v1069
        %v1071 = vpop.f32.mrb[0].mxu0
        %v1072 = vpop.f32.mrb[0].mxu0
        %v1073 = vpop.f32.mrb[0].mxu0
        %1074 = vdwg.mxu0
        %v1075 = vsel %vm1028, %v1070, -inf
        %1076 = vmax.xlane.f32.xlu0 %v1075
        %v1077 = vpop.xlane.xlu0 %1076
        %v1078 = vsub.f32 %v1070, %v1077
        %v1079 = vmul.f32 %v1078, 1.442695
        %v1080 = vpow.pop %v1079
        %v1081 = vsel %vm1028, %v1080, 0.0
        %1082 = vadd.xlane.f32.xlu0 %v1081
        %v1083 = vpop.xlane.xlu0 %1082
        %v1084 = vrcp.pop %v1083
        %v1085 = vmul.f32 %v1080, %v1084
        %v1086 = vpack.c.bf16 %v1085, %v1085
        %1088 = vrot.lane.b32.xlu0 %v1027, 96
        %v1089 = vpop.permute.xlu0 %1088
        %v1091 = vsel %vm1028, %v1086, 0
        %vm1093 = vcmask 1043456
        %v1095 = vsel %vm1093, %v1089, 0
        %1097 = vmatprep.subr.bf16.mxu0 0
        %1098 = vmatpush1.bf16.msra.mxu0 %v1095
        %1099 = vmatprep.subr.bf16.mxu0 0
        %1100 = vmatpush1.bf16.msra.mxu0 0
        %1101 = vmatprep.subr.bf16.mxu0 0
        %1102 = vmatpush1.bf16.msra.mxu0 0
        %1103 = vmatprep.subr.bf16.mxu0 0
        %1104 = vmatpush1.bf16.msra.mxu0 0
        %1105 = vmatprep.subr.bf16.mxu0 0
        %1106 = vmatpush1.bf16.msra.mxu0 0
        %1107 = vmatprep.subr.bf16.mxu0 0
        %1108 = vmatpush1.bf16.msra.mxu0 0
        %1109 = vmatprep.subr.bf16.mxu0 0
        %1110 = vmatpush1.bf16.msra.mxu0 0
        %1111 = vmatprep.subr.bf16.mxu0 0
        %1112 = vmatpush1.bf16.msra.mxu0 0
        %1113 = vmatprep.subr.bf16.mxu0 0
        %1114 = vmatpush1.bf16.msra.mxu0 0
        %1115 = vmatprep.subr.bf16.mxu0 0
        %1116 = vmatpush1.bf16.msra.mxu0 0
        %1117 = vmatprep.subr.bf16.mxu0 0
        %1118 = vmatpush1.bf16.msra.mxu0 0
        %1119 = vmatprep.subr.bf16.mxu0 0
        %1120 = vmatpush1.bf16.msra.mxu0 0
        %1121 = vmatprep.subr.bf16.mxu0 0
        %1122 = vmatpush1.bf16.msra.mxu0 0
        %1123 = vmatprep.subr.bf16.mxu0 0
        %1124 = vmatpush1.bf16.msra.mxu0 0
        %1125 = vmatprep.subr.bf16.mxu0 0
        %1126 = vmatpush1.bf16.msra.mxu0 0
        %1127 = vmatprep.subr.bf16.mxu0 0
        %1128 = vmatpush1.bf16.msra.mxu0 0
        %1129 = vmatprep.mubr.bf16.mxu0 0
        %1130 = vmatmul.mubr.bf16.gmra.mrb[0].mxu0 %v1091
        %v1131 = vpop.f32.mrb[0].mxu0
        %v1132 = vadd.f32 0.0, %v1131
        %v1133 = vpop.f32.mrb[0].mxu0
        %v1134 = vpop.f32.mrb[0].mxu0
        %v1135 = vpop.f32.mrb[0].mxu0
        %1136 = vdwg.mxu0
        %1138 = vrot.lane.b32.xlu0 %v1026, 120
        %v1139 = vpop.permute.xlu0 %1138
        %1140 = vrot.lane.b32.xlu0 %v1027, 120
        %v1141 = vpop.permute.xlu0 %1140
        %v1143 = vsel %vm1028, %v1139, 0
        %v1146 = vsel %vm1028, %v1141, 0
        %1148 = vmatprep.subr.bf16.mxu0 0
        %1149 = vmatpush1.bf16.xpose.msra.mxu0 %v1146
        %1150 = vmatprep.subr.bf16.mxu0 0
        %1151 = vmatpush1.bf16.xpose.msra.mxu0 0
        %1152 = vmatprep.subr.bf16.mxu0 0
        %1153 = vmatpush1.bf16.xpose.msra.mxu0 0
        %1154 = vmatprep.subr.bf16.mxu0 0
        %1155 = vmatpush1.bf16.xpose.msra.mxu0 0
        %1156 = vmatprep.subr.bf16.mxu0 0
        %1157 = vmatpush1.bf16.xpose.msra.mxu0 0
        %1158 = vmatprep.subr.bf16.mxu0 0
        %1159 = vmatpush1.bf16.xpose.msra.mxu0 0
        %1160 = vmatprep.subr.bf16.mxu0 0
        %1161 = vmatpush1.bf16.xpose.msra.mxu0 0
        %1162 = vmatprep.subr.bf16.mxu0 0
        %1163 = vmatpush1.bf16.xpose.msra.mxu0 0
        %1164 = vmatprep.subr.bf16.mxu0 0
        %1165 = vmatpush1.bf16.xpose.msra.mxu0 0
        %1166 = vmatprep.subr.bf16.mxu0 0
        %1167 = vmatpush1.bf16.xpose.msra.mxu0 0
        %1168 = vmatprep.subr.bf16.mxu0 0
        %1169 = vmatpush1.bf16.xpose.msra.mxu0 0
        %1170 = vmatprep.subr.bf16.mxu0 0
        %1171 = vmatpush1.bf16.xpose.msra.mxu0 0
        %1172 = vmatprep.subr.bf16.mxu0 0
        %1173 = vmatpush1.bf16.xpose.msra.mxu0 0
        %1174 = vmatprep.subr.bf16.mxu0 0
        %1175 = vmatpush1.bf16.xpose.msra.mxu0 0
        %1176 = vmatprep.subr.bf16.mxu0 0
        %1177 = vmatpush1.bf16.xpose.msra.mxu0 0
        %1178 = vmatprep.subr.bf16.mxu0 0
        %1179 = vmatpush1.bf16.xpose.msra.mxu0 0
        %1180 = vmatprep.mubr.bf16.mxu0 0
        %1181 = vmatmul.mubr.bf16.gmra.mrb[0].mxu0 %v1143
        %v1182 = vpop.f32.mrb[0].mxu0
        %v1183 = vadd.f32 0.0, %v1182
        %v1184 = vpop.f32.mrb[0].mxu0
        %v1185 = vpop.f32.mrb[0].mxu0
        %v1186 = vpop.f32.mrb[0].mxu0
        %1187 = vdwg.mxu0
        %v1188 = vsel %vm1028, %v1183, -inf
        %1189 = vmax.xlane.f32.xlu0 %v1188
        %v1190 = vpop.xlane.xlu0 %1189
        %v1191 = vsub.f32 %v1183, %v1190
        %v1192 = vmul.f32 %v1191, 1.442695
        %v1193 = vpow.pop %v1192
        %v1194 = vsel %vm1028, %v1193, 0.0
        %1195 = vadd.xlane.f32.xlu0 %v1194
        %v1196 = vpop.xlane.xlu0 %1195
        %v1197 = vrcp.pop %v1196
        %v1198 = vmul.f32 %v1193, %v1197
        %v1199 = vpack.c.bf16 %v1198, %v1198
        %1200 = vrot.lane.b32.xlu0 %v1027, 88
        %v1201 = vpop.permute.xlu0 %1200
        %v1203 = vsel %vm1028, %v1199, 0
        %v1206 = vsel %vm1093, %v1201, 0
        %1208 = vmatprep.subr.bf16.mxu0 0
        %1209 = vmatpush1.bf16.msra.mxu0 %v1206
        %1210 = vmatprep.subr.bf16.mxu0 0
        %1211 = vmatpush1.bf16.msra.mxu0 0
        %1212 = vmatprep.subr.bf16.mxu0 0
        %1213 = vmatpush1.bf16.msra.mxu0 0
        %1214 = vmatprep.subr.bf16.mxu0 0
        %1215 = vmatpush1.bf16.msra.mxu0 0
        %1216 = vmatprep.subr.bf16.mxu0 0
        %1217 = vmatpush1.bf16.msra.mxu0 0
        %1218 = vmatprep.subr.bf16.mxu0 0
        %1219 = vmatpush1.bf16.msra.mxu0 0
        %1220 = vmatprep.subr.bf16.mxu0 0
        %1221 = vmatpush1.bf16.msra.mxu0 0
        %1222 = vmatprep.subr.bf16.mxu0 0
        %1223 = vmatpush1.bf16.msra.mxu0 0
        %1224 = vmatprep.subr.bf16.mxu0 0
        %1225 = vmatpush1.bf16.msra.mxu0 0
        %1226 = vmatprep.subr.bf16.mxu0 0
        %1227 = vmatpush1.bf16.msra.mxu0 0
        %1228 = vmatprep.subr.bf16.mxu0 0
        %1229 = vmatpush1.bf16.msra.mxu0 0
        %1230 = vmatprep.subr.bf16.mxu0 0
        %1231 = vmatpush1.bf16.msra.mxu0 0
        %1232 = vmatprep.subr.bf16.mxu0 0
        %1233 = vmatpush1.bf16.msra.mxu0 0
        %1234 = vmatprep.subr.bf16.mxu0 0
        %1235 = vmatpush1.bf16.msra.mxu0 0
        %1236 = vmatprep.subr.bf16.mxu0 0
        %1237 = vmatpush1.bf16.msra.mxu0 0
        %1238 = vmatprep.subr.bf16.mxu0 0
        %1239 = vmatpush1.bf16.msra.mxu0 0
        %1240 = vmatprep.mubr.bf16.mxu0 0
        %1241 = vmatmul.mubr.bf16.gmra.mrb[0].mxu0 %v1203
        %v1242 = vpop.f32.mrb[0].mxu0
        %v1243 = vadd.f32 0.0, %v1242
        %v1244 = vpop.f32.mrb[0].mxu0
        %v1245 = vpop.f32.mrb[0].mxu0
        %v1246 = vpop.f32.mrb[0].mxu0
        %1247 = vdwg.mxu0
        %1248 = vrot.lane.b32.xlu0 %v1026, 112
        %v1249 = vpop.permute.xlu0 %1248
        %1250 = vrot.lane.b32.xlu0 %v1027, 112
        %v1251 = vpop.permute.xlu0 %1250
        %v1253 = vsel %vm1028, %v1249, 0
        %v1256 = vsel %vm1028, %v1251, 0
        %1258 = vmatprep.subr.bf16.mxu0 0
        %1259 = vmatpush1.bf16.xpose.msra.mxu0 %v1256
        %1260 = vmatprep.subr.bf16.mxu0 0
        %1261 = vmatpush1.bf16.xpose.msra.mxu0 0
        %1262 = vmatprep.subr.bf16.mxu0 0
        %1263 = vmatpush1.bf16.xpose.msra.mxu0 0
        %1264 = vmatprep.subr.bf16.mxu0 0
        %1265 = vmatpush1.bf16.xpose.msra.mxu0 0
        %1266 = vmatprep.subr.bf16.mxu0 0
        %1267 = vmatpush1.bf16.xpose.msra.mxu0 0
        %1268 = vmatprep.subr.bf16.mxu0 0
        %1269 = vmatpush1.bf16.xpose.msra.mxu0 0
        %1270 = vmatprep.subr.bf16.mxu0 0
        %1271 = vmatpush1.bf16.xpose.msra.mxu0 0
        %1272 = vmatprep.subr.bf16.mxu0 0
        %1273 = vmatpush1.bf16.xpose.msra.mxu0 0
        %1274 = vmatprep.subr.bf16.mxu0 0
        %1275 = vmatpush1.bf16.xpose.msra.mxu0 0
        %1276 = vmatprep.subr.bf16.mxu0 0
        %1277 = vmatpush1.bf16.xpose.msra.mxu0 0
        %1278 = vmatprep.subr.bf16.mxu0 0
        %1279 = vmatpush1.bf16.xpose.msra.mxu0 0
        %1280 = vmatprep.subr.bf16.mxu0 0
        %1281 = vmatpush1.bf16.xpose.msra.mxu0 0
        %1282 = vmatprep.subr.bf16.mxu0 0
        %1283 = vmatpush1.bf16.xpose.msra.mxu0 0
        %1284 = vmatprep.subr.bf16.mxu0 0
        %1285 = vmatpush1.bf16.xpose.msra.mxu0 0
        %1286 = vmatprep.subr.bf16.mxu0 0
        %1287 = vmatpush1.bf16.xpose.msra.mxu0 0
        %1288 = vmatprep.subr.bf16.mxu0 0
        %1289 = vmatpush1.bf16.xpose.msra.mxu0 0
        %1290 = vmatprep.mubr.bf16.mxu0 0
        %1291 = vmatmul.mubr.bf16.gmra.mrb[0].mxu0 %v1253
        %v1292 = vpop.f32.mrb[0].mxu0
        %v1293 = vadd.f32 0.0, %v1292
        %v1294 = vpop.f32.mrb[0].mxu0
        %v1295 = vpop.f32.mrb[0].mxu0
        %v1296 = vpop.f32.mrb[0].mxu0
        %1297 = vdwg.mxu0
        %v1298 = vsel %vm1028, %v1293, -inf
        %1299 = vmax.xlane.f32.xlu0 %v1298
        %v1300 = vpop.xlane.xlu0 %1299
        %v1301 = vsub.f32 %v1293, %v1300
        %v1302 = vmul.f32 %v1301, 1.442695
        %v1303 = vpow.pop %v1302
        %v1304 = vsel %vm1028, %v1303, 0.0
        %1305 = vadd.xlane.f32.xlu0 %v1304
        %v1306 = vpop.xlane.xlu0 %1305
        %v1307 = vrcp.pop %v1306
        %v1308 = vmul.f32 %v1303, %v1307
        %v1309 = vpack.c.bf16 %v1308, %v1308
        %1310 = vrot.lane.b32.xlu0 %v1027, 80
        %v1311 = vpop.permute.xlu0 %1310
        %v1313 = vsel %vm1028, %v1309, 0
        %v1316 = vsel %vm1093, %v1311, 0
        %1318 = vmatprep.subr.bf16.mxu0 0
        %1319 = vmatpush1.bf16.msra.mxu0 %v1316
        %1320 = vmatprep.subr.bf16.mxu0 0
        %1321 = vmatpush1.bf16.msra.mxu0 0
        %1322 = vmatprep.subr.bf16.mxu0 0
        %1323 = vmatpush1.bf16.msra.mxu0 0
        %1324 = vmatprep.subr.bf16.mxu0 0
        %1325 = vmatpush1.bf16.msra.mxu0 0
        %1326 = vmatprep.subr.bf16.mxu0 0
        %1327 = vmatpush1.bf16.msra.mxu0 0
        %1328 = vmatprep.subr.bf16.mxu0 0
        %1329 = vmatpush1.bf16.msra.mxu0 0
        %1330 = vmatprep.subr.bf16.mxu0 0
        %1331 = vmatpush1.bf16.msra.mxu0 0
        %1332 = vmatprep.subr.bf16.mxu0 0
        %1333 = vmatpush1.bf16.msra.mxu0 0
        %1334 = vmatprep.subr.bf16.mxu0 0
        %1335 = vmatpush1.bf16.msra.mxu0 0
        %1336 = vmatprep.subr.bf16.mxu0 0
        %1337 = vmatpush1.bf16.msra.mxu0 0
        %1338 = vmatprep.subr.bf16.mxu0 0
        %1339 = vmatpush1.bf16.msra.mxu0 0
        %1340 = vmatprep.subr.bf16.mxu0 0
        %1341 = vmatpush1.bf16.msra.mxu0 0
        %1342 = vmatprep.subr.bf16.mxu0 0
        %1343 = vmatpush1.bf16.msra.mxu0 0
        %1344 = vmatprep.subr.bf16.mxu0 0
        %1345 = vmatpush1.bf16.msra.mxu0 0
        %1346 = vmatprep.subr.bf16.mxu0 0
        %1347 = vmatpush1.bf16.msra.mxu0 0
        %1348 = vmatprep.subr.bf16.mxu0 0
        %1349 = vmatpush1.bf16.msra.mxu0 0
        %1350 = vmatprep.mubr.bf16.mxu0 0
        %1351 = vmatmul.mubr.bf16.gmra.mrb[0].mxu0 %v1313
        %v1352 = vpop.f32.mrb[0].mxu0
        %v1353 = vadd.f32 0.0, %v1352
        %v1354 = vpop.f32.mrb[0].mxu0
        %v1355 = vpop.f32.mrb[0].mxu0
        %v1356 = vpop.f32.mrb[0].mxu0
        %1357 = vdwg.mxu0
        %1358 = vrot.lane.b32.xlu0 %v1026, 104
        %v1359 = vpop.permute.xlu0 %1358
        %1360 = vrot.lane.b32.xlu0 %v1027, 104
        %v1361 = vpop.permute.xlu0 %1360
        %v1363 = vsel %vm1028, %v1359, 0
        %v1366 = vsel %vm1028, %v1361, 0
        %1368 = vmatprep.subr.bf16.mxu0 0
        %1369 = vmatpush1.bf16.xpose.msra.mxu0 %v1366
        %1370 = vmatprep.subr.bf16.mxu0 0
        %1371 = vmatpush1.bf16.xpose.msra.mxu0 0
        %1372 = vmatprep.subr.bf16.mxu0 0
        %1373 = vmatpush1.bf16.xpose.msra.mxu0 0
        %1374 = vmatprep.subr.bf16.mxu0 0
        %1375 = vmatpush1.bf16.xpose.msra.mxu0 0
        %1376 = vmatprep.subr.bf16.mxu0 0
        %1377 = vmatpush1.bf16.xpose.msra.mxu0 0
        %1378 = vmatprep.subr.bf16.mxu0 0
        %1379 = vmatpush1.bf16.xpose.msra.mxu0 0
        %1380 = vmatprep.subr.bf16.mxu0 0
        %1381 = vmatpush1.bf16.xpose.msra.mxu0 0
        %1382 = vmatprep.subr.bf16.mxu0 0
        %1383 = vmatpush1.bf16.xpose.msra.mxu0 0
        %1384 = vmatprep.subr.bf16.mxu0 0
        %1385 = vmatpush1.bf16.xpose.msra.mxu0 0
        %1386 = vmatprep.subr.bf16.mxu0 0
        %1387 = vmatpush1.bf16.xpose.msra.mxu0 0
        %1388 = vmatprep.subr.bf16.mxu0 0
        %1389 = vmatpush1.bf16.xpose.msra.mxu0 0
        %1390 = vmatprep.subr.bf16.mxu0 0
        %1391 = vmatpush1.bf16.xpose.msra.mxu0 0
        %1392 = vmatprep.subr.bf16.mxu0 0
        %1393 = vmatpush1.bf16.xpose.msra.mxu0 0
        %1394 = vmatprep.subr.bf16.mxu0 0
        %1395 = vmatpush1.bf16.xpose.msra.mxu0 0
        %1396 = vmatprep.subr.bf16.mxu0 0
        %1397 = vmatpush1.bf16.xpose.msra.mxu0 0
        %1398 = vmatprep.subr.bf16.mxu0 0
        %1399 = vmatpush1.bf16.xpose.msra.mxu0 0
        %1400 = vmatprep.mubr.bf16.mxu0 0
        %1401 = vmatmul.mubr.bf16.gmra.mrb[0].mxu0 %v1363
        %v1402 = vpop.f32.mrb[0].mxu0
        %v1403 = vadd.f32 0.0, %v1402
        %v1404 = vpop.f32.mrb[0].mxu0
        %v1405 = vpop.f32.mrb[0].mxu0
        %v1406 = vpop.f32.mrb[0].mxu0
        %1407 = vdwg.mxu0
        %v1408 = vsel %vm1028, %v1403, -inf
        %1409 = vmax.xlane.f32.xlu0 %v1408
        %v1410 = vpop.xlane.xlu0 %1409
        %v1411 = vsub.f32 %v1403, %v1410
        %v1412 = vmul.f32 %v1411, 1.442695
        %v1413 = vpow.pop %v1412
        %v1414 = vsel %vm1028, %v1413, 0.0
        %1415 = vadd.xlane.f32.xlu0 %v1414
        %v1416 = vpop.xlane.xlu0 %1415
        %v1417 = vrcp.pop %v1416
        %v1418 = vmul.f32 %v1413, %v1417
        %v1419 = vpack.c.bf16 %v1418, %v1418
        %1420 = vrot.lane.b32.xlu0 %v1027, 72
        %v1421 = vpop.permute.xlu0 %1420
        %v1423 = vsel %vm1028, %v1419, 0
        %v1426 = vsel %vm1093, %v1421, 0
        %1428 = vmatprep.subr.bf16.mxu0 0
        %1429 = vmatpush1.bf16.msra.mxu0 %v1426
        %1430 = vmatprep.subr.bf16.mxu0 0
        %1431 = vmatpush1.bf16.msra.mxu0 0
        %1432 = vmatprep.subr.bf16.mxu0 0
        %1433 = vmatpush1.bf16.msra.mxu0 0
        %1434 = vmatprep.subr.bf16.mxu0 0
        %1435 = vmatpush1.bf16.msra.mxu0 0
        %1436 = vmatprep.subr.bf16.mxu0 0
        %1437 = vmatpush1.bf16.msra.mxu0 0
        %1438 = vmatprep.subr.bf16.mxu0 0
        %1439 = vmatpush1.bf16.msra.mxu0 0
        %1440 = vmatprep.subr.bf16.mxu0 0
        %1441 = vmatpush1.bf16.msra.mxu0 0
        %1442 = vmatprep.subr.bf16.mxu0 0
        %1443 = vmatpush1.bf16.msra.mxu0 0
        %1444 = vmatprep.subr.bf16.mxu0 0
        %1445 = vmatpush1.bf16.msra.mxu0 0
        %1446 = vmatprep.subr.bf16.mxu0 0
        %1447 = vmatpush1.bf16.msra.mxu0 0
        %1448 = vmatprep.subr.bf16.mxu0 0
        %1449 = vmatpush1.bf16.msra.mxu0 0
        %1450 = vmatprep.subr.bf16.mxu0 0
        %1451 = vmatpush1.bf16.msra.mxu0 0
        %1452 = vmatprep.subr.bf16.mxu0 0
        %1453 = vmatpush1.bf16.msra.mxu0 0
        %1454 = vmatprep.subr.bf16.mxu0 0
        %1455 = vmatpush1.bf16.msra.mxu0 0
        %1456 = vmatprep.subr.bf16.mxu0 0
        %1457 = vmatpush1.bf16.msra.mxu0 0
        %1458 = vmatprep.subr.bf16.mxu0 0
        %1459 = vmatpush1.bf16.msra.mxu0 0
        %1460 = vmatprep.mubr.bf16.mxu0 0
        %1461 = vmatmul.mubr.bf16.gmra.mrb[0].mxu0 %v1423
        %v1462 = vpop.f32.mrb[0].mxu0
        %v1463 = vadd.f32 0.0, %v1462
        %v1464 = vpop.f32.mrb[0].mxu0
        %v1465 = vpop.f32.mrb[0].mxu0
        %v1466 = vpop.f32.mrb[0].mxu0
        %1467 = vdwg.mxu0
        %1469 = vrot.lane.b32.xlu0 %v1243, 8
        %v1470 = vpop.permute.xlu0 %1469
        %1473 = vrot.lane.b32.xlu0 %v1353, 16
        %v1474 = vpop.permute.xlu0 %1473
        %1477 = vrot.lane.b32.xlu0 %v1463, 24
        %v1478 = vpop.permute.xlu0 %1477
        %v1480 = vsel %vm1028, %v1132, %v1470
        %vm1481 = vcmask 130048
        %v1482 = vsel %vm1481, %v1480, %v1474
        %vm1483 = vcmask 195584
        %v1484 = vsel %vm1483, %v1482, %v1478
        %v1485 = vpack.c.bf16 %v1484, %v1484
        %v1487 = vlaneseq
        %v1488 = vshrl.u32 %v1487, 7
        %v1489 = vsub.s32 0, %v1488
        %v1490 = vrot.slane %v903, %v1489
        %v1496 = vunpack.c.l.b16 %v899
        %v1497 = vunpack.c.l.b16 %v900
        %v1498 = vunpack.c.l.b16 %v901
        %v1499 = vunpack.c.l.b16 %v902
        %v1500 = vpack.c.b16 %v1497, %v1496
        %v1501 = vpack.c.b16 %v1499, %v1498
        %v1505 = vsel %vm924, %v1485, 0
        %1507 = vmatprep.subr.bf16.mxu0 0
        %1508 = vmatpush1.bf16.msra.mxu0 %v1500
        %1509 = vmatprep.subr.bf16.mxu0 0
        %1510 = vmatpush1.bf16.msra.mxu0 %v1501
        %1511 = vmatprep.subr.bf16.mxu0 0
        %1512 = vmatpush1.bf16.msra.mxu0 0
        %1513 = vmatprep.subr.bf16.mxu0 0
        %1514 = vmatpush1.bf16.msra.mxu0 0
        %1515 = vmatprep.subr.bf16.mxu0 0
        %1516 = vmatpush1.bf16.msra.mxu0 0
        %1517 = vmatprep.subr.bf16.mxu0 0
        %1518 = vmatpush1.bf16.msra.mxu0 0
        %1519 = vmatprep.subr.bf16.mxu0 0
        %1520 = vmatpush1.bf16.msra.mxu0 0
        %1521 = vmatprep.subr.bf16.mxu0 0
        %1522 = vmatpush1.bf16.msra.mxu0 0
        %1523 = vmatprep.subr.bf16.mxu0 0
        %1524 = vmatpush1.bf16.msra.mxu0 0
        %1525 = vmatprep.subr.bf16.mxu0 0
        %1526 = vmatpush1.bf16.msra.mxu0 0
        %1527 = vmatprep.subr.bf16.mxu0 0
        %1528 = vmatpush1.bf16.msra.mxu0 0
        %1529 = vmatprep.subr.bf16.mxu0 0
        %1530 = vmatpush1.bf16.msra.mxu0 0
        %1531 = vmatprep.subr.bf16.mxu0 0
        %1532 = vmatpush1.bf16.msra.mxu0 0
        %1533 = vmatprep.subr.bf16.mxu0 0
        %1534 = vmatpush1.bf16.msra.mxu0 0
        %1535 = vmatprep.subr.bf16.mxu0 0
        %1536 = vmatpush1.bf16.msra.mxu0 0
        %1537 = vmatprep.subr.bf16.mxu0 0
        %1538 = vmatpush1.bf16.msra.mxu0 0
        %1539 = vmatprep.mubr.bf16.mxu0 0
        %1540 = vmatmul.mubr.bf16.gmra.mrb[0].mxu0 %v1505
        %v1541 = vpop.f32.mrb[0].mxu0
        %v1542 = vadd.f32 %v1490, %v1541
        %v1543 = vpop.f32.mrb[0].mxu0
        %v1544 = vpop.f32.mrb[0].mxu0
        %v1545 = vpop.f32.mrb[0].mxu0
        %1546 = vdwg.mxu0
        %v1547 = vadd.f32 %v888, %v1542
        %v1548 = vsel %vm924, %v1547, 0.0
        %1549 = vadd.xlane.f32.xlu0 %v1548
        %v1550 = vpop.xlane.xlu0 %1549
        %v1551 = vrcp.pop 32.0
        %v1552 = vmul.f32 %v1550, %v1551
        %v1553 = vsub.f32 %v1547, %v1552
        %v1554 = vmul.f32 %v1553, %v1553
        %v1555 = vsel %vm924, %v1554, 0.0
        %1556 = vadd.xlane.f32.xlu0 %v1555
        %v1557 = vpop.xlane.xlu0 %1556
        %v1558 = vmul.f32 %v1557, %v1551
        %v1559 = vadd.f32 %v1558, 1e-05
        %v1560 = vrsqrt.pop %v1559
        %v1561 = vmul.f32 %v1553, %v1560
        %v1563 = vlaneseq
        %v1564 = vshrl.u32 %v1563, 7
        %v1565 = vsub.s32 0, %v1564
        %v1566 = vrot.slane %v904, %v1565
        %v1568 = vmul.f32 %v1561, %v1566
        %v1570 = vlaneseq
        %v1571 = vshrl.u32 %v1570, 7
        %v1572 = vsub.s32 0, %v1571
        %v1573 = vrot.slane %v905, %v1572
        %v1575 = vadd.f32 %v1568, %v1573
        %v1576 = vpack.c.bf16 %v1575, %v1575
        %v1577 = vld [vmem:[%s10] sm:$0xf]
        %v1578 = vld [vmem:[%s10 + $0x4] sm:$0xf]
        %v1579 = vld [vmem:[%s10 + $0x8] sm:$0xf]
        %v1580 = vld [vmem:[%s10 + $0xc] sm:$0xf]
        %v1581 = vld [vmem:[#allocation7] sm:$0x1]
        %v1582 = vld [vmem:[%s12] sm:$0xf]
        %v1583 = vld [vmem:[%s12 + $0x4] sm:$0xf]
        %v1584 = vld [vmem:[%s12 + $0x8] sm:$0xf]
        %v1585 = vld [vmem:[%s12 + $0xc] sm:$0xf]
        %v1586 = vld [vmem:[#allocation9] sm:$0x1]
        %v1587 = vld [vmem:[#allocation10] sm:$0xf]
        %v1588 = vld [vmem:[#allocation10 + $0x4] sm:$0xf]
        %v1589 = vld [vmem:[#allocation10 + $0x8] sm:$0xf]
        %v1590 = vld [vmem:[#allocation10 + $0xc] sm:$0xf]
        %v1591 = vld [vmem:[#allocation12] sm:$0x1]
        %v1592 = vld [vmem:[%s16] sm:$0x1]
        %v1593 = vld [vmem:[#allocation13] sm:$0x1]
        %v1595 = vlaneseq
        %v1596 = vshrl.u32 %v1595, 7
        %v1597 = vsub.s32 0, %v1596
        %v1598 = vrot.slane %v1581, %v1597
        %v1604 = vunpack.c.l.b16 %v1577
        %v1605 = vunpack.c.l.b16 %v1578
        %v1606 = vunpack.c.l.b16 %v1579
        %v1607 = vunpack.c.l.b16 %v1580
        %v1608 = vpack.c.b16 %v1605, %v1604
        %v1609 = vpack.c.b16 %v1607, %v1606
        %v1613 = vsel %vm924, %v1576, 0
        %1615 = vmatprep.subr.bf16.mxu0 0
        %1616 = vmatpush1.bf16.msra.mxu0 %v1608
        %1617 = vmatprep.subr.bf16.mxu0 0
        %1618 = vmatpush1.bf16.msra.mxu0 %v1609
        %1619 = vmatprep.subr.bf16.mxu0 0
        %1620 = vmatpush1.bf16.msra.mxu0 0
        %1621 = vmatprep.subr.bf16.mxu0 0
        %1622 = vmatpush1.bf16.msra.mxu0 0
        %1623 = vmatprep.subr.bf16.mxu0 0
        %1624 = vmatpush1.bf16.msra.mxu0 0
        %1625 = vmatprep.subr.bf16.mxu0 0
        %1626 = vmatpush1.bf16.msra.mxu0 0
        %1627 = vmatprep.subr.bf16.mxu0 0
        %1628 = vmatpush1.bf16.msra.mxu0 0
        %1629 = vmatprep.subr.bf16.mxu0 0
        %1630 = vmatpush1.bf16.msra.mxu0 0
        %1631 = vmatprep.subr.bf16.mxu0 0
        %1632 = vmatpush1.bf16.msra.mxu0 0
        %1633 = vmatprep.subr.bf16.mxu0 0
        %1634 = vmatpush1.bf16.msra.mxu0 0
        %1635 = vmatprep.subr.bf16.mxu0 0
        %1636 = vmatpush1.bf16.msra.mxu0 0
        %1637 = vmatprep.subr.bf16.mxu0 0
        %1638 = vmatpush1.bf16.msra.mxu0 0
        %1639 = vmatprep.subr.bf16.mxu0 0
        %1640 = vmatpush1.bf16.msra.mxu0 0
        %1641 = vmatprep.subr.bf16.mxu0 0
        %1642 = vmatpush1.bf16.msra.mxu0 0
        %1643 = vmatprep.subr.bf16.mxu0 0
        %1644 = vmatpush1.bf16.msra.mxu0 0
        %1645 = vmatprep.subr.bf16.mxu0 0
        %1646 = vmatpush1.bf16.msra.mxu0 0
        %1647 = vmatprep.mubr.bf16.mxu0 0
        %1648 = vmatmul.mubr.bf16.gmra.mrb[0].mxu0 %v1613
        %v1649 = vpop.f32.mrb[0].mxu0
        %v1650 = vadd.f32 %v1598, %v1649
        %v1651 = vpop.f32.mrb[0].mxu0
        %v1652 = vpop.f32.mrb[0].mxu0
        %v1653 = vpop.f32.mrb[0].mxu0
        %1654 = vdwg.mxu0
        %v1656 = vlaneseq
        %v1657 = vshrl.u32 %v1656, 7
        %v1658 = vsub.s32 0, %v1657
        %v1659 = vrot.slane %v1586, %v1658
        %v1665 = vunpack.c.l.b16 %v1582
        %v1666 = vunpack.c.l.b16 %v1583
        %v1667 = vunpack.c.l.b16 %v1584
        %v1668 = vunpack.c.l.b16 %v1585
        %v1669 = vpack.c.b16 %v1666, %v1665
        %v1670 = vpack.c.b16 %v1668, %v1667
        %v1674 = vsel %vm924, %v887, 0
        %1676 = vmatprep.subr.bf16.mxu0 0
        %1677 = vmatpush1.bf16.msra.mxu0 %v1669
        %1678 = vmatprep.subr.bf16.mxu0 0
        %1679 = vmatpush1.bf16.msra.mxu0 %v1670
        %1680 = vmatprep.subr.bf16.mxu0 0
        %1681 = vmatpush1.bf16.msra.mxu0 0
        %1682 = vmatprep.subr.bf16.mxu0 0
        %1683 = vmatpush1.bf16.msra.mxu0 0
        %1684 = vmatprep.subr.bf16.mxu0 0
        %1685 = vmatpush1.bf16.msra.mxu0 0
        %1686 = vmatprep.subr.bf16.mxu0 0
        %1687 = vmatpush1.bf16.msra.mxu0 0
        %1688 = vmatprep.subr.bf16.mxu0 0
        %1689 = vmatpush1.bf16.msra.mxu0 0
        %1690 = vmatprep.subr.bf16.mxu0 0
        %1691 = vmatpush1.bf16.msra.mxu0 0
        %1692 = vmatprep.subr.bf16.mxu0 0
        %1693 = vmatpush1.bf16.msra.mxu0 0
        %1694 = vmatprep.subr.bf16.mxu0 0
        %1695 = vmatpush1.bf16.msra.mxu0 0
        %1696 = vmatprep.subr.bf16.mxu0 0
        %1697 = vmatpush1.bf16.msra.mxu0 0
        %1698 = vmatprep.subr.bf16.mxu0 0
        %1699 = vmatpush1.bf16.msra.mxu0 0
        %1700 = vmatprep.subr.bf16.mxu0 0
        %1701 = vmatpush1.bf16.msra.mxu0 0
        %1702 = vmatprep.subr.bf16.mxu0 0
        %1703 = vmatpush1.bf16.msra.mxu0 0
        %1704 = vmatprep.subr.bf16.mxu0 0
        %1705 = vmatpush1.bf16.msra.mxu0 0
        %1706 = vmatprep.subr.bf16.mxu0 0
        %1707 = vmatpush1.bf16.msra.mxu0 0
        %1708 = vmatprep.mubr.bf16.mxu0 0
        %1709 = vmatmul.mubr.bf16.gmra.mrb[0].mxu0 %v1674
        %v1710 = vpop.f32.mrb[0].mxu0
        %v1711 = vadd.f32 %v1659, %v1710
        %v1712 = vpop.f32.mrb[0].mxu0
        %v1713 = vpop.f32.mrb[0].mxu0
        %v1714 = vpop.f32.mrb[0].mxu0
        %1715 = vdwg.mxu0
        %v1716 = vpack.c.bf16 %v1650, %v1650
        %v1717 = vpack.c.bf16 %v1711, %v1711
        %v1719 = vsel %vm1028, %v1716, 0
        %v1722 = vsel %vm1028, %v1717, 0
        %1724 = vmatprep.subr.bf16.mxu0 0
        %1725 = vmatpush1.bf16.xpose.msra.mxu0 %v1722
        %1726 = vmatprep.subr.bf16.mxu0 0
        %1727 = vmatpush1.bf16.xpose.msra.mxu0 0
        %1728 = vmatprep.subr.bf16.mxu0 0
        %1729 = vmatpush1.bf16.xpose.msra.mxu0 0
        %1730 = vmatprep.subr.bf16.mxu0 0
        %1731 = vmatpush1.bf16.xpose.msra.mxu0 0
        %1732 = vmatprep.subr.bf16.mxu0 0
        %1733 = vmatpush1.bf16.xpose.msra.mxu0 0
        %1734 = vmatprep.subr.bf16.mxu0 0
        %1735 = vmatpush1.bf16.xpose.msra.mxu0 0
        %1736 = vmatprep.subr.bf16.mxu0 0
        %1737 = vmatpush1.bf16.xpose.msra.mxu0 0
        %1738 = vmatprep.subr.bf16.mxu0 0
        %1739 = vmatpush1.bf16.xpose.msra.mxu0 0
        %1740 = vmatprep.subr.bf16.mxu0 0
        %1741 = vmatpush1.bf16.xpose.msra.mxu0 0
        %1742 = vmatprep.subr.bf16.mxu0 0
        %1743 = vmatpush1.bf16.xpose.msra.mxu0 0
        %1744 = vmatprep.subr.bf16.mxu0 0
        %1745 = vmatpush1.bf16.xpose.msra.mxu0 0
        %1746 = vmatprep.subr.bf16.mxu0 0
        %1747 = vmatpush1.bf16.xpose.msra.mxu0 0
        %1748 = vmatprep.subr.bf16.mxu0 0
        %1749 = vmatpush1.bf16.xpose.msra.mxu0 0
        %1750 = vmatprep.subr.bf16.mxu0 0
        %1751 = vmatpush1.bf16.xpose.msra.mxu0 0
        %1752 = vmatprep.subr.bf16.mxu0 0
        %1753 = vmatpush1.bf16.xpose.msra.mxu0 0
        %1754 = vmatprep.subr.bf16.mxu0 0
        %1755 = vmatpush1.bf16.xpose.msra.mxu0 0
        %1756 = vmatprep.mubr.bf16.mxu0 0
        %1757 = vmatmul.mubr.bf16.gmra.mrb[0].mxu0 %v1719
        %v1758 = vpop.f32.mrb[0].mxu0
        %v1759 = vadd.f32 0.0, %v1758
        %v1760 = vpop.f32.mrb[0].mxu0
        %v1761 = vpop.f32.mrb[0].mxu0
        %v1762 = vpop.f32.mrb[0].mxu0
        %1763 = vdwg.mxu0
        %v1764 = vsel %vm1028, %v1759, -inf
        %1765 = vmax.xlane.f32.xlu0 %v1764
        %v1766 = vpop.xlane.xlu0 %1765
        %v1767 = vsub.f32 %v1759, %v1766
        %v1768 = vmul.f32 %v1767, 1.442695
        %v1769 = vpow.pop %v1768
        %v1770 = vsel %vm1028, %v1769, 0.0
        %1771 = vadd.xlane.f32.xlu0 %v1770
        %v1772 = vpop.xlane.xlu0 %1771
        %v1773 = vrcp.pop %v1772
        %v1774 = vmul.f32 %v1769, %v1773
        %v1775 = vpack.c.bf16 %v1774, %v1774
        %1777 = vrot.lane.b32.xlu0 %v1717, 96
        %v1778 = vpop.permute.xlu0 %1777
        %v1780 = vsel %vm1028, %v1775, 0
        %v1783 = vsel %vm1093, %v1778, 0
        %1785 = vmatprep.subr.bf16.mxu0 0
        %1786 = vmatpush1.bf16.msra.mxu0 %v1783
        %1787 = vmatprep.subr.bf16.mxu0 0
        %1788 = vmatpush1.bf16.msra.mxu0 0
        %1789 = vmatprep.subr.bf16.mxu0 0
        %1790 = vmatpush1.bf16.msra.mxu0 0
        %1791 = vmatprep.subr.bf16.mxu0 0
        %1792 = vmatpush1.bf16.msra.mxu0 0
        %1793 = vmatprep.subr.bf16.mxu0 0
        %1794 = vmatpush1.bf16.msra.mxu0 0
        %1795 = vmatprep.subr.bf16.mxu0 0
        %1796 = vmatpush1.bf16.msra.mxu0 0
        %1797 = vmatprep.subr.bf16.mxu0 0
        %1798 = vmatpush1.bf16.msra.mxu0 0
        %1799 = vmatprep.subr.bf16.mxu0 0
        %1800 = vmatpush1.bf16.msra.mxu0 0
        %1801 = vmatprep.subr.bf16.mxu0 0
        %1802 = vmatpush1.bf16.msra.mxu0 0
        %1803 = vmatprep.subr.bf16.mxu0 0
        %1804 = vmatpush1.bf16.msra.mxu0 0
        %1805 = vmatprep.subr.bf16.mxu0 0
        %1806 = vmatpush1.bf16.msra.mxu0 0
        %1807 = vmatprep.subr.bf16.mxu0 0
        %1808 = vmatpush1.bf16.msra.mxu0 0
        %1809 = vmatprep.subr.bf16.mxu0 0
        %1810 = vmatpush1.bf16.msra.mxu0 0
        %1811 = vmatprep.subr.bf16.mxu0 0
        %1812 = vmatpush1.bf16.msra.mxu0 0
        %1813 = vmatprep.subr.bf16.mxu0 0
        %1814 = vmatpush1.bf16.msra.mxu0 0
        %1815 = vmatprep.subr.bf16.mxu0 0
        %1816 = vmatpush1.bf16.msra.mxu0 0
        %1817 = vmatprep.mubr.bf16.mxu0 0
        %1818 = vmatmul.mubr.bf16.gmra.mrb[0].mxu0 %v1780
        %v1819 = vpop.f32.mrb[0].mxu0
        %v1820 = vadd.f32 0.0, %v1819
        %v1821 = vpop.f32.mrb[0].mxu0
        %v1822 = vpop.f32.mrb[0].mxu0
        %v1823 = vpop.f32.mrb[0].mxu0
        %1824 = vdwg.mxu0
        %1826 = vrot.lane.b32.xlu0 %v1716, 120
        %v1827 = vpop.permute.xlu0 %1826
        %1828 = vrot.lane.b32.xlu0 %v1717, 120
        %v1829 = vpop.permute.xlu0 %1828
        %v1831 = vsel %vm1028, %v1827, 0
        %v1834 = vsel %vm1028, %v1829, 0
        %1836 = vmatprep.subr.bf16.mxu0 0
        %1837 = vmatpush1.bf16.xpose.msra.mxu0 %v1834
        %1838 = vmatprep.subr.bf16.mxu0 0
        %1839 = vmatpush1.bf16.xpose.msra.mxu0 0
        %1840 = vmatprep.subr.bf16.mxu0 0
        %1841 = vmatpush1.bf16.xpose.msra.mxu0 0
        %1842 = vmatprep.subr.bf16.mxu0 0
        %1843 = vmatpush1.bf16.xpose.msra.mxu0 0
        %1844 = vmatprep.subr.bf16.mxu0 0
        %1845 = vmatpush1.bf16.xpose.msra.mxu0 0
        %1846 = vmatprep.subr.bf16.mxu0 0
        %1847 = vmatpush1.bf16.xpose.msra.mxu0 0
        %1848 = vmatprep.subr.bf16.mxu0 0
        %1849 = vmatpush1.bf16.xpose.msra.mxu0 0
        %1850 = vmatprep.subr.bf16.mxu0 0
        %1851 = vmatpush1.bf16.xpose.msra.mxu0 0
        %1852 = vmatprep.subr.bf16.mxu0 0
        %1853 = vmatpush1.bf16.xpose.msra.mxu0 0
        %1854 = vmatprep.subr.bf16.mxu0 0
        %1855 = vmatpush1.bf16.xpose.msra.mxu0 0
        %1856 = vmatprep.subr.bf16.mxu0 0
        %1857 = vmatpush1.bf16.xpose.msra.mxu0 0
        %1858 = vmatprep.subr.bf16.mxu0 0
        %1859 = vmatpush1.bf16.xpose.msra.mxu0 0
        %1860 = vmatprep.subr.bf16.mxu0 0
        %1861 = vmatpush1.bf16.xpose.msra.mxu0 0
        %1862 = vmatprep.subr.bf16.mxu0 0
        %1863 = vmatpush1.bf16.xpose.msra.mxu0 0
        %1864 = vmatprep.subr.bf16.mxu0 0
        %1865 = vmatpush1.bf16.xpose.msra.mxu0 0
        %1866 = vmatprep.subr.bf16.mxu0 0
        %1867 = vmatpush1.bf16.xpose.msra.mxu0 0
        %1868 = vmatprep.mubr.bf16.mxu0 0
        %1869 = vmatmul.mubr.bf16.gmra.mrb[0].mxu0 %v1831
        %v1870 = vpop.f32.mrb[0].mxu0
        %v1871 = vadd.f32 0.0, %v1870
        %v1872 = vpop.f32.mrb[0].mxu0
        %v1873 = vpop.f32.mrb[0].mxu0
        %v1874 = vpop.f32.mrb[0].mxu0
        %1875 = vdwg.mxu0
        %v1876 = vsel %vm1028, %v1871, -inf
        %1877 = vmax.xlane.f32.xlu0 %v1876
        %v1878 = vpop.xlane.xlu0 %1877
        %v1879 = vsub.f32 %v1871, %v1878
        %v1880 = vmul.f32 %v1879, 1.442695
        %v1881 = vpow.pop %v1880
        %v1882 = vsel %vm1028, %v1881, 0.0
        %1883 = vadd.xlane.f32.xlu0 %v1882
        %v1884 = vpop.xlane.xlu0 %1883
        %v1885 = vrcp.pop %v1884
        %v1886 = vmul.f32 %v1881, %v1885
        %v1887 = vpack.c.bf16 %v1886, %v1886
        %1888 = vrot.lane.b32.xlu0 %v1717, 88
        %v1889 = vpop.permute.xlu0 %1888
        %v1891 = vsel %vm1028, %v1887, 0
        %v1894 = vsel %vm1093, %v1889, 0
        %1896 = vmatprep.subr.bf16.mxu0 0
        %1897 = vmatpush1.bf16.msra.mxu0 %v1894
        %1898 = vmatprep.subr.bf16.mxu0 0
        %1899 = vmatpush1.bf16.msra.mxu0 0
        %1900 = vmatprep.subr.bf16.mxu0 0
        %1901 = vmatpush1.bf16.msra.mxu0 0
        %1902 = vmatprep.subr.bf16.mxu0 0
        %1903 = vmatpush1.bf16.msra.mxu0 0
        %1904 = vmatprep.subr.bf16.mxu0 0
        %1905 = vmatpush1.bf16.msra.mxu0 0
        %1906 = vmatprep.subr.bf16.mxu0 0
        %1907 = vmatpush1.bf16.msra.mxu0 0
        %1908 = vmatprep.subr.bf16.mxu0 0
        %1909 = vmatpush1.bf16.msra.mxu0 0
        %1910 = vmatprep.subr.bf16.mxu0 0
        %1911 = vmatpush1.bf16.msra.mxu0 0
        %1912 = vmatprep.subr.bf16.mxu0 0
        %1913 = vmatpush1.bf16.msra.mxu0 0
        %1914 = vmatprep.subr.bf16.mxu0 0
        %1915 = vmatpush1.bf16.msra.mxu0 0
        %1916 = vmatprep.subr.bf16.mxu0 0
        %1917 = vmatpush1.bf16.msra.mxu0 0
        %1918 = vmatprep.subr.bf16.mxu0 0
        %1919 = vmatpush1.bf16.msra.mxu0 0
        %1920 = vmatprep.subr.bf16.mxu0 0
        %1921 = vmatpush1.bf16.msra.mxu0 0
        %1922 = vmatprep.subr.bf16.mxu0 0
        %1923 = vmatpush1.bf16.msra.mxu0 0
        %1924 = vmatprep.subr.bf16.mxu0 0
        %1925 = vmatpush1.bf16.msra.mxu0 0
        %1926 = vmatprep.subr.bf16.mxu0 0
        %1927 = vmatpush1.bf16.msra.mxu0 0
        %1928 = vmatprep.mubr.bf16.mxu0 0
        %1929 = vmatmul.mubr.bf16.gmra.mrb[0].mxu0 %v1891
        %v1930 = vpop.f32.mrb[0].mxu0
        %v1931 = vadd.f32 0.0, %v1930
        %v1932 = vpop.f32.mrb[0].mxu0
        %v1933 = vpop.f32.mrb[0].mxu0
        %v1934 = vpop.f32.mrb[0].mxu0
        %1935 = vdwg.mxu0
        %1936 = vrot.lane.b32.xlu0 %v1716, 112
        %v1937 = vpop.permute.xlu0 %1936
        %1938 = vrot.lane.b32.xlu0 %v1717, 112
        %v1939 = vpop.permute.xlu0 %1938
        %v1941 = vsel %vm1028, %v1937, 0
        %v1944 = vsel %vm1028, %v1939, 0
        %1946 = vmatprep.subr.bf16.mxu0 0
        %1947 = vmatpush1.bf16.xpose.msra.mxu0 %v1944
        %1948 = vmatprep.subr.bf16.mxu0 0
        %1949 = vmatpush1.bf16.xpose.msra.mxu0 0
        %1950 = vmatprep.subr.bf16.mxu0 0
        %1951 = vmatpush1.bf16.xpose.msra.mxu0 0
        %1952 = vmatprep.subr.bf16.mxu0 0
        %1953 = vmatpush1.bf16.xpose.msra.mxu0 0
        %1954 = vmatprep.subr.bf16.mxu0 0
        %1955 = vmatpush1.bf16.xpose.msra.mxu0 0
        %1956 = vmatprep.subr.bf16.mxu0 0
        %1957 = vmatpush1.bf16.xpose.msra.mxu0 0
        %1958 = vmatprep.subr.bf16.mxu0 0
        %1959 = vmatpush1.bf16.xpose.msra.mxu0 0
        %1960 = vmatprep.subr.bf16.mxu0 0
        %1961 = vmatpush1.bf16.xpose.msra.mxu0 0
        %1962 = vmatprep.subr.bf16.mxu0 0
        %1963 = vmatpush1.bf16.xpose.msra.mxu0 0
        %1964 = vmatprep.subr.bf16.mxu0 0
        %1965 = vmatpush1.bf16.xpose.msra.mxu0 0
        %1966 = vmatprep.subr.bf16.mxu0 0
        %1967 = vmatpush1.bf16.xpose.msra.mxu0 0
        %1968 = vmatprep.subr.bf16.mxu0 0
        %1969 = vmatpush1.bf16.xpose.msra.mxu0 0
        %1970 = vmatprep.subr.bf16.mxu0 0
        %1971 = vmatpush1.bf16.xpose.msra.mxu0 0
        %1972 = vmatprep.subr.bf16.mxu0 0
        %1973 = vmatpush1.bf16.xpose.msra.mxu0 0
        %1974 = vmatprep.subr.bf16.mxu0 0
        %1975 = vmatpush1.bf16.xpose.msra.mxu0 0
        %1976 = vmatprep.subr.bf16.mxu0 0
        %1977 = vmatpush1.bf16.xpose.msra.mxu0 0
        %1978 = vmatprep.mubr.bf16.mxu0 0
        %1979 = vmatmul.mubr.bf16.gmra.mrb[0].mxu0 %v1941
        %v1980 = vpop.f32.mrb[0].mxu0
        %v1981 = vadd.f32 0.0, %v1980
        %v1982 = vpop.f32.mrb[0].mxu0
        %v1983 = vpop.f32.mrb[0].mxu0
        %v1984 = vpop.f32.mrb[0].mxu0
        %1985 = vdwg.mxu0
        %v1986 = vsel %vm1028, %v1981, -inf
        %1987 = vmax.xlane.f32.xlu0 %v1986
        %v1988 = vpop.xlane.xlu0 %1987
        %v1989 = vsub.f32 %v1981, %v1988
        %v1990 = vmul.f32 %v1989, 1.442695
        %v1991 = vpow.pop %v1990
        %v1992 = vsel %vm1028, %v1991, 0.0
        %1993 = vadd.xlane.f32.xlu0 %v1992
        %v1994 = vpop.xlane.xlu0 %1993
        %v1995 = vrcp.pop %v1994
        %v1996 = vmul.f32 %v1991, %v1995
        %v1997 = vpack.c.bf16 %v1996, %v1996
        %1998 = vrot.lane.b32.xlu0 %v1717, 80
        %v1999 = vpop.permute.xlu0 %1998
        %v2001 = vsel %vm1028, %v1997, 0
        %v2004 = vsel %vm1093, %v1999, 0
        %2006 = vmatprep.subr.bf16.mxu0 0
        %2007 = vmatpush1.bf16.msra.mxu0 %v2004
        %2008 = vmatprep.subr.bf16.mxu0 0
        %2009 = vmatpush1.bf16.msra.mxu0 0
        %2010 = vmatprep.subr.bf16.mxu0 0
        %2011 = vmatpush1.bf16.msra.mxu0 0
        %2012 = vmatprep.subr.bf16.mxu0 0
        %2013 = vmatpush1.bf16.msra.mxu0 0
        %2014 = vmatprep.subr.bf16.mxu0 0
        %2015 = vmatpush1.bf16.msra.mxu0 0
        %2016 = vmatprep.subr.bf16.mxu0 0
        %2017 = vmatpush1.bf16.msra.mxu0 0
        %2018 = vmatprep.subr.bf16.mxu0 0
        %2019 = vmatpush1.bf16.msra.mxu0 0
        %2020 = vmatprep.subr.bf16.mxu0 0
        %2021 = vmatpush1.bf16.msra.mxu0 0
        %2022 = vmatprep.subr.bf16.mxu0 0
        %2023 = vmatpush1.bf16.msra.mxu0 0
        %2024 = vmatprep.subr.bf16.mxu0 0
        %2025 = vmatpush1.bf16.msra.mxu0 0
        %2026 = vmatprep.subr.bf16.mxu0 0
        %2027 = vmatpush1.bf16.msra.mxu0 0
        %2028 = vmatprep.subr.bf16.mxu0 0
        %2029 = vmatpush1.bf16.msra.mxu0 0
        %2030 = vmatprep.subr.bf16.mxu0 0
        %2031 = vmatpush1.bf16.msra.mxu0 0
        %2032 = vmatprep.subr.bf16.mxu0 0
        %2033 = vmatpush1.bf16.msra.mxu0 0
        %2034 = vmatprep.subr.bf16.mxu0 0
        %2035 = vmatpush1.bf16.msra.mxu0 0
        %2036 = vmatprep.subr.bf16.mxu0 0
        %2037 = vmatpush1.bf16.msra.mxu0 0
        %2038 = vmatprep.mubr.bf16.mxu0 0
        %2039 = vmatmul.mubr.bf16.gmra.mrb[0].mxu0 %v2001
        %v2040 = vpop.f32.mrb[0].mxu0
        %v2041 = vadd.f32 0.0, %v2040
        %v2042 = vpop.f32.mrb[0].mxu0
        %v2043 = vpop.f32.mrb[0].mxu0
        %v2044 = vpop.f32.mrb[0].mxu0
        %2045 = vdwg.mxu0
        %2046 = vrot.lane.b32.xlu0 %v1716, 104
        %v2047 = vpop.permute.xlu0 %2046
        %2048 = vrot.lane.b32.xlu0 %v1717, 104
        %v2049 = vpop.permute.xlu0 %2048
        %v2051 = vsel %vm1028, %v2047, 0
        %v2054 = vsel %vm1028, %v2049, 0
        %2056 = vmatprep.subr.bf16.mxu0 0
        %2057 = vmatpush1.bf16.xpose.msra.mxu0 %v2054
        %2058 = vmatprep.subr.bf16.mxu0 0
        %2059 = vmatpush1.bf16.xpose.msra.mxu0 0
        %2060 = vmatprep.subr.bf16.mxu0 0
        %2061 = vmatpush1.bf16.xpose.msra.mxu0 0
        %2062 = vmatprep.subr.bf16.mxu0 0
        %2063 = vmatpush1.bf16.xpose.msra.mxu0 0
        %2064 = vmatprep.subr.bf16.mxu0 0
        %2065 = vmatpush1.bf16.xpose.msra.mxu0 0
        %2066 = vmatprep.subr.bf16.mxu0 0
        %2067 = vmatpush1.bf16.xpose.msra.mxu0 0
        %2068 = vmatprep.subr.bf16.mxu0 0
        %2069 = vmatpush1.bf16.xpose.msra.mxu0 0
        %2070 = vmatprep.subr.bf16.mxu0 0
        %2071 = vmatpush1.bf16.xpose.msra.mxu0 0
        %2072 = vmatprep.subr.bf16.mxu0 0
        %2073 = vmatpush1.bf16.xpose.msra.mxu0 0
        %2074 = vmatprep.subr.bf16.mxu0 0
        %2075 = vmatpush1.bf16.xpose.msra.mxu0 0
        %2076 = vmatprep.subr.bf16.mxu0 0
        %2077 = vmatpush1.bf16.xpose.msra.mxu0 0
        %2078 = vmatprep.subr.bf16.mxu0 0
        %2079 = vmatpush1.bf16.xpose.msra.mxu0 0
        %2080 = vmatprep.subr.bf16.mxu0 0
        %2081 = vmatpush1.bf16.xpose.msra.mxu0 0
        %2082 = vmatprep.subr.bf16.mxu0 0
        %2083 = vmatpush1.bf16.xpose.msra.mxu0 0
        %2084 = vmatprep.subr.bf16.mxu0 0
        %2085 = vmatpush1.bf16.xpose.msra.mxu0 0
        %2086 = vmatprep.subr.bf16.mxu0 0
        %2087 = vmatpush1.bf16.xpose.msra.mxu0 0
        %2088 = vmatprep.mubr.bf16.mxu0 0
        %2089 = vmatmul.mubr.bf16.gmra.mrb[0].mxu0 %v2051
        %v2090 = vpop.f32.mrb[0].mxu0
        %v2091 = vadd.f32 0.0, %v2090
        %v2092 = vpop.f32.mrb[0].mxu0
        %v2093 = vpop.f32.mrb[0].mxu0
        %v2094 = vpop.f32.mrb[0].mxu0
        %2095 = vdwg.mxu0
        %v2096 = vsel %vm1028, %v2091, -inf
        %2097 = vmax.xlane.f32.xlu0 %v2096
        %v2098 = vpop.xlane.xlu0 %2097
        %v2099 = vsub.f32 %v2091, %v2098
        %v2100 = vmul.f32 %v2099, 1.442695
        %v2101 = vpow.pop %v2100
        %v2102 = vsel %vm1028, %v2101, 0.0
        %2103 = vadd.xlane.f32.xlu0 %v2102
        %v2104 = vpop.xlane.xlu0 %2103
        %v2105 = vrcp.pop %v2104
        %v2106 = vmul.f32 %v2101, %v2105
        %v2107 = vpack.c.bf16 %v2106, %v2106
        %2108 = vrot.lane.b32.xlu0 %v1717, 72
        %v2109 = vpop.permute.xlu0 %2108
        %v2111 = vsel %vm1028, %v2107, 0
        %v2114 = vsel %vm1093, %v2109, 0
        %2116 = vmatprep.subr.bf16.mxu0 0
        %2117 = vmatpush1.bf16.msra.mxu0 %v2114
        %2118 = vmatprep.subr.bf16.mxu0 0
        %2119 = vmatpush1.bf16.msra.mxu0 0
        %2120 = vmatprep.subr.bf16.mxu0 0
        %2121 = vmatpush1.bf16.msra.mxu0 0
        %2122 = vmatprep.subr.bf16.mxu0 0
        %2123 = vmatpush1.bf16.msra.mxu0 0
        %2124 = vmatprep.subr.bf16.mxu0 0
        %2125 = vmatpush1.bf16.msra.mxu0 0
        %2126 = vmatprep.subr.bf16.mxu0 0
        %2127 = vmatpush1.bf16.msra.mxu0 0
        %2128 = vmatprep.subr.bf16.mxu0 0
        %2129 = vmatpush1.bf16.msra.mxu0 0
        %2130 = vmatprep.subr.bf16.mxu0 0
        %2131 = vmatpush1.bf16.msra.mxu0 0
        %2132 = vmatprep.subr.bf16.mxu0 0
        %2133 = vmatpush1.bf16.msra.mxu0 0
        %2134 = vmatprep.subr.bf16.mxu0 0
        %2135 = vmatpush1.bf16.msra.mxu0 0
        %2136 = vmatprep.subr.bf16.mxu0 0
        %2137 = vmatpush1.bf16.msra.mxu0 0
        %2138 = vmatprep.subr.bf16.mxu0 0
        %2139 = vmatpush1.bf16.msra.mxu0 0
        %2140 = vmatprep.subr.bf16.mxu0 0
        %2141 = vmatpush1.bf16.msra.mxu0 0
        %2142 = vmatprep.subr.bf16.mxu0 0
        %2143 = vmatpush1.bf16.msra.mxu0 0
        %2144 = vmatprep.subr.bf16.mxu0 0
        %2145 = vmatpush1.bf16.msra.mxu0 0
        %2146 = vmatprep.subr.bf16.mxu0 0
        %2147 = vmatpush1.bf16.msra.mxu0 0
        %2148 = vmatprep.mubr.bf16.mxu0 0
        %2149 = vmatmul.mubr.bf16.gmra.mrb[0].mxu0 %v2111
        %v2150 = vpop.f32.mrb[0].mxu0
        %v2151 = vadd.f32 0.0, %v2150
        %v2152 = vpop.f32.mrb[0].mxu0
        %v2153 = vpop.f32.mrb[0].mxu0
        %v2154 = vpop.f32.mrb[0].mxu0
        %2155 = vdwg.mxu0
        %2157 = vrot.lane.b32.xlu0 %v1931, 8
        %v2158 = vpop.permute.xlu0 %2157
        %2161 = vrot.lane.b32.xlu0 %v2041, 16
        %v2162 = vpop.permute.xlu0 %2161
        %2165 = vrot.lane.b32.xlu0 %v2151, 24
        %v2166 = vpop.permute.xlu0 %2165
        %v2168 = vsel %vm1028, %v1820, %v2158
        %v2169 = vsel %vm1481, %v2168, %v2162
        %v2170 = vsel %vm1483, %v2169, %v2166
        %v2171 = vpack.c.bf16 %v2170, %v2170
        %v2173 = vlaneseq
        %v2174 = vshrl.u32 %v2173, 7
        %v2175 = vsub.s32 0, %v2174
        %v2176 = vrot.slane %v1591, %v2175
        %v2182 = vunpack.c.l.b16 %v1587
        %v2183 = vunpack.c.l.b16 %v1588
        %v2184 = vunpack.c.l.b16 %v1589
        %v2185 = vunpack.c.l.b16 %v1590
        %v2186 = vpack.c.b16 %v2183, %v2182
        %v2187 = vpack.c.b16 %v2185, %v2184
        %v2191 = vsel %vm924, %v2171, 0
        %2193 = vmatprep.subr.bf16.mxu0 0
        %2194 = vmatpush1.bf16.msra.mxu0 %v2186
        %2195 = vmatprep.subr.bf16.mxu0 0
        %2196 = vmatpush1.bf16.msra.mxu0 %v2187
        %2197 = vmatprep.subr.bf16.mxu0 0
        %2198 = vmatpush1.bf16.msra.mxu0 0
        %2199 = vmatprep.subr.bf16.mxu0 0
        %2200 = vmatpush1.bf16.msra.mxu0 0
        %2201 = vmatprep.subr.bf16.mxu0 0
        %2202 = vmatpush1.bf16.msra.mxu0 0
        %2203 = vmatprep.subr.bf16.mxu0 0
        %2204 = vmatpush1.bf16.msra.mxu0 0
        %2205 = vmatprep.subr.bf16.mxu0 0
        %2206 = vmatpush1.bf16.msra.mxu0 0
        %2207 = vmatprep.subr.bf16.mxu0 0
        %2208 = vmatpush1.bf16.msra.mxu0 0
        %2209 = vmatprep.subr.bf16.mxu0 0
        %2210 = vmatpush1.bf16.msra.mxu0 0
        %2211 = vmatprep.subr.bf16.mxu0 0
        %2212 = vmatpush1.bf16.msra.mxu0 0
        %2213 = vmatprep.subr.bf16.mxu0 0
        %2214 = vmatpush1.bf16.msra.mxu0 0
        %2215 = vmatprep.subr.bf16.mxu0 0
        %2216 = vmatpush1.bf16.msra.mxu0 0
        %2217 = vmatprep.subr.bf16.mxu0 0
        %2218 = vmatpush1.bf16.msra.mxu0 0
        %2219 = vmatprep.subr.bf16.mxu0 0
        %2220 = vmatpush1.bf16.msra.mxu0 0
        %2221 = vmatprep.subr.bf16.mxu0 0
        %2222 = vmatpush1.bf16.msra.mxu0 0
        %2223 = vmatprep.subr.bf16.mxu0 0
        %2224 = vmatpush1.bf16.msra.mxu0 0
        %2225 = vmatprep.mubr.bf16.mxu0 0
        %2226 = vmatmul.mubr.bf16.gmra.mrb[0].mxu0 %v2191
        %v2227 = vpop.f32.mrb[0].mxu0
        %v2228 = vadd.f32 %v2176, %v2227
        %v2229 = vpop.f32.mrb[0].mxu0
        %v2230 = vpop.f32.mrb[0].mxu0
        %v2231 = vpop.f32.mrb[0].mxu0
        %2232 = vdwg.mxu0
        %v2233 = vadd.f32 %v1575, %v2228
        %v2234 = vsel %vm924, %v2233, 0.0
        %2235 = vadd.xlane.f32.xlu0 %v2234
        %v2236 = vpop.xlane.xlu0 %2235
        %v2237 = vmul.f32 %v2236, %v1551
        %v2238 = vsub.f32 %v2233, %v2237
        %v2239 = vmul.f32 %v2238, %v2238
        %v2240 = vsel %vm924, %v2239, 0.0
        %2241 = vadd.xlane.f32.xlu0 %v2240
        %v2242 = vpop.xlane.xlu0 %2241
        %v2243 = vmul.f32 %v2242, %v1551
        %v2244 = vadd.f32 %v2243, 1e-05
        %v2245 = vrsqrt.pop %v2244
        %v2246 = vmul.f32 %v2238, %v2245
        %v2248 = vlaneseq
        %v2249 = vshrl.u32 %v2248, 7
        %v2250 = vsub.s32 0, %v2249
        %v2251 = vrot.slane %v1592, %v2250
        %v2253 = vmul.f32 %v2246, %v2251
        %v2255 = vlaneseq
        %v2256 = vshrl.u32 %v2255, 7
        %v2257 = vsub.s32 0, %v2256
        %v2258 = vrot.slane %v1593, %v2257
        %v2260 = vadd.f32 %v2253, %v2258
        %v2261 = vpack.c.bf16 %v2260, %v2260
        %v2262 = vld [vmem:[%s18] sm:$0xf]
        %v2263 = vld [vmem:[%s18 + $0x4] sm:$0xf]
        %v2264 = vld [vmem:[%s18 + $0x8] sm:$0xf]
        %v2265 = vld [vmem:[%s18 + $0xc] sm:$0xf]
        %v2266 = vld [vmem:[#allocation15] sm:$0x1]
        %v2268 = vlaneseq
        %v2269 = vshrl.u32 %v2268, 7
        %v2270 = vsub.s32 0, %v2269
        %v2271 = vrot.slane %v2266, %v2270
        %v2277 = vunpack.c.l.b16 %v2262
        %v2278 = vunpack.c.l.b16 %v2263
        %v2279 = vunpack.c.l.b16 %v2264
        %v2280 = vunpack.c.l.b16 %v2265
        %v2281 = vpack.c.b16 %v2278, %v2277
        %v2282 = vpack.c.b16 %v2280, %v2279
        %v2286 = vsel %vm924, %v2261, 0
        %2288 = vmatprep.subr.bf16.mxu0 0
        %2289 = vmatpush1.bf16.msra.mxu0 %v2281
        %2290 = vmatprep.subr.bf16.mxu0 0
        %2291 = vmatpush1.bf16.msra.mxu0 %v2282
        %2292 = vmatprep.subr.bf16.mxu0 0
        %2293 = vmatpush1.bf16.msra.mxu0 0
        %2294 = vmatprep.subr.bf16.mxu0 0
        %2295 = vmatpush1.bf16.msra.mxu0 0
        %2296 = vmatprep.subr.bf16.mxu0 0
        %2297 = vmatpush1.bf16.msra.mxu0 0
        %2298 = vmatprep.subr.bf16.mxu0 0
        %2299 = vmatpush1.bf16.msra.mxu0 0
        %2300 = vmatprep.subr.bf16.mxu0 0
        %2301 = vmatpush1.bf16.msra.mxu0 0
        %2302 = vmatprep.subr.bf16.mxu0 0
        %2303 = vmatpush1.bf16.msra.mxu0 0
        %2304 = vmatprep.subr.bf16.mxu0 0
        %2305 = vmatpush1.bf16.msra.mxu0 0
        %2306 = vmatprep.subr.bf16.mxu0 0
        %2307 = vmatpush1.bf16.msra.mxu0 0
        %2308 = vmatprep.subr.bf16.mxu0 0
        %2309 = vmatpush1.bf16.msra.mxu0 0
        %2310 = vmatprep.subr.bf16.mxu0 0
        %2311 = vmatpush1.bf16.msra.mxu0 0
        %2312 = vmatprep.subr.bf16.mxu0 0
        %2313 = vmatpush1.bf16.msra.mxu0 0
        %2314 = vmatprep.subr.bf16.mxu0 0
        %2315 = vmatpush1.bf16.msra.mxu0 0
        %2316 = vmatprep.subr.bf16.mxu0 0
        %2317 = vmatpush1.bf16.msra.mxu0 0
        %2318 = vmatprep.subr.bf16.mxu0 0
        %2319 = vmatpush1.bf16.msra.mxu0 0
        %2320 = vmatprep.mubr.bf16.mxu0 0
        %2321 = vmatmul.mubr.bf16.gmra.mrb[0].mxu0 %v2286
        %v2322 = vpop.f32.mrb[0].mxu0
        %v2323 = vadd.f32 %v2271, %v2322
        %v2324 = vpop.f32.mrb[0].mxu0
        %v2325 = vpop.f32.mrb[0].mxu0
        %v2326 = vpop.f32.mrb[0].mxu0
        %2327 = vdwg.mxu0
        %v2328 = vmax.f32 %v2323, 0.0
        %v2329 = vpack.c.bf16 %v2328, %v2328
        %v2330 = vld [vmem:[%s20] sm:$0xf]
        %v2331 = vld [vmem:[%s20 + $0x4] sm:$0xf]
        %v2332 = vld [vmem:[%s20 + $0x8] sm:$0xf]
        %v2333 = vld [vmem:[%s20 + $0xc] sm:$0xf]
        %v2334 = vld [vmem:[%s20 + $0x10] sm:$0xf]
        %v2335 = vld [vmem:[%s20 + $0x14] sm:$0xf]
        %v2336 = vld [vmem:[%s20 + $0x18] sm:$0xf]
        %v2337 = vld [vmem:[%s20 + $0x1c] sm:$0xf]
        %v2338 = vld [vmem:[%s20 + $0x20] sm:$0xf]
        %v2339 = vld [vmem:[%s20 + $0x24] sm:$0xf]
        %v2340 = vld [vmem:[%s20 + $0x28] sm:$0xf]
        %v2341 = vld [vmem:[%s20 + $0x2c] sm:$0xf]
        %v2342 = vld [vmem:[%s20 + $0x30] sm:$0xf]
        %v2343 = vld [vmem:[%s20 + $0x34] sm:$0xf]
        %v2344 = vld [vmem:[%s20 + $0x38] sm:$0xf]
        %v2345 = vld [vmem:[%s20 + $0x3c] sm:$0xf]
        %v2346 = vld [vmem:[#allocation16] sm:$0x1]
        %v2348 = vlaneseq
        %v2349 = vshrl.u32 %v2348, 7
        %v2350 = vsub.s32 0, %v2349
        %v2351 = vrot.slane %v2346, %v2350
        %v2369 = vunpack.c.l.b16 %v2330
        %v2370 = vunpack.c.l.b16 %v2331
        %v2371 = vunpack.c.l.b16 %v2332
        %v2372 = vunpack.c.l.b16 %v2333
        %v2373 = vunpack.c.l.b16 %v2334
        %v2374 = vunpack.c.l.b16 %v2335
        %v2375 = vunpack.c.l.b16 %v2336
        %v2376 = vunpack.c.l.b16 %v2337
        %v2377 = vunpack.c.l.b16 %v2338
        %v2378 = vunpack.c.l.b16 %v2339
        %v2379 = vunpack.c.l.b16 %v2340
        %v2380 = vunpack.c.l.b16 %v2341
        %v2381 = vunpack.c.l.b16 %v2342
        %v2382 = vunpack.c.l.b16 %v2343
        %v2383 = vunpack.c.l.b16 %v2344
        %v2384 = vunpack.c.l.b16 %v2345
        %v2385 = vpack.c.b16 %v2370, %v2369
        %v2386 = vpack.c.b16 %v2372, %v2371
        %v2387 = vpack.c.b16 %v2374, %v2373
        %v2388 = vpack.c.b16 %v2376, %v2375
        %v2389 = vpack.c.b16 %v2378, %v2377
        %v2390 = vpack.c.b16 %v2380, %v2379
        %v2391 = vpack.c.b16 %v2382, %v2381
        %v2392 = vpack.c.b16 %v2384, %v2383
        %2401 = vmatprep.subr.bf16.mxu0 0
        %2402 = vmatpush1.bf16.msra.mxu0 %v2385
        %2403 = vmatprep.subr.bf16.mxu0 0
        %2404 = vmatpush1.bf16.msra.mxu0 %v2386
        %2405 = vmatprep.subr.bf16.mxu0 0
        %2406 = vmatpush1.bf16.msra.mxu0 %v2387
        %2407 = vmatprep.subr.bf16.mxu0 0
        %2408 = vmatpush1.bf16.msra.mxu0 %v2388
        %2409 = vmatprep.subr.bf16.mxu0 0
        %2410 = vmatpush1.bf16.msra.mxu0 %v2389
        %2411 = vmatprep.subr.bf16.mxu0 0
        %2412 = vmatpush1.bf16.msra.mxu0 %v2390
        %2413 = vmatprep.subr.bf16.mxu0 0
        %2414 = vmatpush1.bf16.msra.mxu0 %v2391
        %2415 = vmatprep.subr.bf16.mxu0 0
        %2416 = vmatpush1.bf16.msra.mxu0 %v2392
        %2417 = vmatprep.subr.bf16.mxu0 0
        %2418 = vmatpush1.bf16.msra.mxu0 0
        %2419 = vmatprep.subr.bf16.mxu0 0
        %2420 = vmatpush1.bf16.msra.mxu0 0
        %2421 = vmatprep.subr.bf16.mxu0 0
        %2422 = vmatpush1.bf16.msra.mxu0 0
        %2423 = vmatprep.subr.bf16.mxu0 0
        %2424 = vmatpush1.bf16.msra.mxu0 0
        %2425 = vmatprep.subr.bf16.mxu0 0
        %2426 = vmatpush1.bf16.msra.mxu0 0
        %2427 = vmatprep.subr.bf16.mxu0 0
        %2428 = vmatpush1.bf16.msra.mxu0 0
        %2429 = vmatprep.subr.bf16.mxu0 0
        %2430 = vmatpush1.bf16.msra.mxu0 0
        %2431 = vmatprep.subr.bf16.mxu0 0
        %2432 = vmatpush1.bf16.msra.mxu0 0
        %2433 = vmatprep.mubr.bf16.mxu0 0
        %2434 = vmatmul.mubr.bf16.gmra.mrb[0].mxu0 %v2329
        %v2435 = vpop.f32.mrb[0].mxu0
        %v2436 = vadd.f32 %v2351, %v2435
        %v2437 = vpop.f32.mrb[0].mxu0
        %v2438 = vpop.f32.mrb[0].mxu0
        %v2439 = vpop.f32.mrb[0].mxu0
        %2440 = vdwg.mxu0
        %v2441 = vadd.f32 %v2260, %v2436
        %v2442 = vld [vmem:[%s22] sm:$0x1]
        %v2443 = vld [vmem:[%s23] sm:$0x1]
        %v2444 = vsel %vm924, %v2441, 0.0
        %2445 = vadd.xlane.f32.xlu0 %v2444
        %v2446 = vpop.xlane.xlu0 %2445
        %v2447 = vmul.f32 %v2446, %v1551
        %v2448 = vsub.f32 %v2441, %v2447
        %v2449 = vmul.f32 %v2448, %v2448
        %v2450 = vsel %vm924, %v2449, 0.0
        %2451 = vadd.xlane.f32.xlu0 %v2450
        %v2452 = vpop.xlane.xlu0 %2451
        %v2453 = vmul.f32 %v2452, %v1551
        %v2454 = vadd.f32 %v2453, 1e-05
        %v2455 = vrsqrt.pop %v2454
        %v2456 = vmul.f32 %v2448, %v2455
        %v2458 = vlaneseq
        %v2459 = vshrl.u32 %v2458, 7
        %v2460 = vsub.s32 0, %v2459
        %v2461 = vrot.slane %v2442, %v2460
        %v2463 = vmul.f32 %v2456, %v2461
        %v2465 = vlaneseq
        %v2466 = vshrl.u32 %v2465, 7
        %v2467 = vsub.s32 0, %v2466
        %v2468 = vrot.slane %v2443, %v2467
        %v2470 = vadd.f32 %v2463, %v2468
        %v2471 = vpack.c.bf16 %v2470, %v2470
        %vm2472 = vcmask 257024
        %2473 = vst.msk [vmem:[%s884] sm:$0xf] %vm2472, %v2471
        %p2474 = scmp.lt.s32.totalorder %s43, 1
        %s2475 = scalar_select %p2474, %s43, 1
        %s2476 = smul.addr %s2475, 4
        %s2477 = scalar_lea.vmem %s24, %s2476
        // Predicated region
        $region157: #{transformer_decoder.2} parent=115 // pred_check
          %p2478 = pneg %p575
        $region158: #{transformer_decoder.2} parent=115 // pred_check_branch
          %2480 = sbr.rel (%p2478) target = $region160
        $region159: #{transformer_decoder.2} parent=115 // pred_region
          _
        $region160: #{transformer_decoder.2} parent=115 // pred_fallthru
          _
      $region116: #{transformer_decoder.2} parent=5 // pred_fallthru
        _
      %p2481 = scmp.le.s32.totalorder 2, %s38
      // Predicated region
      $region161: #{transformer_decoder.2} parent=5 // pred_check
        %p2482 = pneg %p2481
      $region162: #{transformer_decoder.2} parent=5 // pred_check_branch
        %2484 = sbr.rel (%p2482) target = $region164
      $region163: #{transformer_decoder.2} parent=5 // pred_region
        %s2485 = ssub.s32 %s38, 2
        // Predicated region
        $region165: #{transformer_decoder.2} parent=163 // pred_check
          %p2486 = pneg %p581
        $region166: #{transformer_decoder.2} parent=163 // pred_check_branch
          %2488 = sbr.rel (%p2486) target = $region168
        $region167: #{transformer_decoder.2} parent=163 // pred_region
          %p2489 = scmp.lt.s32.totalorder %s44, 1
          %s2490 = scalar_select %p2489, %s44, 1
          %s2491 = smul.addr %s2490, 4
          %s2492 = scalar_lea.vmem %s24, %s2491
        $region168: #{transformer_decoder.2} parent=163 // pred_fallthru
          _
      $region164: #{transformer_decoder.2} parent=5 // pred_fallthru
        _
    $region6: #{transformer_decoder.2} parent=1 // loop_footer
      %s42 = sadd.s32 1, %s38
    $region7: #{transformer_decoder.2} parent=1 // loop_footer_branch
      %37 = sbr.rel target = $region3
    $region8: #{transformer_decoder.2} parent=1 // loop_exit
      _
    %2493 = vsyncpa [#allocation3], 1
    %s2494 = scalar_lea.sflag [#allocation3], 1
    %2495 = vsyncpa %s2494, 1
    %2496 = vsyncpa [#allocation5], 1
    %2497 = vsyncpa [#allocation8], 1
    %2498 = vsyncpa [#allocation11], 1
    %2499 = vsyncpa [#allocation14], 1
    %2500 = vsyncpa [#allocation17], 1

// kernel: transformer_decoder.3
$region0: #{transformer_decoder.3}
  #allocation0 [shape = 'u32[]', space=smem, size = 0x4, offset = 0x4, fixed_abs, tag = 'smem constant byte address 0x4 - core index']
  #allocation1 [shape = 'u32[144,128]{1,0:T(1,128)}', space=vmem, size = 0x12000, scoped, tag = 'internal scratch']
  %s0 = inlined_call_operand.vmem [shape: bf16[2,8,32], index: 0, kind: input, shape index: {}]
  %s1 = inlined_call_operand.vmem [shape: bf16[2,8,32], index: 1, kind: input, shape index: {}]
  %s2 = inlined_call_operand.vmem [shape: bf16[32,32], index: 2, kind: input, shape index: {}]
  %s3 = inlined_call_operand.vmem [shape: f32[1,32], index: 3, kind: input, shape index: {}]
  %s4 = inlined_call_operand.vmem [shape: bf16[32,64], index: 4, kind: input, shape index: {}]
  %s5 = inlined_call_operand.vmem [shape: f32[1,64], index: 5, kind: input, shape index: {}]
  %s6 = inlined_call_operand.vmem [shape: bf16[32,32], index: 6, kind: input, shape index: {}]
  %s7 = inlined_call_operand.vmem [shape: f32[1,32], index: 7, kind: input, shape index: {}]
  %s8 = inlined_call_operand.vmem [shape: f32[1,32], index: 8, kind: input, shape index: {}]
  %s9 = inlined_call_operand.vmem [shape: f32[1,32], index: 9, kind: input, shape index: {}]
  %s10 = inlined_call_operand.vmem [shape: bf16[32,32], index: 10, kind: input, shape index: {}]
  %s11 = inlined_call_operand.vmem [shape: f32[1,32], index: 11, kind: input, shape index: {}]
  %s12 = inlined_call_operand.vmem [shape: bf16[32,64], index: 12, kind: input, shape index: {}]
  %s13 = inlined_call_operand.vmem [shape: f32[1,64], index: 13, kind: input, shape index: {}]
  %s14 = inlined_call_operand.vmem [shape: bf16[32,32], index: 14, kind: input, shape index: {}]
  %s15 = inlined_call_operand.vmem [shape: f32[1,32], index: 15, kind: input, shape index: {}]
  %s16 = inlined_call_operand.vmem [shape: f32[1,32], index: 16, kind: input, shape index: {}]
  %s17 = inlined_call_operand.vmem [shape: f32[1,32], index: 17, kind: input, shape index: {}]
  %s18 = inlined_call_operand.vmem [shape: bf16[32,128], index: 18, kind: input, shape index: {}]
  %s19 = inlined_call_operand.vmem [shape: f32[1,128], index: 19, kind: input, shape index: {}]
  %s20 = inlined_call_operand.vmem [shape: bf16[128,32], index: 20, kind: input, shape index: {}]
  %s21 = inlined_call_operand.vmem [shape: f32[1,32], index: 21, kind: input, shape index: {}]
  %s22 = inlined_call_operand.vmem [shape: f32[1,32], index: 22, kind: input, shape index: {}]
  %s23 = inlined_call_operand.vmem [shape: f32[1,32], index: 23, kind: input, shape index: {}]
  %s24 = inlined_call_operand.hbm [shape: bf16[2,8,32], index: 24, kind: output, shape index: {}]
  %s25 = sld [smem:[#allocation0]]
  $region129: #{transformer_decoder.3} parent=0
    _
  %s27 = ssub.s32 1, %s25
  %s28 = scalar_select 0, %s27, %s25
  $region1: #{transformer_decoder.3} parent=0
    #allocation2 [shape = 'u8[4096]{0}', space=vmem, size = 0x1000, scoped, tag = 'output window, operand 0']
    #allocation3 [shape = 's32[2]{0}', space=sflag, size = 0x8, scoped, tag = 'scoped memory for transformer_decoder.3']
    %29 = vsyncpa [#allocation3], 0
    %s30 = scalar_lea.sflag [#allocation3], 1
    %31 = vsyncpa %s30, 0
    loop: start=0, step=1, limit=4
    $region2: #{transformer_decoder.3} parent=1 // loop_pre_header
      _
    $region3: #{transformer_decoder.3} parent=1 // loop_header
      %s33 = sphi 0, %s37
      %p34 = scmp.ge.s32.totalorder %s33, 4
      %s43 = sphi 0, %s45
      %s46 = sphi 0, %s43
      %s47 = sphi 0, %s46
      %s63 = sphi 0, %s47
      %s69 = sphi 0, %s71
      %s72 = sphi 0, %s69
      %s73 = sphi 0, %s72
      %s89 = sphi 0, %s73
      %s93 = sphi 0, %s93
      %s95 = sphi 0, %s93
      %s96 = sphi 0, %s95
      %s110 = sphi 0, %s96
      %s114 = sphi 0, %s114
      %s116 = sphi 0, %s114
      %s117 = sphi 0, %s116
      %s131 = sphi 0, %s117
      %s135 = sphi 0, %s135
      %s137 = sphi 0, %s135
      %s138 = sphi 0, %s137
      %s152 = sphi 0, %s138
      %s156 = sphi 0, %s156
      %s158 = sphi 0, %s156
      %s159 = sphi 0, %s158
      %s173 = sphi 0, %s159
      %s177 = sphi 0, %s177
      %s179 = sphi 0, %s177
      %s180 = sphi 0, %s179
      %s194 = sphi 0, %s180
      %s198 = sphi 0, %s198
      %s200 = sphi 0, %s198
      %s201 = sphi 0, %s200
      %s215 = sphi 0, %s201
      %s219 = sphi 0, %s219
      %s221 = sphi 0, %s219
      %s222 = sphi 0, %s221
      %s236 = sphi 0, %s222
      %s240 = sphi 0, %s240
      %s242 = sphi 0, %s240
      %s243 = sphi 0, %s242
      %s257 = sphi 0, %s243
      %s261 = sphi 0, %s261
      %s263 = sphi 0, %s261
      %s264 = sphi 0, %s263
      %s278 = sphi 0, %s264
      %s282 = sphi 0, %s282
      %s284 = sphi 0, %s282
      %s285 = sphi 0, %s284
      %s299 = sphi 0, %s285
      %s303 = sphi 0, %s303
      %s305 = sphi 0, %s303
      %s306 = sphi 0, %s305
      %s320 = sphi 0, %s306
      %s324 = sphi 0, %s324
      %s326 = sphi 0, %s324
      %s327 = sphi 0, %s326
      %s341 = sphi 0, %s327
      %s345 = sphi 0, %s345
      %s347 = sphi 0, %s345
      %s348 = sphi 0, %s347
      %s362 = sphi 0, %s348
      %s366 = sphi 0, %s366
      %s368 = sphi 0, %s366
      %s369 = sphi 0, %s368
      %s383 = sphi 0, %s369
      %s387 = sphi 0, %s387
      %s389 = sphi 0, %s387
      %s390 = sphi 0, %s389
      %s404 = sphi 0, %s390
      %s408 = sphi 0, %s408
      %s410 = sphi 0, %s408
      %s411 = sphi 0, %s410
      %s425 = sphi 0, %s411
      %s429 = sphi 0, %s429
      %s431 = sphi 0, %s429
      %s432 = sphi 0, %s431
      %s446 = sphi 0, %s432
      %s450 = sphi 0, %s450
      %s452 = sphi 0, %s450
      %s453 = sphi 0, %s452
      %s467 = sphi 0, %s453
      %s471 = sphi 0, %s471
      %s473 = sphi 0, %s471
      %s474 = sphi 0, %s473
      %s488 = sphi 0, %s474
      %s492 = sphi 0, %s492
      %s494 = sphi 0, %s492
      %s495 = sphi 0, %s494
      %s509 = sphi 0, %s495
      %s513 = sphi 0, %s513
      %s515 = sphi 0, %s513
      %s516 = sphi 0, %s515
      %s530 = sphi 0, %s516
      %s534 = sphi 0, %s534
      %s536 = sphi 0, %s534
      %s537 = sphi 0, %s536
      %s551 = sphi 0, %s537
      %s557 = sphi 0, %s559
      %s560 = sphi 0, %s557
      %s561 = sphi 0, %s560
      %s577 = sphi 0, %s561
    $region4: #{transformer_decoder.3} parent=1 // loop_header_branch
      %36 = sbr.rel (%p34) target = $region8
    $region5: #{transformer_decoder.3} parent=1 // loop_body
      %s38 = ssub.s32 %s33, 1
      %s39 = ssub.s32 %s33, 2
      %s40 = sadd.s32 %s33, 1
      %s41 = ssub.s32 %s33, %s40
      %p42 = scmp.eq.s32.totalorder %s41, 0
      %s44 = sadd.s32 %s43, 1
      %s45 = scalar_select %p42, %s43, %s44
      %p48 = pneg %p42
      %p49 = scmp.eq.s32.totalorder %s33, 1
      %p50 = por %p48, %p49
      %p51 = scmp.ne.s32.totalorder %s43, %s46
      %p52 = scmp.eq.s32.totalorder %s33, 0
      %p53 = por %p51, %p52
      %p54 = scmp.ne.s32.totalorder %s43, %s46
      %p55 = scmp.eq.s32.totalorder %s38, 1
      %p56 = por %p54, %p55
      %p57 = scmp.ne.s32.totalorder %s46, %s47
      %p58 = scmp.eq.s32.totalorder %s38, 0
      %p59 = por %p57, %p58
      %p60 = scmp.ne.s32.totalorder %s46, %s47
      %p61 = scmp.eq.s32.totalorder %s39, 1
      %p62 = por %p60, %p61
      %p64 = scmp.ne.s32.totalorder %s47, %s63
      %p65 = scmp.eq.s32.totalorder %s39, 0
      %p66 = por %p64, %p65
      %s67 = ssub.s32 %s33, %s40
      %p68 = scmp.eq.s32.totalorder %s67, 0
      %s70 = sadd.s32 %s69, 1
      %s71 = scalar_select %p68, %s69, %s70
      %p74 = pneg %p68
      %p75 = scmp.eq.s32.totalorder %s33, 1
      %p76 = por %p74, %p75
      %p77 = scmp.ne.s32.totalorder %s69, %s72
      %p78 = scmp.eq.s32.totalorder %s33, 0
      %p79 = por %p77, %p78
      %p80 = scmp.ne.s32.totalorder %s69, %s72
      %p81 = scmp.eq.s32.totalorder %s38, 1
      %p82 = por %p80, %p81
      %p83 = scmp.ne.s32.totalorder %s72, %s73
      %p84 = scmp.eq.s32.totalorder %s38, 0
      %p85 = por %p83, %p84
      %p86 = scmp.ne.s32.totalorder %s72, %s73
      %p87 = scmp.eq.s32.totalorder %s39, 1
      %p88 = por %p86, %p87
      %p90 = scmp.ne.s32.totalorder %s73, %s89
      %p91 = scmp.eq.s32.totalorder %s39, 0
      %p92 = por %p90, %p91
      %s94 = sadd.s32 %s93, 1
      %p97 = scmp.eq.s32.totalorder %s33, 1
      %p98 = scmp.ne.s32.totalorder %s93, %s95
      %p99 = scmp.eq.s32.totalorder %s33, 0
      %p100 = por %p98, %p99
      %p101 = scmp.ne.s32.totalorder %s93, %s95
      %p102 = scmp.eq.s32.totalorder %s38, 1
      %p103 = por %p101, %p102
      %p104 = scmp.ne.s32.totalorder %s95, %s96
      %p105 = scmp.eq.s32.totalorder %s38, 0
      %p106 = por %p104, %p105
      %p107 = scmp.ne.s32.totalorder %s95, %s96
      %p108 = scmp.eq.s32.totalorder %s39, 1
      %p109 = por %p107, %p108
      %p111 = scmp.ne.s32.totalorder %s96, %s110
      %p112 = scmp.eq.s32.totalorder %s39, 0
      %p113 = por %p111, %p112
      %s115 = sadd.s32 %s114, 1
      %p118 = scmp.eq.s32.totalorder %s33, 1
      %p119 = scmp.ne.s32.totalorder %s114, %s116
      %p120 = scmp.eq.s32.totalorder %s33, 0
      %p121 = por %p119, %p120
      %p122 = scmp.ne.s32.totalorder %s114, %s116
      %p123 = scmp.eq.s32.totalorder %s38, 1
      %p124 = por %p122, %p123
      %p125 = scmp.ne.s32.totalorder %s116, %s117
      %p126 = scmp.eq.s32.totalorder %s38, 0
      %p127 = por %p125, %p126
      %p128 = scmp.ne.s32.totalorder %s116, %s117
      %p129 = scmp.eq.s32.totalorder %s39, 1
      %p130 = por %p128, %p129
      %p132 = scmp.ne.s32.totalorder %s117, %s131
      %p133 = scmp.eq.s32.totalorder %s39, 0
      %p134 = por %p132, %p133
      %s136 = sadd.s32 %s135, 1
      %p139 = scmp.eq.s32.totalorder %s33, 1
      %p140 = scmp.ne.s32.totalorder %s135, %s137
      %p141 = scmp.eq.s32.totalorder %s33, 0
      %p142 = por %p140, %p141
      %p143 = scmp.ne.s32.totalorder %s135, %s137
      %p144 = scmp.eq.s32.totalorder %s38, 1
      %p145 = por %p143, %p144
      %p146 = scmp.ne.s32.totalorder %s137, %s138
      %p147 = scmp.eq.s32.totalorder %s38, 0
      %p148 = por %p146, %p147
      %p149 = scmp.ne.s32.totalorder %s137, %s138
      %p150 = scmp.eq.s32.totalorder %s39, 1
      %p151 = por %p149, %p150
      %p153 = scmp.ne.s32.totalorder %s138, %s152
      %p154 = scmp.eq.s32.totalorder %s39, 0
      %p155 = por %p153, %p154
      %s157 = sadd.s32 %s156, 1
      %p160 = scmp.eq.s32.totalorder %s33, 1
      %p161 = scmp.ne.s32.totalorder %s156, %s158
      %p162 = scmp.eq.s32.totalorder %s33, 0
      %p163 = por %p161, %p162
      %p164 = scmp.ne.s32.totalorder %s156, %s158
      %p165 = scmp.eq.s32.totalorder %s38, 1
      %p166 = por %p164, %p165
      %p167 = scmp.ne.s32.totalorder %s158, %s159
      %p168 = scmp.eq.s32.totalorder %s38, 0
      %p169 = por %p167, %p168
      %p170 = scmp.ne.s32.totalorder %s158, %s159
      %p171 = scmp.eq.s32.totalorder %s39, 1
      %p172 = por %p170, %p171
      %p174 = scmp.ne.s32.totalorder %s159, %s173
      %p175 = scmp.eq.s32.totalorder %s39, 0
      %p176 = por %p174, %p175
      %s178 = sadd.s32 %s177, 1
      %p181 = scmp.eq.s32.totalorder %s33, 1
      %p182 = scmp.ne.s32.totalorder %s177, %s179
      %p183 = scmp.eq.s32.totalorder %s33, 0
      %p184 = por %p182, %p183
      %p185 = scmp.ne.s32.totalorder %s177, %s179
      %p186 = scmp.eq.s32.totalorder %s38, 1
      %p187 = por %p185, %p186
      %p188 = scmp.ne.s32.totalorder %s179, %s180
      %p189 = scmp.eq.s32.totalorder %s38, 0
      %p190 = por %p188, %p189
      %p191 = scmp.ne.s32.totalorder %s179, %s180
      %p192 = scmp.eq.s32.totalorder %s39, 1
      %p193 = por %p191, %p192
      %p195 = scmp.ne.s32.totalorder %s180, %s194
      %p196 = scmp.eq.s32.totalorder %s39, 0
      %p197 = por %p195, %p196
      %s199 = sadd.s32 %s198, 1
      %p202 = scmp.eq.s32.totalorder %s33, 1
      %p203 = scmp.ne.s32.totalorder %s198, %s200
      %p204 = scmp.eq.s32.totalorder %s33, 0
      %p205 = por %p203, %p204
      %p206 = scmp.ne.s32.totalorder %s198, %s200
      %p207 = scmp.eq.s32.totalorder %s38, 1
      %p208 = por %p206, %p207
      %p209 = scmp.ne.s32.totalorder %s200, %s201
      %p210 = scmp.eq.s32.totalorder %s38, 0
      %p211 = por %p209, %p210
      %p212 = scmp.ne.s32.totalorder %s200, %s201
      %p213 = scmp.eq.s32.totalorder %s39, 1
      %p214 = por %p212, %p213
      %p216 = scmp.ne.s32.totalorder %s201, %s215
      %p217 = scmp.eq.s32.totalorder %s39, 0
      %p218 = por %p216, %p217
      %s220 = sadd.s32 %s219, 1
      %p223 = scmp.eq.s32.totalorder %s33, 1
      %p224 = scmp.ne.s32.totalorder %s219, %s221
      %p225 = scmp.eq.s32.totalorder %s33, 0
      %p226 = por %p224, %p225
      %p227 = scmp.ne.s32.totalorder %s219, %s221
      %p228 = scmp.eq.s32.totalorder %s38, 1
      %p229 = por %p227, %p228
      %p230 = scmp.ne.s32.totalorder %s221, %s222
      %p231 = scmp.eq.s32.totalorder %s38, 0
      %p232 = por %p230, %p231
      %p233 = scmp.ne.s32.totalorder %s221, %s222
      %p234 = scmp.eq.s32.totalorder %s39, 1
      %p235 = por %p233, %p234
      %p237 = scmp.ne.s32.totalorder %s222, %s236
      %p238 = scmp.eq.s32.totalorder %s39, 0
      %p239 = por %p237, %p238
      %s241 = sadd.s32 %s240, 1
      %p244 = scmp.eq.s32.totalorder %s33, 1
      %p245 = scmp.ne.s32.totalorder %s240, %s242
      %p246 = scmp.eq.s32.totalorder %s33, 0
      %p247 = por %p245, %p246
      %p248 = scmp.ne.s32.totalorder %s240, %s242
      %p249 = scmp.eq.s32.totalorder %s38, 1
      %p250 = por %p248, %p249
      %p251 = scmp.ne.s32.totalorder %s242, %s243
      %p252 = scmp.eq.s32.totalorder %s38, 0
      %p253 = por %p251, %p252
      %p254 = scmp.ne.s32.totalorder %s242, %s243
      %p255 = scmp.eq.s32.totalorder %s39, 1
      %p256 = por %p254, %p255
      %p258 = scmp.ne.s32.totalorder %s243, %s257
      %p259 = scmp.eq.s32.totalorder %s39, 0
      %p260 = por %p258, %p259
      %s262 = sadd.s32 %s261, 1
      %p265 = scmp.eq.s32.totalorder %s33, 1
      %p266 = scmp.ne.s32.totalorder %s261, %s263
      %p267 = scmp.eq.s32.totalorder %s33, 0
      %p268 = por %p266, %p267
      %p269 = scmp.ne.s32.totalorder %s261, %s263
      %p270 = scmp.eq.s32.totalorder %s38, 1
      %p271 = por %p269, %p270
      %p272 = scmp.ne.s32.totalorder %s263, %s264
      %p273 = scmp.eq.s32.totalorder %s38, 0
      %p274 = por %p272, %p273
      %p275 = scmp.ne.s32.totalorder %s263, %s264
      %p276 = scmp.eq.s32.totalorder %s39, 1
      %p277 = por %p275, %p276
      %p279 = scmp.ne.s32.totalorder %s264, %s278
      %p280 = scmp.eq.s32.totalorder %s39, 0
      %p281 = por %p279, %p280
      %s283 = sadd.s32 %s282, 1
      %p286 = scmp.eq.s32.totalorder %s33, 1
      %p287 = scmp.ne.s32.totalorder %s282, %s284
      %p288 = scmp.eq.s32.totalorder %s33, 0
      %p289 = por %p287, %p288
      %p290 = scmp.ne.s32.totalorder %s282, %s284
      %p291 = scmp.eq.s32.totalorder %s38, 1
      %p292 = por %p290, %p291
      %p293 = scmp.ne.s32.totalorder %s284, %s285
      %p294 = scmp.eq.s32.totalorder %s38, 0
      %p295 = por %p293, %p294
      %p296 = scmp.ne.s32.totalorder %s284, %s285
      %p297 = scmp.eq.s32.totalorder %s39, 1
      %p298 = por %p296, %p297
      %p300 = scmp.ne.s32.totalorder %s285, %s299
      %p301 = scmp.eq.s32.totalorder %s39, 0
      %p302 = por %p300, %p301
      %s304 = sadd.s32 %s303, 1
      %p307 = scmp.eq.s32.totalorder %s33, 1
      %p308 = scmp.ne.s32.totalorder %s303, %s305
      %p309 = scmp.eq.s32.totalorder %s33, 0
      %p310 = por %p308, %p309
      %p311 = scmp.ne.s32.totalorder %s303, %s305
      %p312 = scmp.eq.s32.totalorder %s38, 1
      %p313 = por %p311, %p312
      %p314 = scmp.ne.s32.totalorder %s305, %s306
      %p315 = scmp.eq.s32.totalorder %s38, 0
      %p316 = por %p314, %p315
      %p317 = scmp.ne.s32.totalorder %s305, %s306
      %p318 = scmp.eq.s32.totalorder %s39, 1
      %p319 = por %p317, %p318
      %p321 = scmp.ne.s32.totalorder %s306, %s320
      %p322 = scmp.eq.s32.totalorder %s39, 0
      %p323 = por %p321, %p322
      %s325 = sadd.s32 %s324, 1
      %p328 = scmp.eq.s32.totalorder %s33, 1
      %p329 = scmp.ne.s32.totalorder %s324, %s326
      %p330 = scmp.eq.s32.totalorder %s33, 0
      %p331 = por %p329, %p330
      %p332 = scmp.ne.s32.totalorder %s324, %s326
      %p333 = scmp.eq.s32.totalorder %s38, 1
      %p334 = por %p332, %p333
      %p335 = scmp.ne.s32.totalorder %s326, %s327
      %p336 = scmp.eq.s32.totalorder %s38, 0
      %p337 = por %p335, %p336
      %p338 = scmp.ne.s32.totalorder %s326, %s327
      %p339 = scmp.eq.s32.totalorder %s39, 1
      %p340 = por %p338, %p339
      %p342 = scmp.ne.s32.totalorder %s327, %s341
      %p343 = scmp.eq.s32.totalorder %s39, 0
      %p344 = por %p342, %p343
      %s346 = sadd.s32 %s345, 1
      %p349 = scmp.eq.s32.totalorder %s33, 1
      %p350 = scmp.ne.s32.totalorder %s345, %s347
      %p351 = scmp.eq.s32.totalorder %s33, 0
      %p352 = por %p350, %p351
      %p353 = scmp.ne.s32.totalorder %s345, %s347
      %p354 = scmp.eq.s32.totalorder %s38, 1
      %p355 = por %p353, %p354
      %p356 = scmp.ne.s32.totalorder %s347, %s348
      %p357 = scmp.eq.s32.totalorder %s38, 0
      %p358 = por %p356, %p357
      %p359 = scmp.ne.s32.totalorder %s347, %s348
      %p360 = scmp.eq.s32.totalorder %s39, 1
      %p361 = por %p359, %p360
      %p363 = scmp.ne.s32.totalorder %s348, %s362
      %p364 = scmp.eq.s32.totalorder %s39, 0
      %p365 = por %p363, %p364
      %s367 = sadd.s32 %s366, 1
      %p370 = scmp.eq.s32.totalorder %s33, 1
      %p371 = scmp.ne.s32.totalorder %s366, %s368
      %p372 = scmp.eq.s32.totalorder %s33, 0
      %p373 = por %p371, %p372
      %p374 = scmp.ne.s32.totalorder %s366, %s368
      %p375 = scmp.eq.s32.totalorder %s38, 1
      %p376 = por %p374, %p375
      %p377 = scmp.ne.s32.totalorder %s368, %s369
      %p378 = scmp.eq.s32.totalorder %s38, 0
      %p379 = por %p377, %p378
      %p380 = scmp.ne.s32.totalorder %s368, %s369
      %p381 = scmp.eq.s32.totalorder %s39, 1
      %p382 = por %p380, %p381
      %p384 = scmp.ne.s32.totalorder %s369, %s383
      %p385 = scmp.eq.s32.totalorder %s39, 0
      %p386 = por %p384, %p385
      %s388 = sadd.s32 %s387, 1
      %p391 = scmp.eq.s32.totalorder %s33, 1
      %p392 = scmp.ne.s32.totalorder %s387, %s389
      %p393 = scmp.eq.s32.totalorder %s33, 0
      %p394 = por %p392, %p393
      %p395 = scmp.ne.s32.totalorder %s387, %s389
      %p396 = scmp.eq.s32.totalorder %s38, 1
      %p397 = por %p395, %p396
      %p398 = scmp.ne.s32.totalorder %s389, %s390
      %p399 = scmp.eq.s32.totalorder %s38, 0
      %p400 = por %p398, %p399
      %p401 = scmp.ne.s32.totalorder %s389, %s390
      %p402 = scmp.eq.s32.totalorder %s39, 1
      %p403 = por %p401, %p402
      %p405 = scmp.ne.s32.totalorder %s390, %s404
      %p406 = scmp.eq.s32.totalorder %s39, 0
      %p407 = por %p405, %p406
      %s409 = sadd.s32 %s408, 1
      %p412 = scmp.eq.s32.totalorder %s33, 1
      %p413 = scmp.ne.s32.totalorder %s408, %s410
      %p414 = scmp.eq.s32.totalorder %s33, 0
      %p415 = por %p413, %p414
      %p416 = scmp.ne.s32.totalorder %s408, %s410
      %p417 = scmp.eq.s32.totalorder %s38, 1
      %p418 = por %p416, %p417
      %p419 = scmp.ne.s32.totalorder %s410, %s411
      %p420 = scmp.eq.s32.totalorder %s38, 0
      %p421 = por %p419, %p420
      %p422 = scmp.ne.s32.totalorder %s410, %s411
      %p423 = scmp.eq.s32.totalorder %s39, 1
      %p424 = por %p422, %p423
      %p426 = scmp.ne.s32.totalorder %s411, %s425
      %p427 = scmp.eq.s32.totalorder %s39, 0
      %p428 = por %p426, %p427
      %s430 = sadd.s32 %s429, 1
      %p433 = scmp.eq.s32.totalorder %s33, 1
      %p434 = scmp.ne.s32.totalorder %s429, %s431
      %p435 = scmp.eq.s32.totalorder %s33, 0
      %p436 = por %p434, %p435
      %p437 = scmp.ne.s32.totalorder %s429, %s431
      %p438 = scmp.eq.s32.totalorder %s38, 1
      %p439 = por %p437, %p438
      %p440 = scmp.ne.s32.totalorder %s431, %s432
      %p441 = scmp.eq.s32.totalorder %s38, 0
      %p442 = por %p440, %p441
      %p443 = scmp.ne.s32.totalorder %s431, %s432
      %p444 = scmp.eq.s32.totalorder %s39, 1
      %p445 = por %p443, %p444
      %p447 = scmp.ne.s32.totalorder %s432, %s446
      %p448 = scmp.eq.s32.totalorder %s39, 0
      %p449 = por %p447, %p448
      %s451 = sadd.s32 %s450, 1
      %p454 = scmp.eq.s32.totalorder %s33, 1
      %p455 = scmp.ne.s32.totalorder %s450, %s452
      %p456 = scmp.eq.s32.totalorder %s33, 0
      %p457 = por %p455, %p456
      %p458 = scmp.ne.s32.totalorder %s450, %s452
      %p459 = scmp.eq.s32.totalorder %s38, 1
      %p460 = por %p458, %p459
      %p461 = scmp.ne.s32.totalorder %s452, %s453
      %p462 = scmp.eq.s32.totalorder %s38, 0
      %p463 = por %p461, %p462
      %p464 = scmp.ne.s32.totalorder %s452, %s453
      %p465 = scmp.eq.s32.totalorder %s39, 1
      %p466 = por %p464, %p465
      %p468 = scmp.ne.s32.totalorder %s453, %s467
      %p469 = scmp.eq.s32.totalorder %s39, 0
      %p470 = por %p468, %p469
      %s472 = sadd.s32 %s471, 1
      %p475 = scmp.eq.s32.totalorder %s33, 1
      %p476 = scmp.ne.s32.totalorder %s471, %s473
      %p477 = scmp.eq.s32.totalorder %s33, 0
      %p478 = por %p476, %p477
      %p479 = scmp.ne.s32.totalorder %s471, %s473
      %p480 = scmp.eq.s32.totalorder %s38, 1
      %p481 = por %p479, %p480
      %p482 = scmp.ne.s32.totalorder %s473, %s474
      %p483 = scmp.eq.s32.totalorder %s38, 0
      %p484 = por %p482, %p483
      %p485 = scmp.ne.s32.totalorder %s473, %s474
      %p486 = scmp.eq.s32.totalorder %s39, 1
      %p487 = por %p485, %p486
      %p489 = scmp.ne.s32.totalorder %s474, %s488
      %p490 = scmp.eq.s32.totalorder %s39, 0
      %p491 = por %p489, %p490
      %s493 = sadd.s32 %s492, 1
      %p496 = scmp.eq.s32.totalorder %s33, 1
      %p497 = scmp.ne.s32.totalorder %s492, %s494
      %p498 = scmp.eq.s32.totalorder %s33, 0
      %p499 = por %p497, %p498
      %p500 = scmp.ne.s32.totalorder %s492, %s494
      %p501 = scmp.eq.s32.totalorder %s38, 1
      %p502 = por %p500, %p501
      %p503 = scmp.ne.s32.totalorder %s494, %s495
      %p504 = scmp.eq.s32.totalorder %s38, 0
      %p505 = por %p503, %p504
      %p506 = scmp.ne.s32.totalorder %s494, %s495
      %p507 = scmp.eq.s32.totalorder %s39, 1
      %p508 = por %p506, %p507
      %p510 = scmp.ne.s32.totalorder %s495, %s509
      %p511 = scmp.eq.s32.totalorder %s39, 0
      %p512 = por %p510, %p511
      %s514 = sadd.s32 %s513, 1
      %p517 = scmp.eq.s32.totalorder %s33, 1
      %p518 = scmp.ne.s32.totalorder %s513, %s515
      %p519 = scmp.eq.s32.totalorder %s33, 0
      %p520 = por %p518, %p519
      %p521 = scmp.ne.s32.totalorder %s513, %s515
      %p522 = scmp.eq.s32.totalorder %s38, 1
      %p523 = por %p521, %p522
      %p524 = scmp.ne.s32.totalorder %s515, %s516
      %p525 = scmp.eq.s32.totalorder %s38, 0
      %p526 = por %p524, %p525
      %p527 = scmp.ne.s32.totalorder %s515, %s516
      %p528 = scmp.eq.s32.totalorder %s39, 1
      %p529 = por %p527, %p528
      %p531 = scmp.ne.s32.totalorder %s516, %s530
      %p532 = scmp.eq.s32.totalorder %s39, 0
      %p533 = por %p531, %p532
      %s535 = sadd.s32 %s534, 1
      %p538 = scmp.eq.s32.totalorder %s33, 1
      %p539 = scmp.ne.s32.totalorder %s534, %s536
      %p540 = scmp.eq.s32.totalorder %s33, 0
      %p541 = por %p539, %p540
      %p542 = scmp.ne.s32.totalorder %s534, %s536
      %p543 = scmp.eq.s32.totalorder %s38, 1
      %p544 = por %p542, %p543
      %p545 = scmp.ne.s32.totalorder %s536, %s537
      %p546 = scmp.eq.s32.totalorder %s38, 0
      %p547 = por %p545, %p546
      %p548 = scmp.ne.s32.totalorder %s536, %s537
      %p549 = scmp.eq.s32.totalorder %s39, 1
      %p550 = por %p548, %p549
      %p552 = scmp.ne.s32.totalorder %s537, %s551
      %p553 = scmp.eq.s32.totalorder %s39, 0
      %p554 = por %p552, %p553
      %s555 = ssub.s32 %s33, %s40
      %p556 = scmp.eq.s32.totalorder %s555, 0
      %s558 = sadd.s32 %s557, 1
      %s559 = scalar_select %p556, %s557, %s558
      %p562 = pneg %p556
      %p563 = scmp.eq.s32.totalorder %s33, 1
      %p564 = por %p562, %p563
      %p565 = scmp.ne.s32.totalorder %s557, %s560
      %p566 = scmp.eq.s32.totalorder %s33, 0
      %p567 = por %p565, %p566
      %p568 = scmp.ne.s32.totalorder %s557, %s560
      %p569 = scmp.eq.s32.totalorder %s38, 1
      %p570 = por %p568, %p569
      %p571 = scmp.ne.s32.totalorder %s560, %s561
      %p572 = scmp.eq.s32.totalorder %s38, 0
      %p573 = por %p571, %p572
      %p574 = scmp.ne.s32.totalorder %s560, %s561
      %p575 = scmp.eq.s32.totalorder %s39, 1
      %p576 = por %p574, %p575
      %p578 = scmp.ne.s32.totalorder %s561, %s577
      %p579 = scmp.eq.s32.totalorder %s39, 0
      %p580 = por %p578, %p579
      %p581 = scmp.le.s32.totalorder 1, %s33
      %p582 = scmp.lt.s32.totalorder %s33, 3
      %p583 = pnand %p581, %p582
      %p584 = pneg %p583
      // Predicated region
      $region9: #{transformer_decoder.3} parent=5 // pred_check
        _
      $region10: #{transformer_decoder.3} parent=5 // pred_check_branch
        %586 = sbr.rel (%p583) target = $region12
      $region11: #{transformer_decoder.3} parent=5 // pred_region
        %s587 = ssub.s32 %s33, 1
        // Predicated region
        $region13: #{transformer_decoder.3} parent=11 // pred_check
          %p588 = pneg %p106
        $region14: #{transformer_decoder.3} parent=11 // pred_check_branch
          %590 = sbr.rel (%p588) target = $region16
        $region15: #{transformer_decoder.3} parent=11 // pred_region
          _
        $region16: #{transformer_decoder.3} parent=11 // pred_fallthru
          _
        // Predicated region
        $region17: #{transformer_decoder.3} parent=11 // pred_check
          %p591 = pneg %p127
        $region18: #{transformer_decoder.3} parent=11 // pred_check_branch
          %593 = sbr.rel (%p591) target = $region20
        $region19: #{transformer_decoder.3} parent=11 // pred_region
          _
        $region20: #{transformer_decoder.3} parent=11 // pred_fallthru
          _
        // Predicated region
        $region21: #{transformer_decoder.3} parent=11 // pred_check
          %p594 = pneg %p148
        $region22: #{transformer_decoder.3} parent=11 // pred_check_branch
          %596 = sbr.rel (%p594) target = $region24
        $region23: #{transformer_decoder.3} parent=11 // pred_region
          _
        $region24: #{transformer_decoder.3} parent=11 // pred_fallthru
          _
        // Predicated region
        $region25: #{transformer_decoder.3} parent=11 // pred_check
          %p597 = pneg %p169
        $region26: #{transformer_decoder.3} parent=11 // pred_check_branch
          %599 = sbr.rel (%p597) target = $region28
        $region27: #{transformer_decoder.3} parent=11 // pred_region
          _
        $region28: #{transformer_decoder.3} parent=11 // pred_fallthru
          _
        // Predicated region
        $region29: #{transformer_decoder.3} parent=11 // pred_check
          %p600 = pneg %p190
        $region30: #{transformer_decoder.3} parent=11 // pred_check_branch
          %602 = sbr.rel (%p600) target = $region32
        $region31: #{transformer_decoder.3} parent=11 // pred_region
          _
        $region32: #{transformer_decoder.3} parent=11 // pred_fallthru
          _
        // Predicated region
        $region33: #{transformer_decoder.3} parent=11 // pred_check
          %p603 = pneg %p211
        $region34: #{transformer_decoder.3} parent=11 // pred_check_branch
          %605 = sbr.rel (%p603) target = $region36
        $region35: #{transformer_decoder.3} parent=11 // pred_region
          _
        $region36: #{transformer_decoder.3} parent=11 // pred_fallthru
          _
        // Predicated region
        $region37: #{transformer_decoder.3} parent=11 // pred_check
          %p606 = pneg %p232
        $region38: #{transformer_decoder.3} parent=11 // pred_check_branch
          %608 = sbr.rel (%p606) target = $region40
        $region39: #{transformer_decoder.3} parent=11 // pred_region
          _
        $region40: #{transformer_decoder.3} parent=11 // pred_fallthru
          _
        // Predicated region
        $region41: #{transformer_decoder.3} parent=11 // pred_check
          %p609 = pneg %p253
        $region42: #{transformer_decoder.3} parent=11 // pred_check_branch
          %611 = sbr.rel (%p609) target = $region44
        $region43: #{transformer_decoder.3} parent=11 // pred_region
          _
        $region44: #{transformer_decoder.3} parent=11 // pred_fallthru
          _
        // Predicated region
        $region45: #{transformer_decoder.3} parent=11 // pred_check
          %p612 = pneg %p274
        $region46: #{transformer_decoder.3} parent=11 // pred_check_branch
          %614 = sbr.rel (%p612) target = $region48
        $region47: #{transformer_decoder.3} parent=11 // pred_region
          _
        $region48: #{transformer_decoder.3} parent=11 // pred_fallthru
          _
        // Predicated region
        $region49: #{transformer_decoder.3} parent=11 // pred_check
          %p615 = pneg %p295
        $region50: #{transformer_decoder.3} parent=11 // pred_check_branch
          %617 = sbr.rel (%p615) target = $region52
        $region51: #{transformer_decoder.3} parent=11 // pred_region
          _
        $region52: #{transformer_decoder.3} parent=11 // pred_fallthru
          _
        // Predicated region
        $region53: #{transformer_decoder.3} parent=11 // pred_check
          %p618 = pneg %p316
        $region54: #{transformer_decoder.3} parent=11 // pred_check_branch
          %620 = sbr.rel (%p618) target = $region56
        $region55: #{transformer_decoder.3} parent=11 // pred_region
          _
        $region56: #{transformer_decoder.3} parent=11 // pred_fallthru
          _
        // Predicated region
        $region57: #{transformer_decoder.3} parent=11 // pred_check
          %p621 = pneg %p337
        $region58: #{transformer_decoder.3} parent=11 // pred_check_branch
          %623 = sbr.rel (%p621) target = $region60
        $region59: #{transformer_decoder.3} parent=11 // pred_region
          _
        $region60: #{transformer_decoder.3} parent=11 // pred_fallthru
          _
        // Predicated region
        $region61: #{transformer_decoder.3} parent=11 // pred_check
          %p624 = pneg %p358
        $region62: #{transformer_decoder.3} parent=11 // pred_check_branch
          %626 = sbr.rel (%p624) target = $region64
        $region63: #{transformer_decoder.3} parent=11 // pred_region
          _
        $region64: #{transformer_decoder.3} parent=11 // pred_fallthru
          _
        // Predicated region
        $region65: #{transformer_decoder.3} parent=11 // pred_check
          %p627 = pneg %p379
        $region66: #{transformer_decoder.3} parent=11 // pred_check_branch
          %629 = sbr.rel (%p627) target = $region68
        $region67: #{transformer_decoder.3} parent=11 // pred_region
          _
        $region68: #{transformer_decoder.3} parent=11 // pred_fallthru
          _
        // Predicated region
        $region69: #{transformer_decoder.3} parent=11 // pred_check
          %p630 = pneg %p400
        $region70: #{transformer_decoder.3} parent=11 // pred_check_branch
          %632 = sbr.rel (%p630) target = $region72
        $region71: #{transformer_decoder.3} parent=11 // pred_region
          _
        $region72: #{transformer_decoder.3} parent=11 // pred_fallthru
          _
        // Predicated region
        $region73: #{transformer_decoder.3} parent=11 // pred_check
          %p633 = pneg %p421
        $region74: #{transformer_decoder.3} parent=11 // pred_check_branch
          %635 = sbr.rel (%p633) target = $region76
        $region75: #{transformer_decoder.3} parent=11 // pred_region
          _
        $region76: #{transformer_decoder.3} parent=11 // pred_fallthru
          _
        // Predicated region
        $region77: #{transformer_decoder.3} parent=11 // pred_check
          %p636 = pneg %p442
        $region78: #{transformer_decoder.3} parent=11 // pred_check_branch
          %638 = sbr.rel (%p636) target = $region80
        $region79: #{transformer_decoder.3} parent=11 // pred_region
          _
        $region80: #{transformer_decoder.3} parent=11 // pred_fallthru
          _
        // Predicated region
        $region81: #{transformer_decoder.3} parent=11 // pred_check
          %p639 = pneg %p463
        $region82: #{transformer_decoder.3} parent=11 // pred_check_branch
          %641 = sbr.rel (%p639) target = $region84
        $region83: #{transformer_decoder.3} parent=11 // pred_region
          _
        $region84: #{transformer_decoder.3} parent=11 // pred_fallthru
          _
        // Predicated region
        $region85: #{transformer_decoder.3} parent=11 // pred_check
          %p642 = pneg %p484
        $region86: #{transformer_decoder.3} parent=11 // pred_check_branch
          %644 = sbr.rel (%p642) target = $region88
        $region87: #{transformer_decoder.3} parent=11 // pred_region
          _
        $region88: #{transformer_decoder.3} parent=11 // pred_fallthru
          _
        // Predicated region
        $region89: #{transformer_decoder.3} parent=11 // pred_check
          %p645 = pneg %p505
        $region90: #{transformer_decoder.3} parent=11 // pred_check_branch
          %647 = sbr.rel (%p645) target = $region92
        $region91: #{transformer_decoder.3} parent=11 // pred_region
          _
        $region92: #{transformer_decoder.3} parent=11 // pred_fallthru
          _
        // Predicated region
        $region93: #{transformer_decoder.3} parent=11 // pred_check
          %p648 = pneg %p526
        $region94: #{transformer_decoder.3} parent=11 // pred_check_branch
          %650 = sbr.rel (%p648) target = $region96
        $region95: #{transformer_decoder.3} parent=11 // pred_region
          _
        $region96: #{transformer_decoder.3} parent=11 // pred_fallthru
          _
        // Predicated region
        $region97: #{transformer_decoder.3} parent=11 // pred_check
          %p651 = pneg %p547
        $region98: #{transformer_decoder.3} parent=11 // pred_check_branch
          %653 = sbr.rel (%p651) target = $region100
        $region99: #{transformer_decoder.3} parent=11 // pred_region
          _
        $region100: #{transformer_decoder.3} parent=11 // pred_fallthru
          _
      $region12: #{transformer_decoder.3} parent=5 // pred_fallthru
        _
      %p654 = scmp.lt.s32.totalorder %s33, 2
      // Predicated region
      $region101: #{transformer_decoder.3} parent=5 // pred_check
        %p655 = pneg %p654
      $region102: #{transformer_decoder.3} parent=5 // pred_check_branch
        %657 = sbr.rel (%p655) target = $region104
      $region103: #{transformer_decoder.3} parent=5 // pred_region
        // Predicated region
        $region105: #{transformer_decoder.3} parent=103 // pred_check
          %p658 = pneg %p53
        $region106: #{transformer_decoder.3} parent=103 // pred_check_branch
          %660 = sbr.rel (%p658) target = $region108
        $region107: #{transformer_decoder.3} parent=103 // pred_region
          %p661 = scmp.lt.s32.totalorder %s33, 1
          %s662 = scalar_select %p661, %s33, 1
          %s663 = smul.addr %s662, 4
          %s664 = scalar_lea.vmem %s0, %s663
        $region108: #{transformer_decoder.3} parent=103 // pred_fallthru
          _
        // Predicated region
        $region109: #{transformer_decoder.3} parent=103 // pred_check
          %p665 = pneg %p79
        $region110: #{transformer_decoder.3} parent=103 // pred_check_branch
          %667 = sbr.rel (%p665) target = $region112
        $region111: #{transformer_decoder.3} parent=103 // pred_region
          %p668 = scmp.lt.s32.totalorder %s33, 1
          %s669 = scalar_select %p668, %s33, 1
          %s670 = smul.addr %s669, 4
          %s671 = scalar_lea.vmem %s1, %s670
        $region112: #{transformer_decoder.3} parent=103 // pred_fallthru
          _
      $region104: #{transformer_decoder.3} parent=5 // pred_fallthru
        _
      %p672 = scmp.le.s32.totalorder 1, %s33
      %p673 = scmp.lt.s32.totalorder %s33, 3
      %p674 = pnand %p672, %p673
      %p675 = pneg %p674
      // Predicated region
      $region113: #{transformer_decoder.3} parent=5 // pred_check
        _
      $region114: #{transformer_decoder.3} parent=5 // pred_check_branch
        %677 = sbr.rel (%p674) target = $region116
      $region115: #{transformer_decoder.3} parent=5 // pred_region
        %s678 = ssub.s32 %s33, 1
        %p679 = scmp.lt.s32.totalorder %s38, 1
        %s680 = scalar_select %p679, %s38, 1
        %s681 = smul.addr %s680, 4
        %s682 = scalar_lea.vmem %s0, %s681
        %p683 = pneg %p59
        %p684 = pneg %p56
        %p685 = scmp.lt.s32.totalorder %s38, 1
        %s686 = scalar_select %p685, %s38, 1
        %s687 = smul.addr %s686, 4
        %s688 = scalar_lea.vmem %s1, %s687
        %p689 = pneg %p85
        %p690 = pneg %p82
        %p691 = pneg %p106
        %p692 = pneg %p103
        %p693 = pneg %p127
        %p694 = pneg %p124
        %p695 = pneg %p148
        %p696 = pneg %p145
        %p697 = pneg %p169
        %p698 = pneg %p166
        %p699 = pneg %p190
        %p700 = pneg %p187
        %p701 = pneg %p211
        %p702 = pneg %p208
        %p703 = pneg %p232
        %p704 = pneg %p229
        %p705 = pneg %p253
        %p706 = pneg %p250
        %p707 = pneg %p274
        %p708 = pneg %p271
        %p709 = pneg %p295
        %p710 = pneg %p292
        %p711 = pneg %p316
        %p712 = pneg %p313
        %p713 = pneg %p337
        %p714 = pneg %p334
        %p715 = pneg %p358
        %p716 = pneg %p355
        %p717 = pneg %p379
        %p718 = pneg %p376
        %p719 = pneg %p400
        %p720 = pneg %p397
        %p721 = pneg %p421
        %p722 = pneg %p418
        %p723 = pneg %p442
        %p724 = pneg %p439
        %p725 = pneg %p463
        %p726 = pneg %p460
        %p727 = pneg %p484
        %p728 = pneg %p481
        %p729 = pneg %p505
        %p730 = pneg %p502
        %p731 = pneg %p526
        %p732 = pneg %p523
        %p733 = pneg %p547
        %p734 = pneg %p544
        %p735 = pneg %p573
        %p736 = pneg %p570
        %s737 = sand.u32 %s560, 1
        %s738 = scalar_lea.sflag [#allocation3], %s737
        %s739 = sand.u32 %s560, 1
        %s740 = smul.addr %s739, 4
        %s741 = scalar_lea.vmem [#allocation2], %s740
        %p742 = scmp.lt.s32.totalorder %s38, 1
        %s743 = scalar_select %p742, %s38, 1
        %s744 = smul.addr %s743, 4
        %s745 = scalar_lea.vmem %s0, %s744
        %p746 = scmp.lt.s32.totalorder %s38, 1
        %s747 = scalar_select %p746, %s38, 1
        %s748 = smul.addr %s747, 4
        %s749 = scalar_lea.vmem %s1, %s748
        %v751 = vld [vmem:[%s745] sm:$0xf]
        %v752 = vld [vmem:[%s749] sm:$0xf]
        %v753 = vunpack.c.l.bf16 %v751
        %v754 = vld [vmem:[%s2] sm:$0xf]
        %v755 = vld [vmem:[%s2 + $0x4] sm:$0xf]
        %v756 = vld [vmem:[%s2 + $0x8] sm:$0xf]
        %v757 = vld [vmem:[%s2 + $0xc] sm:$0xf]
        %v758 = vld [vmem:[%s3] sm:$0x1]
        %v759 = vld [vmem:[%s4] sm:$0xf]
        %v760 = vld [vmem:[%s4 + $0x4] sm:$0xf]
        %v761 = vld [vmem:[%s4 + $0x8] sm:$0xf]
        %v762 = vld [vmem:[%s4 + $0xc] sm:$0xf]
        %v763 = vld [vmem:[%s5] sm:$0x1]
        %v764 = vld [vmem:[%s6] sm:$0xf]
        %v765 = vld [vmem:[%s6 + $0x4] sm:$0xf]
        %v766 = vld [vmem:[%s6 + $0x8] sm:$0xf]
        %v767 = vld [vmem:[%s6 + $0xc] sm:$0xf]
        %v768 = vld [vmem:[%s7] sm:$0x1]
        %v769 = vld [vmem:[%s8] sm:$0x1]
        %v770 = vld [vmem:[%s9] sm:$0x1]
        %v772 = vlaneseq
        %v773 = vshrl.u32 %v772, 7
        %v774 = vsub.s32 0, %v773
        %v775 = vrot.slane %v758, %v774
        %v781 = vunpack.c.l.b16 %v754
        %v782 = vunpack.c.l.b16 %v755
        %v783 = vunpack.c.l.b16 %v756
        %v784 = vunpack.c.l.b16 %v757
        %v785 = vpack.c.b16 %v782, %v781
        %v786 = vpack.c.b16 %v784, %v783
        %vm789 = vcmask 261120
        %v791 = vsel %vm789, %v751, 0
        %793 = vmatprep.subr.bf16.mxu0 0
        %794 = vmatpush1.bf16.msra.mxu0 %v785
        %795 = vmatprep.subr.bf16.mxu0 0
        %796 = vmatpush1.bf16.msra.mxu0 %v786
        %797 = vmatprep.subr.bf16.mxu0 0
        %798 = vmatpush1.bf16.msra.mxu0 0
        %799 = vmatprep.subr.bf16.mxu0 0
        %800 = vmatpush1.bf16.msra.mxu0 0
        %801 = vmatprep.subr.bf16.mxu0 0
        %802 = vmatpush1.bf16.msra.mxu0 0
        %803 = vmatprep.subr.bf16.mxu0 0
        %804 = vmatpush1.bf16.msra.mxu0 0
        %805 = vmatprep.subr.bf16.mxu0 0
        %806 = vmatpush1.bf16.msra.mxu0 0
        %807 = vmatprep.subr.bf16.mxu0 0
        %808 = vmatpush1.bf16.msra.mxu0 0
        %809 = vmatprep.subr.bf16.mxu0 0
        %810 = vmatpush1.bf16.msra.mxu0 0
        %811 = vmatprep.subr.bf16.mxu0 0
        %812 = vmatpush1.bf16.msra.mxu0 0
        %813 = vmatprep.subr.bf16.mxu0 0
        %814 = vmatpush1.bf16.msra.mxu0 0
        %815 = vmatprep.subr.bf16.mxu0 0
        %816 = vmatpush1.bf16.msra.mxu0 0
        %817 = vmatprep.subr.bf16.mxu0 0
        %818 = vmatpush1.bf16.msra.mxu0 0
        %819 = vmatprep.subr.bf16.mxu0 0
        %820 = vmatpush1.bf16.msra.mxu0 0
        %821 = vmatprep.subr.bf16.mxu0 0
        %822 = vmatpush1.bf16.msra.mxu0 0
        %823 = vmatprep.subr.bf16.mxu0 0
        %824 = vmatpush1.bf16.msra.mxu0 0
        %825 = vmatprep.mubr.bf16.mxu0 0
        %826 = vmatmul.mubr.bf16.gmra.mrb[0].mxu0 %v791
        %v827 = vpop.f32.mrb[0].mxu0
        %v828 = vadd.f32 %v775, %v827
        %v829 = vpop.f32.mrb[0].mxu0
        %v830 = vpop.f32.mrb[0].mxu0
        %v831 = vpop.f32.mrb[0].mxu0
        %832 = vdwg.mxu0
        %v834 = vlaneseq
        %v835 = vshrl.u32 %v834, 7
        %v836 = vsub.s32 0, %v835
        %v837 = vrot.slane %v763, %v836
        %v843 = vunpack.c.l.b16 %v759
        %v844 = vunpack.c.l.b16 %v760
        %v845 = vunpack.c.l.b16 %v761
        %v846 = vunpack.c.l.b16 %v762
        %v847 = vpack.c.b16 %v844, %v843
        %v848 = vpack.c.b16 %v846, %v845
        %851 = vmatprep.subr.bf16.mxu0 0
        %852 = vmatpush1.bf16.msra.mxu0 %v847
        %853 = vmatprep.subr.bf16.mxu0 0
        %854 = vmatpush1.bf16.msra.mxu0 %v848
        %855 = vmatprep.subr.bf16.mxu0 0
        %856 = vmatpush1.bf16.msra.mxu0 0
        %857 = vmatprep.subr.bf16.mxu0 0
        %858 = vmatpush1.bf16.msra.mxu0 0
        %859 = vmatprep.subr.bf16.mxu0 0
        %860 = vmatpush1.bf16.msra.mxu0 0
        %861 = vmatprep.subr.bf16.mxu0 0
        %862 = vmatpush1.bf16.msra.mxu0 0
        %863 = vmatprep.subr.bf16.mxu0 0
        %864 = vmatpush1.bf16.msra.mxu0 0
        %865 = vmatprep.subr.bf16.mxu0 0
        %866 = vmatpush1.bf16.msra.mxu0 0
        %867 = vmatprep.subr.bf16.mxu0 0
        %868 = vmatpush1.bf16.msra.mxu0 0
        %869 = vmatprep.subr.bf16.mxu0 0
        %870 = vmatpush1.bf16.msra.mxu0 0
        %871 = vmatprep.subr.bf16.mxu0 0
        %872 = vmatpush1.bf16.msra.mxu0 0
        %873 = vmatprep.subr.bf16.mxu0 0
        %874 = vmatpush1.bf16.msra.mxu0 0
        %875 = vmatprep.subr.bf16.mxu0 0
        %876 = vmatpush1.bf16.msra.mxu0 0
        %877 = vmatprep.subr.bf16.mxu0 0
        %878 = vmatpush1.bf16.msra.mxu0 0
        %879 = vmatprep.subr.bf16.mxu0 0
        %880 = vmatpush1.bf16.msra.mxu0 0
        %881 = vmatprep.subr.bf16.mxu0 0
        %882 = vmatpush1.bf16.msra.mxu0 0
        %883 = vmatprep.mubr.bf16.mxu0 0
        %884 = vmatmul.mubr.bf16.gmra.mrb[0].mxu0 %v791
        %v885 = vpop.f32.mrb[0].mxu0
        %v886 = vadd.f32 %v837, %v885
        %v887 = vpop.f32.mrb[0].mxu0
        %v888 = vpop.f32.mrb[0].mxu0
        %v889 = vpop.f32.mrb[0].mxu0
        %890 = vdwg.mxu0
        %v891 = vpack.c.bf16 %v828, %v828
        %v892 = vpack.c.bf16 %v886, %v886
        %vm893 = vcmask 64512
        %v895 = vsel %vm893, %v891, 0
        %v898 = vsel %vm893, %v892, 0
        %900 = vmatprep.subr.bf16.mxu0 0
        %901 = vmatpush1.bf16.xpose.msra.mxu0 %v898
        %902 = vmatprep.subr.bf16.mxu0 0
        %903 = vmatpush1.bf16.xpose.msra.mxu0 0
        %904 = vmatprep.subr.bf16.mxu0 0
        %905 = vmatpush1.bf16.xpose.msra.mxu0 0
        %906 = vmatprep.subr.bf16.mxu0 0
        %907 = vmatpush1.bf16.xpose.msra.mxu0 0
        %908 = vmatprep.subr.bf16.mxu0 0
        %909 = vmatpush1.bf16.xpose.msra.mxu0 0
        %910 = vmatprep.subr.bf16.mxu0 0
        %911 = vmatpush1.bf16.xpose.msra.mxu0 0
        %912 = vmatprep.subr.bf16.mxu0 0
        %913 = vmatpush1.bf16.xpose.msra.mxu0 0
        %914 = vmatprep.subr.bf16.mxu0 0
        %915 = vmatpush1.bf16.xpose.msra.mxu0 0
        %916 = vmatprep.subr.bf16.mxu0 0
        %917 = vmatpush1.bf16.xpose.msra.mxu0 0
        %918 = vmatprep.subr.bf16.mxu0 0
        %919 = vmatpush1.bf16.xpose.msra.mxu0 0
        %920 = vmatprep.subr.bf16.mxu0 0
        %921 = vmatpush1.bf16.xpose.msra.mxu0 0
        %922 = vmatprep.subr.bf16.mxu0 0
        %923 = vmatpush1.bf16.xpose.msra.mxu0 0
        %924 = vmatprep.subr.bf16.mxu0 0
        %925 = vmatpush1.bf16.xpose.msra.mxu0 0
        %926 = vmatprep.subr.bf16.mxu0 0
        %927 = vmatpush1.bf16.xpose.msra.mxu0 0
        %928 = vmatprep.subr.bf16.mxu0 0
        %929 = vmatpush1.bf16.xpose.msra.mxu0 0
        %930 = vmatprep.subr.bf16.mxu0 0
        %931 = vmatpush1.bf16.xpose.msra.mxu0 0
        %932 = vmatprep.mubr.bf16.mxu0 0
        %933 = vmatmul.mubr.bf16.gmra.mrb[0].mxu0 %v895
        %v934 = vpop.f32.mrb[0].mxu0
        %v935 = vadd.f32 0.0, %v934
        %v936 = vpop.f32.mrb[0].mxu0
        %v937 = vpop.f32.mrb[0].mxu0
        %v938 = vpop.f32.mrb[0].mxu0
        %939 = vdwg.mxu0
        %v940 = vsel %vm893, %v935, -inf
        %941 = vmax.xlane.f32.xlu0 %v940
        %v942 = vpop.xlane.xlu0 %941
        %v943 = vsub.f32 %v935, %v942
        %v944 = vmul.f32 %v943, 1.442695
        %v945 = vpow.pop %v944
        %v946 = vsel %vm893, %v945, 0.0
        %947 = vadd.xlane.f32.xlu0 %v946
        %v948 = vpop.xlane.xlu0 %947
        %v949 = vrcp.pop %v948
        %v950 = vmul.f32 %v945, %v949
        %v951 = vpack.c.bf16 %v950, %v950
        %953 = vrot.lane.b32.xlu0 %v892, 96
        %v954 = vpop.permute.xlu0 %953
        %v956 = vsel %vm893, %v951, 0
        %vm958 = vcmask 1043456
        %v960 = vsel %vm958, %v954, 0
        %962 = vmatprep.subr.bf16.mxu0 0
        %963 = vmatpush1.bf16.msra.mxu0 %v960
        %964 = vmatprep.subr.bf16.mxu0 0
        %965 = vmatpush1.bf16.msra.mxu0 0
        %966 = vmatprep.subr.bf16.mxu0 0
        %967 = vmatpush1.bf16.msra.mxu0 0
        %968 = vmatprep.subr.bf16.mxu0 0
        %969 = vmatpush1.bf16.msra.mxu0 0
        %970 = vmatprep.subr.bf16.mxu0 0
        %971 = vmatpush1.bf16.msra.mxu0 0
        %972 = vmatprep.subr.bf16.mxu0 0
        %973 = vmatpush1.bf16.msra.mxu0 0
        %974 = vmatprep.subr.bf16.mxu0 0
        %975 = vmatpush1.bf16.msra.mxu0 0
        %976 = vmatprep.subr.bf16.mxu0 0
        %977 = vmatpush1.bf16.msra.mxu0 0
        %978 = vmatprep.subr.bf16.mxu0 0
        %979 = vmatpush1.bf16.msra.mxu0 0
        %980 = vmatprep.subr.bf16.mxu0 0
        %981 = vmatpush1.bf16.msra.mxu0 0
        %982 = vmatprep.subr.bf16.mxu0 0
        %983 = vmatpush1.bf16.msra.mxu0 0
        %984 = vmatprep.subr.bf16.mxu0 0
        %985 = vmatpush1.bf16.msra.mxu0 0
        %986 = vmatprep.subr.bf16.mxu0 0
        %987 = vmatpush1.bf16.msra.mxu0 0
        %988 = vmatprep.subr.bf16.mxu0 0
        %989 = vmatpush1.bf16.msra.mxu0 0
        %990 = vmatprep.subr.bf16.mxu0 0
        %991 = vmatpush1.bf16.msra.mxu0 0
        %992 = vmatprep.subr.bf16.mxu0 0
        %993 = vmatpush1.bf16.msra.mxu0 0
        %994 = vmatprep.mubr.bf16.mxu0 0
        %995 = vmatmul.mubr.bf16.gmra.mrb[0].mxu0 %v956
        %v996 = vpop.f32.mrb[0].mxu0
        %v997 = vadd.f32 0.0, %v996
        %v998 = vpop.f32.mrb[0].mxu0
        %v999 = vpop.f32.mrb[0].mxu0
        %v1000 = vpop.f32.mrb[0].mxu0
        %1001 = vdwg.mxu0
        %1003 = vrot.lane.b32.xlu0 %v891, 120
        %v1004 = vpop.permute.xlu0 %1003
        %1005 = vrot.lane.b32.xlu0 %v892, 120
        %v1006 = vpop.permute.xlu0 %1005
        %v1008 = vsel %vm893, %v1004, 0
        %v1011 = vsel %vm893, %v1006, 0
        %1013 = vmatprep.subr.bf16.mxu0 0
        %1014 = vmatpush1.bf16.xpose.msra.mxu0 %v1011
        %1015 = vmatprep.subr.bf16.mxu0 0
        %1016 = vmatpush1.bf16.xpose.msra.mxu0 0
        %1017 = vmatprep.subr.bf16.mxu0 0
        %1018 = vmatpush1.bf16.xpose.msra.mxu0 0
        %1019 = vmatprep.subr.bf16.mxu0 0
        %1020 = vmatpush1.bf16.xpose.msra.mxu0 0
        %1021 = vmatprep.subr.bf16.mxu0 0
        %1022 = vmatpush1.bf16.xpose.msra.mxu0 0
        %1023 = vmatprep.subr.bf16.mxu0 0
        %1024 = vmatpush1.bf16.xpose.msra.mxu0 0
        %1025 = vmatprep.subr.bf16.mxu0 0
        %1026 = vmatpush1.bf16.xpose.msra.mxu0 0
        %1027 = vmatprep.subr.bf16.mxu0 0
        %1028 = vmatpush1.bf16.xpose.msra.mxu0 0
        %1029 = vmatprep.subr.bf16.mxu0 0
        %1030 = vmatpush1.bf16.xpose.msra.mxu0 0
        %1031 = vmatprep.subr.bf16.mxu0 0
        %1032 = vmatpush1.bf16.xpose.msra.mxu0 0
        %1033 = vmatprep.subr.bf16.mxu0 0
        %1034 = vmatpush1.bf16.xpose.msra.mxu0 0
        %1035 = vmatprep.subr.bf16.mxu0 0
        %1036 = vmatpush1.bf16.xpose.msra.mxu0 0
        %1037 = vmatprep.subr.bf16.mxu0 0
        %1038 = vmatpush1.bf16.xpose.msra.mxu0 0
        %1039 = vmatprep.subr.bf16.mxu0 0
        %1040 = vmatpush1.bf16.xpose.msra.mxu0 0
        %1041 = vmatprep.subr.bf16.mxu0 0
        %1042 = vmatpush1.bf16.xpose.msra.mxu0 0
        %1043 = vmatprep.subr.bf16.mxu0 0
        %1044 = vmatpush1.bf16.xpose.msra.mxu0 0
        %1045 = vmatprep.mubr.bf16.mxu0 0
        %1046 = vmatmul.mubr.bf16.gmra.mrb[0].mxu0 %v1008
        %v1047 = vpop.f32.mrb[0].mxu0
        %v1048 = vadd.f32 0.0, %v1047
        %v1049 = vpop.f32.mrb[0].mxu0
        %v1050 = vpop.f32.mrb[0].mxu0
        %v1051 = vpop.f32.mrb[0].mxu0
        %1052 = vdwg.mxu0
        %v1053 = vsel %vm893, %v1048, -inf
        %1054 = vmax.xlane.f32.xlu0 %v1053
        %v1055 = vpop.xlane.xlu0 %1054
        %v1056 = vsub.f32 %v1048, %v1055
        %v1057 = vmul.f32 %v1056, 1.442695
        %v1058 = vpow.pop %v1057
        %v1059 = vsel %vm893, %v1058, 0.0
        %1060 = vadd.xlane.f32.xlu0 %v1059
        %v1061 = vpop.xlane.xlu0 %1060
        %v1062 = vrcp.pop %v1061
        %v1063 = vmul.f32 %v1058, %v1062
        %v1064 = vpack.c.bf16 %v1063, %v1063
        %1065 = vrot.lane.b32.xlu0 %v892, 88
        %v1066 = vpop.permute.xlu0 %1065
        %v1068 = vsel %vm893, %v1064, 0
        %v1071 = vsel %vm958, %v1066, 0
        %1073 = vmatprep.subr.bf16.mxu0 0
        %1074 = vmatpush1.bf16.msra.mxu0 %v1071
        %1075 = vmatprep.subr.bf16.mxu0 0
        %1076 = vmatpush1.bf16.msra.mxu0 0
        %1077 = vmatprep.subr.bf16.mxu0 0
        %1078 = vmatpush1.bf16.msra.mxu0 0
        %1079 = vmatprep.subr.bf16.mxu0 0
        %1080 = vmatpush1.bf16.msra.mxu0 0
        %1081 = vmatprep.subr.bf16.mxu0 0
        %1082 = vmatpush1.bf16.msra.mxu0 0
        %1083 = vmatprep.subr.bf16.mxu0 0
        %1084 = vmatpush1.bf16.msra.mxu0 0
        %1085 = vmatprep.subr.bf16.mxu0 0
        %1086 = vmatpush1.bf16.msra.mxu0 0
        %1087 = vmatprep.subr.bf16.mxu0 0
        %1088 = vmatpush1.bf16.msra.mxu0 0
        %1089 = vmatprep.subr.bf16.mxu0 0
        %1090 = vmatpush1.bf16.msra.mxu0 0
        %1091 = vmatprep.subr.bf16.mxu0 0
        %1092 = vmatpush1.bf16.msra.mxu0 0
        %1093 = vmatprep.subr.bf16.mxu0 0
        %1094 = vmatpush1.bf16.msra.mxu0 0
        %1095 = vmatprep.subr.bf16.mxu0 0
        %1096 = vmatpush1.bf16.msra.mxu0 0
        %1097 = vmatprep.subr.bf16.mxu0 0
        %1098 = vmatpush1.bf16.msra.mxu0 0
        %1099 = vmatprep.subr.bf16.mxu0 0
        %1100 = vmatpush1.bf16.msra.mxu0 0
        %1101 = vmatprep.subr.bf16.mxu0 0
        %1102 = vmatpush1.bf16.msra.mxu0 0
        %1103 = vmatprep.subr.bf16.mxu0 0
        %1104 = vmatpush1.bf16.msra.mxu0 0
        %1105 = vmatprep.mubr.bf16.mxu0 0
        %1106 = vmatmul.mubr.bf16.gmra.mrb[0].mxu0 %v1068
        %v1107 = vpop.f32.mrb[0].mxu0
        %v1108 = vadd.f32 0.0, %v1107
        %v1109 = vpop.f32.mrb[0].mxu0
        %v1110 = vpop.f32.mrb[0].mxu0
        %v1111 = vpop.f32.mrb[0].mxu0
        %1112 = vdwg.mxu0
        %1113 = vrot.lane.b32.xlu0 %v891, 112
        %v1114 = vpop.permute.xlu0 %1113
        %1115 = vrot.lane.b32.xlu0 %v892, 112
        %v1116 = vpop.permute.xlu0 %1115
        %v1118 = vsel %vm893, %v1114, 0
        %v1121 = vsel %vm893, %v1116, 0
        %1123 = vmatprep.subr.bf16.mxu0 0
        %1124 = vmatpush1.bf16.xpose.msra.mxu0 %v1121
        %1125 = vmatprep.subr.bf16.mxu0 0
        %1126 = vmatpush1.bf16.xpose.msra.mxu0 0
        %1127 = vmatprep.subr.bf16.mxu0 0
        %1128 = vmatpush1.bf16.xpose.msra.mxu0 0
        %1129 = vmatprep.subr.bf16.mxu0 0
        %1130 = vmatpush1.bf16.xpose.msra.mxu0 0
        %1131 = vmatprep.subr.bf16.mxu0 0
        %1132 = vmatpush1.bf16.xpose.msra.mxu0 0
        %1133 = vmatprep.subr.bf16.mxu0 0
        %1134 = vmatpush1.bf16.xpose.msra.mxu0 0
        %1135 = vmatprep.subr.bf16.mxu0 0
        %1136 = vmatpush1.bf16.xpose.msra.mxu0 0
        %1137 = vmatprep.subr.bf16.mxu0 0
        %1138 = vmatpush1.bf16.xpose.msra.mxu0 0
        %1139 = vmatprep.subr.bf16.mxu0 0
        %1140 = vmatpush1.bf16.xpose.msra.mxu0 0
        %1141 = vmatprep.subr.bf16.mxu0 0
        %1142 = vmatpush1.bf16.xpose.msra.mxu0 0
        %1143 = vmatprep.subr.bf16.mxu0 0
        %1144 = vmatpush1.bf16.xpose.msra.mxu0 0
        %1145 = vmatprep.subr.bf16.mxu0 0
        %1146 = vmatpush1.bf16.xpose.msra.mxu0 0
        %1147 = vmatprep.subr.bf16.mxu0 0
        %1148 = vmatpush1.bf16.xpose.msra.mxu0 0
        %1149 = vmatprep.subr.bf16.mxu0 0
        %1150 = vmatpush1.bf16.xpose.msra.mxu0 0
        %1151 = vmatprep.subr.bf16.mxu0 0
        %1152 = vmatpush1.bf16.xpose.msra.mxu0 0
        %1153 = vmatprep.subr.bf16.mxu0 0
        %1154 = vmatpush1.bf16.xpose.msra.mxu0 0
        %1155 = vmatprep.mubr.bf16.mxu0 0
        %1156 = vmatmul.mubr.bf16.gmra.mrb[0].mxu0 %v1118
        %v1157 = vpop.f32.mrb[0].mxu0
        %v1158 = vadd.f32 0.0, %v1157
        %v1159 = vpop.f32.mrb[0].mxu0
        %v1160 = vpop.f32.mrb[0].mxu0
        %v1161 = vpop.f32.mrb[0].mxu0
        %1162 = vdwg.mxu0
        %v1163 = vsel %vm893, %v1158, -inf
        %1164 = vmax.xlane.f32.xlu0 %v1163
        %v1165 = vpop.xlane.xlu0 %1164
        %v1166 = vsub.f32 %v1158, %v1165
        %v1167 = vmul.f32 %v1166, 1.442695
        %v1168 = vpow.pop %v1167
        %v1169 = vsel %vm893, %v1168, 0.0
        %1170 = vadd.xlane.f32.xlu0 %v1169
        %v1171 = vpop.xlane.xlu0 %1170
        %v1172 = vrcp.pop %v1171
        %v1173 = vmul.f32 %v1168, %v1172
        %v1174 = vpack.c.bf16 %v1173, %v1173
        %1175 = vrot.lane.b32.xlu0 %v892, 80
        %v1176 = vpop.permute.xlu0 %1175
        %v1178 = vsel %vm893, %v1174, 0
        %v1181 = vsel %vm958, %v1176, 0
        %1183 = vmatprep.subr.bf16.mxu0 0
        %1184 = vmatpush1.bf16.msra.mxu0 %v1181
        %1185 = vmatprep.subr.bf16.mxu0 0
        %1186 = vmatpush1.bf16.msra.mxu0 0
        %1187 = vmatprep.subr.bf16.mxu0 0
        %1188 = vmatpush1.bf16.msra.mxu0 0
        %1189 = vmatprep.subr.bf16.mxu0 0
        %1190 = vmatpush1.bf16.msra.mxu0 0
        %1191 = vmatprep.subr.bf16.mxu0 0
        %1192 = vmatpush1.bf16.msra.mxu0 0
        %1193 = vmatprep.subr.bf16.mxu0 0
        %1194 = vmatpush1.bf16.msra.mxu0 0
        %1195 = vmatprep.subr.bf16.mxu0 0
        %1196 = vmatpush1.bf16.msra.mxu0 0
        %1197 = vmatprep.subr.bf16.mxu0 0
        %1198 = vmatpush1.bf16.msra.mxu0 0
        %1199 = vmatprep.subr.bf16.mxu0 0
        %1200 = vmatpush1.bf16.msra.mxu0 0
        %1201 = vmatprep.subr.bf16.mxu0 0
        %1202 = vmatpush1.bf16.msra.mxu0 0
        %1203 = vmatprep.subr.bf16.mxu0 0
        %1204 = vmatpush1.bf16.msra.mxu0 0
        %1205 = vmatprep.subr.bf16.mxu0 0
        %1206 = vmatpush1.bf16.msra.mxu0 0
        %1207 = vmatprep.subr.bf16.mxu0 0
        %1208 = vmatpush1.bf16.msra.mxu0 0
        %1209 = vmatprep.subr.bf16.mxu0 0
        %1210 = vmatpush1.bf16.msra.mxu0 0
        %1211 = vmatprep.subr.bf16.mxu0 0
        %1212 = vmatpush1.bf16.msra.mxu0 0
        %1213 = vmatprep.subr.bf16.mxu0 0
        %1214 = vmatpush1.bf16.msra.mxu0 0
        %1215 = vmatprep.mubr.bf16.mxu0 0
        %1216 = vmatmul.mubr.bf16.gmra.mrb[0].mxu0 %v1178
        %v1217 = vpop.f32.mrb[0].mxu0
        %v1218 = vadd.f32 0.0, %v1217
        %v1219 = vpop.f32.mrb[0].mxu0
        %v1220 = vpop.f32.mrb[0].mxu0
        %v1221 = vpop.f32.mrb[0].mxu0
        %1222 = vdwg.mxu0
        %1223 = vrot.lane.b32.xlu0 %v891, 104
        %v1224 = vpop.permute.xlu0 %1223
        %1225 = vrot.lane.b32.xlu0 %v892, 104
        %v1226 = vpop.permute.xlu0 %1225
        %v1228 = vsel %vm893, %v1224, 0
        %v1231 = vsel %vm893, %v1226, 0
        %1233 = vmatprep.subr.bf16.mxu0 0
        %1234 = vmatpush1.bf16.xpose.msra.mxu0 %v1231
        %1235 = vmatprep.subr.bf16.mxu0 0
        %1236 = vmatpush1.bf16.xpose.msra.mxu0 0
        %1237 = vmatprep.subr.bf16.mxu0 0
        %1238 = vmatpush1.bf16.xpose.msra.mxu0 0
        %1239 = vmatprep.subr.bf16.mxu0 0
        %1240 = vmatpush1.bf16.xpose.msra.mxu0 0
        %1241 = vmatprep.subr.bf16.mxu0 0
        %1242 = vmatpush1.bf16.xpose.msra.mxu0 0
        %1243 = vmatprep.subr.bf16.mxu0 0
        %1244 = vmatpush1.bf16.xpose.msra.mxu0 0
        %1245 = vmatprep.subr.bf16.mxu0 0
        %1246 = vmatpush1.bf16.xpose.msra.mxu0 0
        %1247 = vmatprep.subr.bf16.mxu0 0
        %1248 = vmatpush1.bf16.xpose.msra.mxu0 0
        %1249 = vmatprep.subr.bf16.mxu0 0
        %1250 = vmatpush1.bf16.xpose.msra.mxu0 0
        %1251 = vmatprep.subr.bf16.mxu0 0
        %1252 = vmatpush1.bf16.xpose.msra.mxu0 0
        %1253 = vmatprep.subr.bf16.mxu0 0
        %1254 = vmatpush1.bf16.xpose.msra.mxu0 0
        %1255 = vmatprep.subr.bf16.mxu0 0
        %1256 = vmatpush1.bf16.xpose.msra.mxu0 0
        %1257 = vmatprep.subr.bf16.mxu0 0
        %1258 = vmatpush1.bf16.xpose.msra.mxu0 0
        %1259 = vmatprep.subr.bf16.mxu0 0
        %1260 = vmatpush1.bf16.xpose.msra.mxu0 0
        %1261 = vmatprep.subr.bf16.mxu0 0
        %1262 = vmatpush1.bf16.xpose.msra.mxu0 0
        %1263 = vmatprep.subr.bf16.mxu0 0
        %1264 = vmatpush1.bf16.xpose.msra.mxu0 0
        %1265 = vmatprep.mubr.bf16.mxu0 0
        %1266 = vmatmul.mubr.bf16.gmra.mrb[0].mxu0 %v1228
        %v1267 = vpop.f32.mrb[0].mxu0
        %v1268 = vadd.f32 0.0, %v1267
        %v1269 = vpop.f32.mrb[0].mxu0
        %v1270 = vpop.f32.mrb[0].mxu0
        %v1271 = vpop.f32.mrb[0].mxu0
        %1272 = vdwg.mxu0
        %v1273 = vsel %vm893, %v1268, -inf
        %1274 = vmax.xlane.f32.xlu0 %v1273
        %v1275 = vpop.xlane.xlu0 %1274
        %v1276 = vsub.f32 %v1268, %v1275
        %v1277 = vmul.f32 %v1276, 1.442695
        %v1278 = vpow.pop %v1277
        %v1279 = vsel %vm893, %v1278, 0.0
        %1280 = vadd.xlane.f32.xlu0 %v1279
        %v1281 = vpop.xlane.xlu0 %1280
        %v1282 = vrcp.pop %v1281
        %v1283 = vmul.f32 %v1278, %v1282
        %v1284 = vpack.c.bf16 %v1283, %v1283
        %1285 = vrot.lane.b32.xlu0 %v892, 72
        %v1286 = vpop.permute.xlu0 %1285
        %v1288 = vsel %vm893, %v1284, 0
        %v1291 = vsel %vm958, %v1286, 0
        %1293 = vmatprep.subr.bf16.mxu0 0
        %1294 = vmatpush1.bf16.msra.mxu0 %v1291
        %1295 = vmatprep.subr.bf16.mxu0 0
        %1296 = vmatpush1.bf16.msra.mxu0 0
        %1297 = vmatprep.subr.bf16.mxu0 0
        %1298 = vmatpush1.bf16.msra.mxu0 0
        %1299 = vmatprep.subr.bf16.mxu0 0
        %1300 = vmatpush1.bf16.msra.mxu0 0
        %1301 = vmatprep.subr.bf16.mxu0 0
        %1302 = vmatpush1.bf16.msra.mxu0 0
        %1303 = vmatprep.subr.bf16.mxu0 0
        %1304 = vmatpush1.bf16.msra.mxu0 0
        %1305 = vmatprep.subr.bf16.mxu0 0
        %1306 = vmatpush1.bf16.msra.mxu0 0
        %1307 = vmatprep.subr.bf16.mxu0 0
        %1308 = vmatpush1.bf16.msra.mxu0 0
        %1309 = vmatprep.subr.bf16.mxu0 0
        %1310 = vmatpush1.bf16.msra.mxu0 0
        %1311 = vmatprep.subr.bf16.mxu0 0
        %1312 = vmatpush1.bf16.msra.mxu0 0
        %1313 = vmatprep.subr.bf16.mxu0 0
        %1314 = vmatpush1.bf16.msra.mxu0 0
        %1315 = vmatprep.subr.bf16.mxu0 0
        %1316 = vmatpush1.bf16.msra.mxu0 0
        %1317 = vmatprep.subr.bf16.mxu0 0
        %1318 = vmatpush1.bf16.msra.mxu0 0
        %1319 = vmatprep.subr.bf16.mxu0 0
        %1320 = vmatpush1.bf16.msra.mxu0 0
        %1321 = vmatprep.subr.bf16.mxu0 0
        %1322 = vmatpush1.bf16.msra.mxu0 0
        %1323 = vmatprep.subr.bf16.mxu0 0
        %1324 = vmatpush1.bf16.msra.mxu0 0
        %1325 = vmatprep.mubr.bf16.mxu0 0
        %1326 = vmatmul.mubr.bf16.gmra.mrb[0].mxu0 %v1288
        %v1327 = vpop.f32.mrb[0].mxu0
        %v1328 = vadd.f32 0.0, %v1327
        %v1329 = vpop.f32.mrb[0].mxu0
        %v1330 = vpop.f32.mrb[0].mxu0
        %v1331 = vpop.f32.mrb[0].mxu0
        %1332 = vdwg.mxu0
        %1334 = vrot.lane.b32.xlu0 %v1108, 8
        %v1335 = vpop.permute.xlu0 %1334
        %1338 = vrot.lane.b32.xlu0 %v1218, 16
        %v1339 = vpop.permute.xlu0 %1338
        %1342 = vrot.lane.b32.xlu0 %v1328, 24
        %v1343 = vpop.permute.xlu0 %1342
        %v1345 = vsel %vm893, %v997, %v1335
        %vm1346 = vcmask 130048
        %v1347 = vsel %vm1346, %v1345, %v1339
        %vm1348 = vcmask 195584
        %v1349 = vsel %vm1348, %v1347, %v1343
        %v1350 = vpack.c.bf16 %v1349, %v1349
        %v1352 = vlaneseq
        %v1353 = vshrl.u32 %v1352, 7
        %v1354 = vsub.s32 0, %v1353
        %v1355 = vrot.slane %v768, %v1354
        %v1361 = vunpack.c.l.b16 %v764
        %v1362 = vunpack.c.l.b16 %v765
        %v1363 = vunpack.c.l.b16 %v766
        %v1364 = vunpack.c.l.b16 %v767
        %v1365 = vpack.c.b16 %v1362, %v1361
        %v1366 = vpack.c.b16 %v1364, %v1363
        %v1370 = vsel %vm789, %v1350, 0
        %1372 = vmatprep.subr.bf16.mxu0 0
        %1373 = vmatpush1.bf16.msra.mxu0 %v1365
        %1374 = vmatprep.subr.bf16.mxu0 0
        %1375 = vmatpush1.bf16.msra.mxu0 %v1366
        %1376 = vmatprep.subr.bf16.mxu0 0
        %1377 = vmatpush1.bf16.msra.mxu0 0
        %1378 = vmatprep.subr.bf16.mxu0 0
        %1379 = vmatpush1.bf16.msra.mxu0 0
        %1380 = vmatprep.subr.bf16.mxu0 0
        %1381 = vmatpush1.bf16.msra.mxu0 0
        %1382 = vmatprep.subr.bf16.mxu0 0
        %1383 = vmatpush1.bf16.msra.mxu0 0
        %1384 = vmatprep.subr.bf16.mxu0 0
        %1385 = vmatpush1.bf16.msra.mxu0 0
        %1386 = vmatprep.subr.bf16.mxu0 0
        %1387 = vmatpush1.bf16.msra.mxu0 0
        %1388 = vmatprep.subr.bf16.mxu0 0
        %1389 = vmatpush1.bf16.msra.mxu0 0
        %1390 = vmatprep.subr.bf16.mxu0 0
        %1391 = vmatpush1.bf16.msra.mxu0 0
        %1392 = vmatprep.subr.bf16.mxu0 0
        %1393 = vmatpush1.bf16.msra.mxu0 0
        %1394 = vmatprep.subr.bf16.mxu0 0
        %1395 = vmatpush1.bf16.msra.mxu0 0
        %1396 = vmatprep.subr.bf16.mxu0 0
        %1397 = vmatpush1.bf16.msra.mxu0 0
        %1398 = vmatprep.subr.bf16.mxu0 0
        %1399 = vmatpush1.bf16.msra.mxu0 0
        %1400 = vmatprep.subr.bf16.mxu0 0
        %1401 = vmatpush1.bf16.msra.mxu0 0
        %1402 = vmatprep.subr.bf16.mxu0 0
        %1403 = vmatpush1.bf16.msra.mxu0 0
        %1404 = vmatprep.mubr.bf16.mxu0 0
        %1405 = vmatmul.mubr.bf16.gmra.mrb[0].mxu0 %v1370
        %v1406 = vpop.f32.mrb[0].mxu0
        %v1407 = vadd.f32 %v1355, %v1406
        %v1408 = vpop.f32.mrb[0].mxu0
        %v1409 = vpop.f32.mrb[0].mxu0
        %v1410 = vpop.f32.mrb[0].mxu0
        %1411 = vdwg.mxu0
        %v1412 = vadd.f32 %v753, %v1407
        %v1413 = vsel %vm789, %v1412, 0.0
        %1414 = vadd.xlane.f32.xlu0 %v1413
        %v1415 = vpop.xlane.xlu0 %1414
        %v1416 = vrcp.pop 32.0
        %v1417 = vmul.f32 %v1415, %v1416
        %v1418 = vsub.f32 %v1412, %v1417
        %v1419 = vmul.f32 %v1418, %v1418
        %v1420 = vsel %vm789, %v1419, 0.0
        %1421 = vadd.xlane.f32.xlu0 %v1420
        %v1422 = vpop.xlane.xlu0 %1421
        %v1423 = vmul.f32 %v1422, %v1416
        %v1424 = vadd.f32 %v1423, 1e-05
        %v1425 = vrsqrt.pop %v1424
        %v1426 = vmul.f32 %v1418, %v1425
        %v1428 = vlaneseq
        %v1429 = vshrl.u32 %v1428, 7
        %v1430 = vsub.s32 0, %v1429
        %v1431 = vrot.slane %v769, %v1430
        %v1433 = vmul.f32 %v1426, %v1431
        %v1435 = vlaneseq
        %v1436 = vshrl.u32 %v1435, 7
        %v1437 = vsub.s32 0, %v1436
        %v1438 = vrot.slane %v770, %v1437
        %v1440 = vadd.f32 %v1433, %v1438
        %v1441 = vpack.c.bf16 %v1440, %v1440
        %v1442 = vld [vmem:[%s10] sm:$0xf]
        %v1443 = vld [vmem:[%s10 + $0x4] sm:$0xf]
        %v1444 = vld [vmem:[%s10 + $0x8] sm:$0xf]
        %v1445 = vld [vmem:[%s10 + $0xc] sm:$0xf]
        %v1446 = vld [vmem:[%s11] sm:$0x1]
        %v1447 = vld [vmem:[%s12] sm:$0xf]
        %v1448 = vld [vmem:[%s12 + $0x4] sm:$0xf]
        %v1449 = vld [vmem:[%s12 + $0x8] sm:$0xf]
        %v1450 = vld [vmem:[%s12 + $0xc] sm:$0xf]
        %v1451 = vld [vmem:[%s13] sm:$0x1]
        %v1452 = vld [vmem:[%s14] sm:$0xf]
        %v1453 = vld [vmem:[%s14 + $0x4] sm:$0xf]
        %v1454 = vld [vmem:[%s14 + $0x8] sm:$0xf]
        %v1455 = vld [vmem:[%s14 + $0xc] sm:$0xf]
        %v1456 = vld [vmem:[%s15] sm:$0x1]
        %v1457 = vld [vmem:[%s16] sm:$0x1]
        %v1458 = vld [vmem:[%s17] sm:$0x1]
        %v1460 = vlaneseq
        %v1461 = vshrl.u32 %v1460, 7
        %v1462 = vsub.s32 0, %v1461
        %v1463 = vrot.slane %v1446, %v1462
        %v1469 = vunpack.c.l.b16 %v1442
        %v1470 = vunpack.c.l.b16 %v1443
        %v1471 = vunpack.c.l.b16 %v1444
        %v1472 = vunpack.c.l.b16 %v1445
        %v1473 = vpack.c.b16 %v1470, %v1469
        %v1474 = vpack.c.b16 %v1472, %v1471
        %v1478 = vsel %vm789, %v1441, 0
        %1480 = vmatprep.subr.bf16.mxu0 0
        %1481 = vmatpush1.bf16.msra.mxu0 %v1473
        %1482 = vmatprep.subr.bf16.mxu0 0
        %1483 = vmatpush1.bf16.msra.mxu0 %v1474
        %1484 = vmatprep.subr.bf16.mxu0 0
        %1485 = vmatpush1.bf16.msra.mxu0 0
        %1486 = vmatprep.subr.bf16.mxu0 0
        %1487 = vmatpush1.bf16.msra.mxu0 0
        %1488 = vmatprep.subr.bf16.mxu0 0
        %1489 = vmatpush1.bf16.msra.mxu0 0
        %1490 = vmatprep.subr.bf16.mxu0 0
        %1491 = vmatpush1.bf16.msra.mxu0 0
        %1492 = vmatprep.subr.bf16.mxu0 0
        %1493 = vmatpush1.bf16.msra.mxu0 0
        %1494 = vmatprep.subr.bf16.mxu0 0
        %1495 = vmatpush1.bf16.msra.mxu0 0
        %1496 = vmatprep.subr.bf16.mxu0 0
        %1497 = vmatpush1.bf16.msra.mxu0 0
        %1498 = vmatprep.subr.bf16.mxu0 0
        %1499 = vmatpush1.bf16.msra.mxu0 0
        %1500 = vmatprep.subr.bf16.mxu0 0
        %1501 = vmatpush1.bf16.msra.mxu0 0
        %1502 = vmatprep.subr.bf16.mxu0 0
        %1503 = vmatpush1.bf16.msra.mxu0 0
        %1504 = vmatprep.subr.bf16.mxu0 0
        %1505 = vmatpush1.bf16.msra.mxu0 0
        %1506 = vmatprep.subr.bf16.mxu0 0
        %1507 = vmatpush1.bf16.msra.mxu0 0
        %1508 = vmatprep.subr.bf16.mxu0 0
        %1509 = vmatpush1.bf16.msra.mxu0 0
        %1510 = vmatprep.subr.bf16.mxu0 0
        %1511 = vmatpush1.bf16.msra.mxu0 0
        %1512 = vmatprep.mubr.bf16.mxu0 0
        %1513 = vmatmul.mubr.bf16.gmra.mrb[0].mxu0 %v1478
        %v1514 = vpop.f32.mrb[0].mxu0
        %v1515 = vadd.f32 %v1463, %v1514
        %v1516 = vpop.f32.mrb[0].mxu0
        %v1517 = vpop.f32.mrb[0].mxu0
        %v1518 = vpop.f32.mrb[0].mxu0
        %1519 = vdwg.mxu0
        %v1521 = vlaneseq
        %v1522 = vshrl.u32 %v1521, 7
        %v1523 = vsub.s32 0, %v1522
        %v1524 = vrot.slane %v1451, %v1523
        %v1530 = vunpack.c.l.b16 %v1447
        %v1531 = vunpack.c.l.b16 %v1448
        %v1532 = vunpack.c.l.b16 %v1449
        %v1533 = vunpack.c.l.b16 %v1450
        %v1534 = vpack.c.b16 %v1531, %v1530
        %v1535 = vpack.c.b16 %v1533, %v1532
        %v1539 = vsel %vm789, %v752, 0
        %1541 = vmatprep.subr.bf16.mxu0 0
        %1542 = vmatpush1.bf16.msra.mxu0 %v1534
        %1543 = vmatprep.subr.bf16.mxu0 0
        %1544 = vmatpush1.bf16.msra.mxu0 %v1535
        %1545 = vmatprep.subr.bf16.mxu0 0
        %1546 = vmatpush1.bf16.msra.mxu0 0
        %1547 = vmatprep.subr.bf16.mxu0 0
        %1548 = vmatpush1.bf16.msra.mxu0 0
        %1549 = vmatprep.subr.bf16.mxu0 0
        %1550 = vmatpush1.bf16.msra.mxu0 0
        %1551 = vmatprep.subr.bf16.mxu0 0
        %1552 = vmatpush1.bf16.msra.mxu0 0
        %1553 = vmatprep.subr.bf16.mxu0 0
        %1554 = vmatpush1.bf16.msra.mxu0 0
        %1555 = vmatprep.subr.bf16.mxu0 0
        %1556 = vmatpush1.bf16.msra.mxu0 0
        %1557 = vmatprep.subr.bf16.mxu0 0
        %1558 = vmatpush1.bf16.msra.mxu0 0
        %1559 = vmatprep.subr.bf16.mxu0 0
        %1560 = vmatpush1.bf16.msra.mxu0 0
        %1561 = vmatprep.subr.bf16.mxu0 0
        %1562 = vmatpush1.bf16.msra.mxu0 0
        %1563 = vmatprep.subr.bf16.mxu0 0
        %1564 = vmatpush1.bf16.msra.mxu0 0
        %1565 = vmatprep.subr.bf16.mxu0 0
        %1566 = vmatpush1.bf16.msra.mxu0 0
        %1567 = vmatprep.subr.bf16.mxu0 0
        %1568 = vmatpush1.bf16.msra.mxu0 0
        %1569 = vmatprep.subr.bf16.mxu0 0
        %1570 = vmatpush1.bf16.msra.mxu0 0
        %1571 = vmatprep.subr.bf16.mxu0 0
        %1572 = vmatpush1.bf16.msra.mxu0 0
        %1573 = vmatprep.mubr.bf16.mxu0 0
        %1574 = vmatmul.mubr.bf16.gmra.mrb[0].mxu0 %v1539
        %v1575 = vpop.f32.mrb[0].mxu0
        %v1576 = vadd.f32 %v1524, %v1575
        %v1577 = vpop.f32.mrb[0].mxu0
        %v1578 = vpop.f32.mrb[0].mxu0
        %v1579 = vpop.f32.mrb[0].mxu0
        %1580 = vdwg.mxu0
        %v1581 = vpack.c.bf16 %v1515, %v1515
        %v1582 = vpack.c.bf16 %v1576, %v1576
        %v1584 = vsel %vm893, %v1581, 0
        %v1587 = vsel %vm893, %v1582, 0
        %1589 = vmatprep.subr.bf16.mxu0 0
        %1590 = vmatpush1.bf16.xpose.msra.mxu0 %v1587
        %1591 = vmatprep.subr.bf16.mxu0 0
        %1592 = vmatpush1.bf16.xpose.msra.mxu0 0
        %1593 = vmatprep.subr.bf16.mxu0 0
        %1594 = vmatpush1.bf16.xpose.msra.mxu0 0
        %1595 = vmatprep.subr.bf16.mxu0 0
        %1596 = vmatpush1.bf16.xpose.msra.mxu0 0
        %1597 = vmatprep.subr.bf16.mxu0 0
        %1598 = vmatpush1.bf16.xpose.msra.mxu0 0
        %1599 = vmatprep.subr.bf16.mxu0 0
        %1600 = vmatpush1.bf16.xpose.msra.mxu0 0
        %1601 = vmatprep.subr.bf16.mxu0 0
        %1602 = vmatpush1.bf16.xpose.msra.mxu0 0
        %1603 = vmatprep.subr.bf16.mxu0 0
        %1604 = vmatpush1.bf16.xpose.msra.mxu0 0
        %1605 = vmatprep.subr.bf16.mxu0 0
        %1606 = vmatpush1.bf16.xpose.msra.mxu0 0
        %1607 = vmatprep.subr.bf16.mxu0 0
        %1608 = vmatpush1.bf16.xpose.msra.mxu0 0
        %1609 = vmatprep.subr.bf16.mxu0 0
        %1610 = vmatpush1.bf16.xpose.msra.mxu0 0
        %1611 = vmatprep.subr.bf16.mxu0 0
        %1612 = vmatpush1.bf16.xpose.msra.mxu0 0
        %1613 = vmatprep.subr.bf16.mxu0 0
        %1614 = vmatpush1.bf16.xpose.msra.mxu0 0
        %1615 = vmatprep.subr.bf16.mxu0 0
        %1616 = vmatpush1.bf16.xpose.msra.mxu0 0
        %1617 = vmatprep.subr.bf16.mxu0 0
        %1618 = vmatpush1.bf16.xpose.msra.mxu0 0
        %1619 = vmatprep.subr.bf16.mxu0 0
        %1620 = vmatpush1.bf16.xpose.msra.mxu0 0
        %1621 = vmatprep.mubr.bf16.mxu0 0
        %1622 = vmatmul.mubr.bf16.gmra.mrb[0].mxu0 %v1584
        %v1623 = vpop.f32.mrb[0].mxu0
        %v1624 = vadd.f32 0.0, %v1623
        %v1625 = vpop.f32.mrb[0].mxu0
        %v1626 = vpop.f32.mrb[0].mxu0
        %v1627 = vpop.f32.mrb[0].mxu0
        %1628 = vdwg.mxu0
        %v1629 = vsel %vm893, %v1624, -inf
        %1630 = vmax.xlane.f32.xlu0 %v1629
        %v1631 = vpop.xlane.xlu0 %1630
        %v1632 = vsub.f32 %v1624, %v1631
        %v1633 = vmul.f32 %v1632, 1.442695
        %v1634 = vpow.pop %v1633
        %v1635 = vsel %vm893, %v1634, 0.0
        %1636 = vadd.xlane.f32.xlu0 %v1635
        %v1637 = vpop.xlane.xlu0 %1636
        %v1638 = vrcp.pop %v1637
        %v1639 = vmul.f32 %v1634, %v1638
        %v1640 = vpack.c.bf16 %v1639, %v1639
        %1642 = vrot.lane.b32.xlu0 %v1582, 96
        %v1643 = vpop.permute.xlu0 %1642
        %v1645 = vsel %vm893, %v1640, 0
        %v1648 = vsel %vm958, %v1643, 0
        %1650 = vmatprep.subr.bf16.mxu0 0
        %1651 = vmatpush1.bf16.msra.mxu0 %v1648
        %1652 = vmatprep.subr.bf16.mxu0 0
        %1653 = vmatpush1.bf16.msra.mxu0 0
        %1654 = vmatprep.subr.bf16.mxu0 0
        %1655 = vmatpush1.bf16.msra.mxu0 0
        %1656 = vmatprep.subr.bf16.mxu0 0
        %1657 = vmatpush1.bf16.msra.mxu0 0
        %1658 = vmatprep.subr.bf16.mxu0 0
        %1659 = vmatpush1.bf16.msra.mxu0 0
        %1660 = vmatprep.subr.bf16.mxu0 0
        %1661 = vmatpush1.bf16.msra.mxu0 0
        %1662 = vmatprep.subr.bf16.mxu0 0
        %1663 = vmatpush1.bf16.msra.mxu0 0
        %1664 = vmatprep.subr.bf16.mxu0 0
        %1665 = vmatpush1.bf16.msra.mxu0 0
        %1666 = vmatprep.subr.bf16.mxu0 0
        %1667 = vmatpush1.bf16.msra.mxu0 0
        %1668 = vmatprep.subr.bf16.mxu0 0
        %1669 = vmatpush1.bf16.msra.mxu0 0
        %1670 = vmatprep.subr.bf16.mxu0 0
        %1671 = vmatpush1.bf16.msra.mxu0 0
        %1672 = vmatprep.subr.bf16.mxu0 0
        %1673 = vmatpush1.bf16.msra.mxu0 0
        %1674 = vmatprep.subr.bf16.mxu0 0
        %1675 = vmatpush1.bf16.msra.mxu0 0
        %1676 = vmatprep.subr.bf16.mxu0 0
        %1677 = vmatpush1.bf16.msra.mxu0 0
        %1678 = vmatprep.subr.bf16.mxu0 0
        %1679 = vmatpush1.bf16.msra.mxu0 0
        %1680 = vmatprep.subr.bf16.mxu0 0
        %1681 = vmatpush1.bf16.msra.mxu0 0
        %1682 = vmatprep.mubr.bf16.mxu0 0
        %1683 = vmatmul.mubr.bf16.gmra.mrb[0].mxu0 %v1645
        %v1684 = vpop.f32.mrb[0].mxu0
        %v1685 = vadd.f32 0.0, %v1684
        %v1686 = vpop.f32.mrb[0].mxu0
        %v1687 = vpop.f32.mrb[0].mxu0
        %v1688 = vpop.f32.mrb[0].mxu0
        %1689 = vdwg.mxu0
        %1691 = vrot.lane.b32.xlu0 %v1581, 120
        %v1692 = vpop.permute.xlu0 %1691
        %1693 = vrot.lane.b32.xlu0 %v1582, 120
        %v1694 = vpop.permute.xlu0 %1693
        %v1696 = vsel %vm893, %v1692, 0
        %v1699 = vsel %vm893, %v1694, 0
        %1701 = vmatprep.subr.bf16.mxu0 0
        %1702 = vmatpush1.bf16.xpose.msra.mxu0 %v1699
        %1703 = vmatprep.subr.bf16.mxu0 0
        %1704 = vmatpush1.bf16.xpose.msra.mxu0 0
        %1705 = vmatprep.subr.bf16.mxu0 0
        %1706 = vmatpush1.bf16.xpose.msra.mxu0 0
        %1707 = vmatprep.subr.bf16.mxu0 0
        %1708 = vmatpush1.bf16.xpose.msra.mxu0 0
        %1709 = vmatprep.subr.bf16.mxu0 0
        %1710 = vmatpush1.bf16.xpose.msra.mxu0 0
        %1711 = vmatprep.subr.bf16.mxu0 0
        %1712 = vmatpush1.bf16.xpose.msra.mxu0 0
        %1713 = vmatprep.subr.bf16.mxu0 0
        %1714 = vmatpush1.bf16.xpose.msra.mxu0 0
        %1715 = vmatprep.subr.bf16.mxu0 0
        %1716 = vmatpush1.bf16.xpose.msra.mxu0 0
        %1717 = vmatprep.subr.bf16.mxu0 0
        %1718 = vmatpush1.bf16.xpose.msra.mxu0 0
        %1719 = vmatprep.subr.bf16.mxu0 0
        %1720 = vmatpush1.bf16.xpose.msra.mxu0 0
        %1721 = vmatprep.subr.bf16.mxu0 0
        %1722 = vmatpush1.bf16.xpose.msra.mxu0 0
        %1723 = vmatprep.subr.bf16.mxu0 0
        %1724 = vmatpush1.bf16.xpose.msra.mxu0 0
        %1725 = vmatprep.subr.bf16.mxu0 0
        %1726 = vmatpush1.bf16.xpose.msra.mxu0 0
        %1727 = vmatprep.subr.bf16.mxu0 0
        %1728 = vmatpush1.bf16.xpose.msra.mxu0 0
        %1729 = vmatprep.subr.bf16.mxu0 0
        %1730 = vmatpush1.bf16.xpose.msra.mxu0 0
        %1731 = vmatprep.subr.bf16.mxu0 0
        %1732 = vmatpush1.bf16.xpose.msra.mxu0 0
        %1733 = vmatprep.mubr.bf16.mxu0 0
        %1734 = vmatmul.mubr.bf16.gmra.mrb[0].mxu0 %v1696
        %v1735 = vpop.f32.mrb[0].mxu0
        %v1736 = vadd.f32 0.0, %v1735
        %v1737 = vpop.f32.mrb[0].mxu0
        %v1738 = vpop.f32.mrb[0].mxu0
        %v1739 = vpop.f32.mrb[0].mxu0
        %1740 = vdwg.mxu0
        %v1741 = vsel %vm893, %v1736, -inf
        %1742 = vmax.xlane.f32.xlu0 %v1741
        %v1743 = vpop.xlane.xlu0 %1742
        %v1744 = vsub.f32 %v1736, %v1743
        %v1745 = vmul.f32 %v1744, 1.442695
        %v1746 = vpow.pop %v1745
        %v1747 = vsel %vm893, %v1746, 0.0
        %1748 = vadd.xlane.f32.xlu0 %v1747
        %v1749 = vpop.xlane.xlu0 %1748
        %v1750 = vrcp.pop %v1749
        %v1751 = vmul.f32 %v1746, %v1750
        %v1752 = vpack.c.bf16 %v1751, %v1751
        %1753 = vrot.lane.b32.xlu0 %v1582, 88
        %v1754 = vpop.permute.xlu0 %1753
        %v1756 = vsel %vm893, %v1752, 0
        %v1759 = vsel %vm958, %v1754, 0
        %1761 = vmatprep.subr.bf16.mxu0 0
        %1762 = vmatpush1.bf16.msra.mxu0 %v1759
        %1763 = vmatprep.subr.bf16.mxu0 0
        %1764 = vmatpush1.bf16.msra.mxu0 0
        %1765 = vmatprep.subr.bf16.mxu0 0
        %1766 = vmatpush1.bf16.msra.mxu0 0
        %1767 = vmatprep.subr.bf16.mxu0 0
        %1768 = vmatpush1.bf16.msra.mxu0 0
        %1769 = vmatprep.subr.bf16.mxu0 0
        %1770 = vmatpush1.bf16.msra.mxu0 0
        %1771 = vmatprep.subr.bf16.mxu0 0
        %1772 = vmatpush1.bf16.msra.mxu0 0
        %1773 = vmatprep.subr.bf16.mxu0 0
        %1774 = vmatpush1.bf16.msra.mxu0 0
        %1775 = vmatprep.subr.bf16.mxu0 0
        %1776 = vmatpush1.bf16.msra.mxu0 0
        %1777 = vmatprep.subr.bf16.mxu0 0
        %1778 = vmatpush1.bf16.msra.mxu0 0
        %1779 = vmatprep.subr.bf16.mxu0 0
        %1780 = vmatpush1.bf16.msra.mxu0 0
        %1781 = vmatprep.subr.bf16.mxu0 0
        %1782 = vmatpush1.bf16.msra.mxu0 0
        %1783 = vmatprep.subr.bf16.mxu0 0
        %1784 = vmatpush1.bf16.msra.mxu0 0
        %1785 = vmatprep.subr.bf16.mxu0 0
        %1786 = vmatpush1.bf16.msra.mxu0 0
        %1787 = vmatprep.subr.bf16.mxu0 0
        %1788 = vmatpush1.bf16.msra.mxu0 0
        %1789 = vmatprep.subr.bf16.mxu0 0
        %1790 = vmatpush1.bf16.msra.mxu0 0
        %1791 = vmatprep.subr.bf16.mxu0 0
        %1792 = vmatpush1.bf16.msra.mxu0 0
        %1793 = vmatprep.mubr.bf16.mxu0 0
        %1794 = vmatmul.mubr.bf16.gmra.mrb[0].mxu0 %v1756
        %v1795 = vpop.f32.mrb[0].mxu0
        %v1796 = vadd.f32 0.0, %v1795
        %v1797 = vpop.f32.mrb[0].mxu0
        %v1798 = vpop.f32.mrb[0].mxu0
        %v1799 = vpop.f32.mrb[0].mxu0
        %1800 = vdwg.mxu0
        %1801 = vrot.lane.b32.xlu0 %v1581, 112
        %v1802 = vpop.permute.xlu0 %1801
        %1803 = vrot.lane.b32.xlu0 %v1582, 112
        %v1804 = vpop.permute.xlu0 %1803
        %v1806 = vsel %vm893, %v1802, 0
        %v1809 = vsel %vm893, %v1804, 0
        %1811 = vmatprep.subr.bf16.mxu0 0
        %1812 = vmatpush1.bf16.xpose.msra.mxu0 %v1809
        %1813 = vmatprep.subr.bf16.mxu0 0
        %1814 = vmatpush1.bf16.xpose.msra.mxu0 0
        %1815 = vmatprep.subr.bf16.mxu0 0
        %1816 = vmatpush1.bf16.xpose.msra.mxu0 0
        %1817 = vmatprep.subr.bf16.mxu0 0
        %1818 = vmatpush1.bf16.xpose.msra.mxu0 0
        %1819 = vmatprep.subr.bf16.mxu0 0
        %1820 = vmatpush1.bf16.xpose.msra.mxu0 0
        %1821 = vmatprep.subr.bf16.mxu0 0
        %1822 = vmatpush1.bf16.xpose.msra.mxu0 0
        %1823 = vmatprep.subr.bf16.mxu0 0
        %1824 = vmatpush1.bf16.xpose.msra.mxu0 0
        %1825 = vmatprep.subr.bf16.mxu0 0
        %1826 = vmatpush1.bf16.xpose.msra.mxu0 0
        %1827 = vmatprep.subr.bf16.mxu0 0
        %1828 = vmatpush1.bf16.xpose.msra.mxu0 0
        %1829 = vmatprep.subr.bf16.mxu0 0
        %1830 = vmatpush1.bf16.xpose.msra.mxu0 0
        %1831 = vmatprep.subr.bf16.mxu0 0
        %1832 = vmatpush1.bf16.xpose.msra.mxu0 0
        %1833 = vmatprep.subr.bf16.mxu0 0
        %1834 = vmatpush1.bf16.xpose.msra.mxu0 0
        %1835 = vmatprep.subr.bf16.mxu0 0
        %1836 = vmatpush1.bf16.xpose.msra.mxu0 0
        %1837 = vmatprep.subr.bf16.mxu0 0
        %1838 = vmatpush1.bf16.xpose.msra.mxu0 0
        %1839 = vmatprep.subr.bf16.mxu0 0
        %1840 = vmatpush1.bf16.xpose.msra.mxu0 0
        %1841 = vmatprep.subr.bf16.mxu0 0
        %1842 = vmatpush1.bf16.xpose.msra.mxu0 0
        %1843 = vmatprep.mubr.bf16.mxu0 0
        %1844 = vmatmul.mubr.bf16.gmra.mrb[0].mxu0 %v1806
        %v1845 = vpop.f32.mrb[0].mxu0
        %v1846 = vadd.f32 0.0, %v1845
        %v1847 = vpop.f32.mrb[0].mxu0
        %v1848 = vpop.f32.mrb[0].mxu0
        %v1849 = vpop.f32.mrb[0].mxu0
        %1850 = vdwg.mxu0
        %v1851 = vsel %vm893, %v1846, -inf
        %1852 = vmax.xlane.f32.xlu0 %v1851
        %v1853 = vpop.xlane.xlu0 %1852
        %v1854 = vsub.f32 %v1846, %v1853
        %v1855 = vmul.f32 %v1854, 1.442695
        %v1856 = vpow.pop %v1855
        %v1857 = vsel %vm893, %v1856, 0.0
        %1858 = vadd.xlane.f32.xlu0 %v1857
        %v1859 = vpop.xlane.xlu0 %1858
        %v1860 = vrcp.pop %v1859
        %v1861 = vmul.f32 %v1856, %v1860
        %v1862 = vpack.c.bf16 %v1861, %v1861
        %1863 = vrot.lane.b32.xlu0 %v1582, 80
        %v1864 = vpop.permute.xlu0 %1863
        %v1866 = vsel %vm893, %v1862, 0
        %v1869 = vsel %vm958, %v1864, 0
        %1871 = vmatprep.subr.bf16.mxu0 0
        %1872 = vmatpush1.bf16.msra.mxu0 %v1869
        %1873 = vmatprep.subr.bf16.mxu0 0
        %1874 = vmatpush1.bf16.msra.mxu0 0
        %1875 = vmatprep.subr.bf16.mxu0 0
        %1876 = vmatpush1.bf16.msra.mxu0 0
        %1877 = vmatprep.subr.bf16.mxu0 0
        %1878 = vmatpush1.bf16.msra.mxu0 0
        %1879 = vmatprep.subr.bf16.mxu0 0
        %1880 = vmatpush1.bf16.msra.mxu0 0
        %1881 = vmatprep.subr.bf16.mxu0 0
        %1882 = vmatpush1.bf16.msra.mxu0 0
        %1883 = vmatprep.subr.bf16.mxu0 0
        %1884 = vmatpush1.bf16.msra.mxu0 0
        %1885 = vmatprep.subr.bf16.mxu0 0
        %1886 = vmatpush1.bf16.msra.mxu0 0
        %1887 = vmatprep.subr.bf16.mxu0 0
        %1888 = vmatpush1.bf16.msra.mxu0 0
        %1889 = vmatprep.subr.bf16.mxu0 0
        %1890 = vmatpush1.bf16.msra.mxu0 0
        %1891 = vmatprep.subr.bf16.mxu0 0
        %1892 = vmatpush1.bf16.msra.mxu0 0
        %1893 = vmatprep.subr.bf16.mxu0 0
        %1894 = vmatpush1.bf16.msra.mxu0 0
        %1895 = vmatprep.subr.bf16.mxu0 0
        %1896 = vmatpush1.bf16.msra.mxu0 0
        %1897 = vmatprep.subr.bf16.mxu0 0
        %1898 = vmatpush1.bf16.msra.mxu0 0
        %1899 = vmatprep.subr.bf16.mxu0 0
        %1900 = vmatpush1.bf16.msra.mxu0 0
        %1901 = vmatprep.subr.bf16.mxu0 0
        %1902 = vmatpush1.bf16.msra.mxu0 0
        %1903 = vmatprep.mubr.bf16.mxu0 0
        %1904 = vmatmul.mubr.bf16.gmra.mrb[0].mxu0 %v1866
        %v1905 = vpop.f32.mrb[0].mxu0
        %v1906 = vadd.f32 0.0, %v1905
        %v1907 = vpop.f32.mrb[0].mxu0
        %v1908 = vpop.f32.mrb[0].mxu0
        %v1909 = vpop.f32.mrb[0].mxu0
        %1910 = vdwg.mxu0
        %1911 = vrot.lane.b32.xlu0 %v1581, 104
        %v1912 = vpop.permute.xlu0 %1911
        %1913 = vrot.lane.b32.xlu0 %v1582, 104
        %v1914 = vpop.permute.xlu0 %1913
        %v1916 = vsel %vm893, %v1912, 0
        %v1919 = vsel %vm893, %v1914, 0
        %1921 = vmatprep.subr.bf16.mxu0 0
        %1922 = vmatpush1.bf16.xpose.msra.mxu0 %v1919
        %1923 = vmatprep.subr.bf16.mxu0 0
        %1924 = vmatpush1.bf16.xpose.msra.mxu0 0
        %1925 = vmatprep.subr.bf16.mxu0 0
        %1926 = vmatpush1.bf16.xpose.msra.mxu0 0
        %1927 = vmatprep.subr.bf16.mxu0 0
        %1928 = vmatpush1.bf16.xpose.msra.mxu0 0
        %1929 = vmatprep.subr.bf16.mxu0 0
        %1930 = vmatpush1.bf16.xpose.msra.mxu0 0
        %1931 = vmatprep.subr.bf16.mxu0 0
        %1932 = vmatpush1.bf16.xpose.msra.mxu0 0
        %1933 = vmatprep.subr.bf16.mxu0 0
        %1934 = vmatpush1.bf16.xpose.msra.mxu0 0
        %1935 = vmatprep.subr.bf16.mxu0 0
        %1936 = vmatpush1.bf16.xpose.msra.mxu0 0
        %1937 = vmatprep.subr.bf16.mxu0 0
        %1938 = vmatpush1.bf16.xpose.msra.mxu0 0
        %1939 = vmatprep.subr.bf16.mxu0 0
        %1940 = vmatpush1.bf16.xpose.msra.mxu0 0
        %1941 = vmatprep.subr.bf16.mxu0 0
        %1942 = vmatpush1.bf16.xpose.msra.mxu0 0
        %1943 = vmatprep.subr.bf16.mxu0 0
        %1944 = vmatpush1.bf16.xpose.msra.mxu0 0
        %1945 = vmatprep.subr.bf16.mxu0 0
        %1946 = vmatpush1.bf16.xpose.msra.mxu0 0
        %1947 = vmatprep.subr.bf16.mxu0 0
        %1948 = vmatpush1.bf16.xpose.msra.mxu0 0
        %1949 = vmatprep.subr.bf16.mxu0 0
        %1950 = vmatpush1.bf16.xpose.msra.mxu0 0
        %1951 = vmatprep.subr.bf16.mxu0 0
        %1952 = vmatpush1.bf16.xpose.msra.mxu0 0
        %1953 = vmatprep.mubr.bf16.mxu0 0
        %1954 = vmatmul.mubr.bf16.gmra.mrb[0].mxu0 %v1916
        %v1955 = vpop.f32.mrb[0].mxu0
        %v1956 = vadd.f32 0.0, %v1955
        %v1957 = vpop.f32.mrb[0].mxu0
        %v1958 = vpop.f32.mrb[0].mxu0
        %v1959 = vpop.f32.mrb[0].mxu0
        %1960 = vdwg.mxu0
        %v1961 = vsel %vm893, %v1956, -inf
        %1962 = vmax.xlane.f32.xlu0 %v1961
        %v1963 = vpop.xlane.xlu0 %1962
        %v1964 = vsub.f32 %v1956, %v1963
        %v1965 = vmul.f32 %v1964, 1.442695
        %v1966 = vpow.pop %v1965
        %v1967 = vsel %vm893, %v1966, 0.0
        %1968 = vadd.xlane.f32.xlu0 %v1967
        %v1969 = vpop.xlane.xlu0 %1968
        %v1970 = vrcp.pop %v1969
        %v1971 = vmul.f32 %v1966, %v1970
        %v1972 = vpack.c.bf16 %v1971, %v1971
        %1973 = vrot.lane.b32.xlu0 %v1582, 72
        %v1974 = vpop.permute.xlu0 %1973
        %v1976 = vsel %vm893, %v1972, 0
        %v1979 = vsel %vm958, %v1974, 0
        %1981 = vmatprep.subr.bf16.mxu0 0
        %1982 = vmatpush1.bf16.msra.mxu0 %v1979
        %1983 = vmatprep.subr.bf16.mxu0 0
        %1984 = vmatpush1.bf16.msra.mxu0 0
        %1985 = vmatprep.subr.bf16.mxu0 0
        %1986 = vmatpush1.bf16.msra.mxu0 0
        %1987 = vmatprep.subr.bf16.mxu0 0
        %1988 = vmatpush1.bf16.msra.mxu0 0
        %1989 = vmatprep.subr.bf16.mxu0 0
        %1990 = vmatpush1.bf16.msra.mxu0 0
        %1991 = vmatprep.subr.bf16.mxu0 0
        %1992 = vmatpush1.bf16.msra.mxu0 0
        %1993 = vmatprep.subr.bf16.mxu0 0
        %1994 = vmatpush1.bf16.msra.mxu0 0
        %1995 = vmatprep.subr.bf16.mxu0 0
        %1996 = vmatpush1.bf16.msra.mxu0 0
        %1997 = vmatprep.subr.bf16.mxu0 0
        %1998 = vmatpush1.bf16.msra.mxu0 0
        %1999 = vmatprep.subr.bf16.mxu0 0
        %2000 = vmatpush1.bf16.msra.mxu0 0
        %2001 = vmatprep.subr.bf16.mxu0 0
        %2002 = vmatpush1.bf16.msra.mxu0 0
        %2003 = vmatprep.subr.bf16.mxu0 0
        %2004 = vmatpush1.bf16.msra.mxu0 0
        %2005 = vmatprep.subr.bf16.mxu0 0
        %2006 = vmatpush1.bf16.msra.mxu0 0
        %2007 = vmatprep.subr.bf16.mxu0 0
        %2008 = vmatpush1.bf16.msra.mxu0 0
        %2009 = vmatprep.subr.bf16.mxu0 0
        %2010 = vmatpush1.bf16.msra.mxu0 0
        %2011 = vmatprep.subr.bf16.mxu0 0
        %2012 = vmatpush1.bf16.msra.mxu0 0
        %2013 = vmatprep.mubr.bf16.mxu0 0
        %2014 = vmatmul.mubr.bf16.gmra.mrb[0].mxu0 %v1976
        %v2015 = vpop.f32.mrb[0].mxu0
        %v2016 = vadd.f32 0.0, %v2015
        %v2017 = vpop.f32.mrb[0].mxu0
        %v2018 = vpop.f32.mrb[0].mxu0
        %v2019 = vpop.f32.mrb[0].mxu0
        %2020 = vdwg.mxu0
        %2022 = vrot.lane.b32.xlu0 %v1796, 8
        %v2023 = vpop.permute.xlu0 %2022
        %2026 = vrot.lane.b32.xlu0 %v1906, 16
        %v2027 = vpop.permute.xlu0 %2026
        %2030 = vrot.lane.b32.xlu0 %v2016, 24
        %v2031 = vpop.permute.xlu0 %2030
        %v2033 = vsel %vm893, %v1685, %v2023
        %v2034 = vsel %vm1346, %v2033, %v2027
        %v2035 = vsel %vm1348, %v2034, %v2031
        %v2036 = vpack.c.bf16 %v2035, %v2035
        %v2038 = vlaneseq
        %v2039 = vshrl.u32 %v2038, 7
        %v2040 = vsub.s32 0, %v2039
        %v2041 = vrot.slane %v1456, %v2040
        %v2047 = vunpack.c.l.b16 %v1452
        %v2048 = vunpack.c.l.b16 %v1453
        %v2049 = vunpack.c.l.b16 %v1454
        %v2050 = vunpack.c.l.b16 %v1455
        %v2051 = vpack.c.b16 %v2048, %v2047
        %v2052 = vpack.c.b16 %v2050, %v2049
        %v2056 = vsel %vm789, %v2036, 0
        %2058 = vmatprep.subr.bf16.mxu0 0
        %2059 = vmatpush1.bf16.msra.mxu0 %v2051
        %2060 = vmatprep.subr.bf16.mxu0 0
        %2061 = vmatpush1.bf16.msra.mxu0 %v2052
        %2062 = vmatprep.subr.bf16.mxu0 0
        %2063 = vmatpush1.bf16.msra.mxu0 0
        %2064 = vmatprep.subr.bf16.mxu0 0
        %2065 = vmatpush1.bf16.msra.mxu0 0
        %2066 = vmatprep.subr.bf16.mxu0 0
        %2067 = vmatpush1.bf16.msra.mxu0 0
        %2068 = vmatprep.subr.bf16.mxu0 0
        %2069 = vmatpush1.bf16.msra.mxu0 0
        %2070 = vmatprep.subr.bf16.mxu0 0
        %2071 = vmatpush1.bf16.msra.mxu0 0
        %2072 = vmatprep.subr.bf16.mxu0 0
        %2073 = vmatpush1.bf16.msra.mxu0 0
        %2074 = vmatprep.subr.bf16.mxu0 0
        %2075 = vmatpush1.bf16.msra.mxu0 0
        %2076 = vmatprep.subr.bf16.mxu0 0
        %2077 = vmatpush1.bf16.msra.mxu0 0
        %2078 = vmatprep.subr.bf16.mxu0 0
        %2079 = vmatpush1.bf16.msra.mxu0 0
        %2080 = vmatprep.subr.bf16.mxu0 0
        %2081 = vmatpush1.bf16.msra.mxu0 0
        %2082 = vmatprep.subr.bf16.mxu0 0
        %2083 = vmatpush1.bf16.msra.mxu0 0
        %2084 = vmatprep.subr.bf16.mxu0 0
        %2085 = vmatpush1.bf16.msra.mxu0 0
        %2086 = vmatprep.subr.bf16.mxu0 0
        %2087 = vmatpush1.bf16.msra.mxu0 0
        %2088 = vmatprep.subr.bf16.mxu0 0
        %2089 = vmatpush1.bf16.msra.mxu0 0
        %2090 = vmatprep.mubr.bf16.mxu0 0
        %2091 = vmatmul.mubr.bf16.gmra.mrb[0].mxu0 %v2056
        %v2092 = vpop.f32.mrb[0].mxu0
        %v2093 = vadd.f32 %v2041, %v2092
        %v2094 = vpop.f32.mrb[0].mxu0
        %v2095 = vpop.f32.mrb[0].mxu0
        %v2096 = vpop.f32.mrb[0].mxu0
        %2097 = vdwg.mxu0
        %v2098 = vadd.f32 %v1440, %v2093
        %v2099 = vsel %vm789, %v2098, 0.0
        %2100 = vadd.xlane.f32.xlu0 %v2099
        %v2101 = vpop.xlane.xlu0 %2100
        %v2102 = vmul.f32 %v2101, %v1416
        %v2103 = vsub.f32 %v2098, %v2102
        %v2104 = vmul.f32 %v2103, %v2103
        %v2105 = vsel %vm789, %v2104, 0.0
        %2106 = vadd.xlane.f32.xlu0 %v2105
        %v2107 = vpop.xlane.xlu0 %2106
        %v2108 = vmul.f32 %v2107, %v1416
        %v2109 = vadd.f32 %v2108, 1e-05
        %v2110 = vrsqrt.pop %v2109
        %v2111 = vmul.f32 %v2103, %v2110
        %v2113 = vlaneseq
        %v2114 = vshrl.u32 %v2113, 7
        %v2115 = vsub.s32 0, %v2114
        %v2116 = vrot.slane %v1457, %v2115
        %v2118 = vmul.f32 %v2111, %v2116
        %v2120 = vlaneseq
        %v2121 = vshrl.u32 %v2120, 7
        %v2122 = vsub.s32 0, %v2121
        %v2123 = vrot.slane %v1458, %v2122
        %v2125 = vadd.f32 %v2118, %v2123
        %v2126 = vpack.c.bf16 %v2125, %v2125
        %v2127 = vld [vmem:[%s18] sm:$0xf]
        %v2128 = vld [vmem:[%s18 + $0x4] sm:$0xf]
        %v2129 = vld [vmem:[%s18 + $0x8] sm:$0xf]
        %v2130 = vld [vmem:[%s18 + $0xc] sm:$0xf]
        %v2131 = vld [vmem:[%s19] sm:$0x1]
        %v2133 = vlaneseq
        %v2134 = vshrl.u32 %v2133, 7
        %v2135 = vsub.s32 0, %v2134
        %v2136 = vrot.slane %v2131, %v2135
        %v2142 = vunpack.c.l.b16 %v2127
        %v2143 = vunpack.c.l.b16 %v2128
        %v2144 = vunpack.c.l.b16 %v2129
        %v2145 = vunpack.c.l.b16 %v2130
        %v2146 = vpack.c.b16 %v2143, %v2142
        %v2147 = vpack.c.b16 %v2145, %v2144
        %v2151 = vsel %vm789, %v2126, 0
        %2153 = vmatprep.subr.bf16.mxu0 0
        %2154 = vmatpush1.bf16.msra.mxu0 %v2146
        %2155 = vmatprep.subr.bf16.mxu0 0
        %2156 = vmatpush1.bf16.msra.mxu0 %v2147
        %2157 = vmatprep.subr.bf16.mxu0 0
        %2158 = vmatpush1.bf16.msra.mxu0 0
        %2159 = vmatprep.subr.bf16.mxu0 0
        %2160 = vmatpush1.bf16.msra.mxu0 0
        %2161 = vmatprep.subr.bf16.mxu0 0
        %2162 = vmatpush1.bf16.msra.mxu0 0
        %2163 = vmatprep.subr.bf16.mxu0 0
        %2164 = vmatpush1.bf16.msra.mxu0 0
        %2165 = vmatprep.subr.bf16.mxu0 0
        %2166 = vmatpush1.bf16.msra.mxu0 0
        %2167 = vmatprep.subr.bf16.mxu0 0
        %2168 = vmatpush1.bf16.msra.mxu0 0
        %2169 = vmatprep.subr.bf16.mxu0 0
        %2170 = vmatpush1.bf16.msra.mxu0 0
        %2171 = vmatprep.subr.bf16.mxu0 0
        %2172 = vmatpush1.bf16.msra.mxu0 0
        %2173 = vmatprep.subr.bf16.mxu0 0
        %2174 = vmatpush1.bf16.msra.mxu0 0
        %2175 = vmatprep.subr.bf16.mxu0 0
        %2176 = vmatpush1.bf16.msra.mxu0 0
        %2177 = vmatprep.subr.bf16.mxu0 0
        %2178 = vmatpush1.bf16.msra.mxu0 0
        %2179 = vmatprep.subr.bf16.mxu0 0
        %2180 = vmatpush1.bf16.msra.mxu0 0
        %2181 = vmatprep.subr.bf16.mxu0 0
        %2182 = vmatpush1.bf16.msra.mxu0 0
        %2183 = vmatprep.subr.bf16.mxu0 0
        %2184 = vmatpush1.bf16.msra.mxu0 0
        %2185 = vmatprep.mubr.bf16.mxu0 0
        %2186 = vmatmul.mubr.bf16.gmra.mrb[0].mxu0 %v2151
        %v2187 = vpop.f32.mrb[0].mxu0
        %v2188 = vadd.f32 %v2136, %v2187
        %v2189 = vpop.f32.mrb[0].mxu0
        %v2190 = vpop.f32.mrb[0].mxu0
        %v2191 = vpop.f32.mrb[0].mxu0
        %2192 = vdwg.mxu0
        %v2193 = vmax.f32 %v2188, 0.0
        %v2194 = vpack.c.bf16 %v2193, %v2193
        %v2195 = vld [vmem:[%s20] sm:$0xf]
        %v2196 = vld [vmem:[%s20 + $0x4] sm:$0xf]
        %v2197 = vld [vmem:[%s20 + $0x8] sm:$0xf]
        %v2198 = vld [vmem:[%s20 + $0xc] sm:$0xf]
        %v2199 = vld [vmem:[%s20 + $0x10] sm:$0xf]
        %v2200 = vld [vmem:[%s20 + $0x14] sm:$0xf]
        %v2201 = vld [vmem:[%s20 + $0x18] sm:$0xf]
        %v2202 = vld [vmem:[%s20 + $0x1c] sm:$0xf]
        %v2203 = vld [vmem:[%s20 + $0x20] sm:$0xf]
        %v2204 = vld [vmem:[%s20 + $0x24] sm:$0xf]
        %v2205 = vld [vmem:[%s20 + $0x28] sm:$0xf]
        %v2206 = vld [vmem:[%s20 + $0x2c] sm:$0xf]
        %v2207 = vld [vmem:[%s20 + $0x30] sm:$0xf]
        %v2208 = vld [vmem:[%s20 + $0x34] sm:$0xf]
        %v2209 = vld [vmem:[%s20 + $0x38] sm:$0xf]
        %v2210 = vld [vmem:[%s20 + $0x3c] sm:$0xf]
        %v2211 = vld [vmem:[%s21] sm:$0x1]
        %v2213 = vlaneseq
        %v2214 = vshrl.u32 %v2213, 7
        %v2215 = vsub.s32 0, %v2214
        %v2216 = vrot.slane %v2211, %v2215
        %v2234 = vunpack.c.l.b16 %v2195
        %v2235 = vunpack.c.l.b16 %v2196
        %v2236 = vunpack.c.l.b16 %v2197
        %v2237 = vunpack.c.l.b16 %v2198
        %v2238 = vunpack.c.l.b16 %v2199
        %v2239 = vunpack.c.l.b16 %v2200
        %v2240 = vunpack.c.l.b16 %v2201
        %v2241 = vunpack.c.l.b16 %v2202
        %v2242 = vunpack.c.l.b16 %v2203
        %v2243 = vunpack.c.l.b16 %v2204
        %v2244 = vunpack.c.l.b16 %v2205
        %v2245 = vunpack.c.l.b16 %v2206
        %v2246 = vunpack.c.l.b16 %v2207
        %v2247 = vunpack.c.l.b16 %v2208
        %v2248 = vunpack.c.l.b16 %v2209
        %v2249 = vunpack.c.l.b16 %v2210
        %v2250 = vpack.c.b16 %v2235, %v2234
        %v2251 = vpack.c.b16 %v2237, %v2236
        %v2252 = vpack.c.b16 %v2239, %v2238
        %v2253 = vpack.c.b16 %v2241, %v2240
        %v2254 = vpack.c.b16 %v2243, %v2242
        %v2255 = vpack.c.b16 %v2245, %v2244
        %v2256 = vpack.c.b16 %v2247, %v2246
        %v2257 = vpack.c.b16 %v2249, %v2248
        %2266 = vmatprep.subr.bf16.mxu0 0
        %2267 = vmatpush1.bf16.msra.mxu0 %v2250
        %2268 = vmatprep.subr.bf16.mxu0 0
        %2269 = vmatpush1.bf16.msra.mxu0 %v2251
        %2270 = vmatprep.subr.bf16.mxu0 0
        %2271 = vmatpush1.bf16.msra.mxu0 %v2252
        %2272 = vmatprep.subr.bf16.mxu0 0
        %2273 = vmatpush1.bf16.msra.mxu0 %v2253
        %2274 = vmatprep.subr.bf16.mxu0 0
        %2275 = vmatpush1.bf16.msra.mxu0 %v2254
        %2276 = vmatprep.subr.bf16.mxu0 0
        %2277 = vmatpush1.bf16.msra.mxu0 %v2255
        %2278 = vmatprep.subr.bf16.mxu0 0
        %2279 = vmatpush1.bf16.msra.mxu0 %v2256
        %2280 = vmatprep.subr.bf16.mxu0 0
        %2281 = vmatpush1.bf16.msra.mxu0 %v2257
        %2282 = vmatprep.subr.bf16.mxu0 0
        %2283 = vmatpush1.bf16.msra.mxu0 0
        %2284 = vmatprep.subr.bf16.mxu0 0
        %2285 = vmatpush1.bf16.msra.mxu0 0
        %2286 = vmatprep.subr.bf16.mxu0 0
        %2287 = vmatpush1.bf16.msra.mxu0 0
        %2288 = vmatprep.subr.bf16.mxu0 0
        %2289 = vmatpush1.bf16.msra.mxu0 0
        %2290 = vmatprep.subr.bf16.mxu0 0
        %2291 = vmatpush1.bf16.msra.mxu0 0
        %2292 = vmatprep.subr.bf16.mxu0 0
        %2293 = vmatpush1.bf16.msra.mxu0 0
        %2294 = vmatprep.subr.bf16.mxu0 0
        %2295 = vmatpush1.bf16.msra.mxu0 0
        %2296 = vmatprep.subr.bf16.mxu0 0
        %2297 = vmatpush1.bf16.msra.mxu0 0
        %2298 = vmatprep.mubr.bf16.mxu0 0
        %2299 = vmatmul.mubr.bf16.gmra.mrb[0].mxu0 %v2194
        %v2300 = vpop.f32.mrb[0].mxu0
        %v2301 = vadd.f32 %v2216, %v2300
        %v2302 = vpop.f32.mrb[0].mxu0
        %v2303 = vpop.f32.mrb[0].mxu0
        %v2304 = vpop.f32.mrb[0].mxu0
        %2305 = vdwg.mxu0
        %v2306 = vadd.f32 %v2125, %v2301
        %v2307 = vld [vmem:[%s22] sm:$0x1]
        %v2308 = vld [vmem:[%s23] sm:$0x1]
        %v2309 = vsel %vm789, %v2306, 0.0
        %2310 = vadd.xlane.f32.xlu0 %v2309
        %v2311 = vpop.xlane.xlu0 %2310
        %v2312 = vmul.f32 %v2311, %v1416
        %v2313 = vsub.f32 %v2306, %v2312
        %v2314 = vmul.f32 %v2313, %v2313
        %v2315 = vsel %vm789, %v2314, 0.0
        %2316 = vadd.xlane.f32.xlu0 %v2315
        %v2317 = vpop.xlane.xlu0 %2316
        %v2318 = vmul.f32 %v2317, %v1416
        %v2319 = vadd.f32 %v2318, 1e-05
        %v2320 = vrsqrt.pop %v2319
        %v2321 = vmul.f32 %v2313, %v2320
        %v2323 = vlaneseq
        %v2324 = vshrl.u32 %v2323, 7
        %v2325 = vsub.s32 0, %v2324
        %v2326 = vrot.slane %v2307, %v2325
        %v2328 = vmul.f32 %v2321, %v2326
        %v2330 = vlaneseq
        %v2331 = vshrl.u32 %v2330, 7
        %v2332 = vsub.s32 0, %v2331
        %v2333 = vrot.slane %v2308, %v2332
        %v2335 = vadd.f32 %v2328, %v2333
        %v2336 = vpack.c.bf16 %v2335, %v2335
        %vm2337 = vcmask 257024
        %2338 = vst.msk [vmem:[%s741] sm:$0xf] %vm2337, %v2336
        %s2339 = sand.u32 %s560, 1
        %s2340 = scalar_lea.sflag [#allocation3], %s2339
        %s2341 = sand.u32 %s560, 1
        %s2342 = smul.addr %s2341, 4
        %s2343 = scalar_lea.vmem [#allocation2], %s2342
        // Predicated region
        $region117: #{transformer_decoder.3} parent=115 // pred_check
          %p2344 = pneg %p570
        $region118: #{transformer_decoder.3} parent=115 // pred_check_branch
          %2346 = sbr.rel (%p2344) target = $region120
        $region119: #{transformer_decoder.3} parent=115 // pred_region
          %s2348 = ssub.s32 64, 64
          %2349 = vsyncadd %s2340, %s2348
          %s2350 = smul.addr %s38, 64
          %s2351 = scalar_lea.hbm %s24, %s2350
          %s2353 = sshll.u32 %s2343, 4
          %s2354 = int_to_ptr.vmem [resolvable:$true] %s2353
          %2356 = dma.vmem_to_hbm [thread:$0]  %s2354, 64, %s2351, %s2340
        $region120: #{transformer_decoder.3} parent=115 // pred_fallthru
          _
      $region116: #{transformer_decoder.3} parent=5 // pred_fallthru
        _
      %p2357 = scmp.le.s32.totalorder 2, %s33
      // Predicated region
      $region121: #{transformer_decoder.3} parent=5 // pred_check
        %p2358 = pneg %p2357
      $region122: #{transformer_decoder.3} parent=5 // pred_check_branch
        %2360 = sbr.rel (%p2358) target = $region124
      $region123: #{transformer_decoder.3} parent=5 // pred_region
        %s2361 = ssub.s32 %s33, 2
        // Predicated region
        $region125: #{transformer_decoder.3} parent=123 // pred_check
          %p2362 = pneg %p576
        $region126: #{transformer_decoder.3} parent=123 // pred_check_branch
          %2364 = sbr.rel (%p2362) target = $region128
        $region127: #{transformer_decoder.3} parent=123 // pred_region
          %s2365 = sand.u32 %s561, 1
          %s2366 = scalar_lea.sflag [#allocation3], %s2365
          %s2367 = sand.u32 %s561, 1
          %s2368 = smul.addr %s2367, 4
          %s2369 = scalar_lea.vmem [#allocation2], %s2368
          %2370 = dma.done %s2366, 64
        $region128: #{transformer_decoder.3} parent=123 // pred_fallthru
          _
      $region124: #{transformer_decoder.3} parent=5 // pred_fallthru
        _
    $region6: #{transformer_decoder.3} parent=1 // loop_footer
      %s37 = sadd.s32 1, %s33
    $region7: #{transformer_decoder.3} parent=1 // loop_footer_branch
      %32 = sbr.rel target = $region3
    $region8: #{transformer_decoder.3} parent=1 // loop_exit
      _
    %2371 = vsyncpa [#allocation3], 1
    %s2372 = scalar_lea.sflag [#allocation3], 1
    %2373 = vsyncpa %s2372, 1

</llo_original>
